<compile_context>
chip_gen: v7x
topology: tpu7x:2x2x1
jax: 0.10.0
libtpu: 0.0.40
codegen_flags: <defaults>
</compile_context>

<pallas_src>
import functools

import numpy as np
import jax
import jax.numpy as jnp
from jax import lax
from jax.experimental import pallas as pl
from jax.experimental.pallas import tpu as pltpu


_CORNERS = tuple((dx, dy, dz) for dx in (0, 1) for dy in (0, 1) for dz in (0, 1))
# uint32 spatial-hash primes stored as int32 bit patterns (int32 mul wraps like uint32).
_PRIMES_I32 = (1, 2654435761 - (1 << 32), 805459861)

_DEF_TILE_N = 512  # big tiles amortize the ~0.35us per-grid-step overhead


def _round_up(x, m):
    return ((x + m - 1) // m) * m


def _pick_tile(n, tile_n):
    return min(tile_n, _round_up(n, 128))


def _pad_lanes(x_t, n_pad):
    """Zero-pad the lane (last) axis of a (rows, N) array up to n_pad."""
    n = x_t.shape[-1]
    if n_pad == n:
        return x_t
    return jnp.pad(x_t, ((0, 0), (0, n_pad - n)))


# ----------------------------------------------------------------------------
# Kernel 1: tcnn 'Frequency' encoding (transposed / lane-dense).
#   out[i, n] = sin(pts[i // (2*nf), n] * pi * 2**((i//2) % nf) + (i % 2) * pi/2)
# The 3-term projection runs on the VPU (K=3 would waste the MXU); sin is EUP work.
# ----------------------------------------------------------------------------
def _freq_kernel(pts_ref, sel_ref, phase_ref, out_ref):
    pts = pts_ref[...]                          # (3, TN) lane-dense
    sel = sel_ref[...]                          # (out_dim, 3)
    proj = (sel[:, 0:1] * pts[0:1, :]
            + sel[:, 1:2] * pts[1:2, :]
            + sel[:, 2:3] * pts[2:3, :])        # (out_dim, TN)
    out_ref[...] = jnp.sin(proj + phase_ref[...])


def frequency_encode(pts, n_frequencies=12, tile_n=_DEF_TILE_N):
    N, D = pts.shape
    out_dim = D * n_frequencies * 2
    tile_n = _pick_tile(N, tile_n)
    n_pad = _round_up(N, tile_n)

    sel = np.zeros((out_dim, D), np.float32)
    phase = np.zeros((out_dim, 1), np.float32)
    for i in range(out_dim):
        feat = i // (n_frequencies * 2)
        freq = (i // 2) % n_frequencies
        sel[i, feat] = np.pi * (2.0 ** freq)
        phase[i, 0] = (i % 2) * (np.pi / 2.0)

    pts_t = _pad_lanes(jnp.transpose(pts), n_pad)          # (3, n_pad)

    out_t = pl.pallas_call(
        _freq_kernel,
        out_shape=jax.ShapeDtypeStruct((out_dim, n_pad), jnp.float32),
        grid=(n_pad // tile_n,),
        in_specs=[
            pl.BlockSpec((D, tile_n), lambda i: (0, i)),
            pl.BlockSpec((out_dim, D), lambda i: (0, 0)),
            pl.BlockSpec((out_dim, 1), lambda i: (0, 0)),
        ],
        out_specs=pl.BlockSpec((out_dim, tile_n), lambda i: (0, i)),   # lane-dense store
        compiler_params=pltpu.CompilerParams(dimension_semantics=("parallel",)),
    )(pts_t, jnp.asarray(sel), jnp.asarray(phase))
    return jnp.transpose(out_t[:, :N])                     # (N, out_dim)


# ----------------------------------------------------------------------------
# Kernel 2 (primary): tcnn 'HashGrid' with in-kernel gathers.
#   pts block (3, TN), table (L, F, T) resident in VMEM, per-level scales in SMEM.
#   fori_loop over levels; 8 corners unrolled; jnp.take along the lane axis of (F, T);
#   each level writes its (F, TN) slab to out_ref[l]  (out block (L, F, TN)).
# ----------------------------------------------------------------------------
def _hashgrid_gather_kernel(scales_ref, pts_ref, table_ref, out_ref, *,
                            n_levels, table_size, level_dim):
    pts = pts_ref[...]                          # (3, TN), lane-dense
    tn = pts.shape[1]
    mask = table_size - 1

    def level_body(l, carry):
        scale = scales_ref[l]                   # f32 scalar from SMEM
        pos = pts * scale + 0.5
        gridf = jnp.floor(pos)
        frac = pos - gridf                      # (3, TN)
        ipos = gridf.astype(jnp.int32)          # (3, TN)
        tab = table_ref[l]                      # (F, T)
        acc = jnp.zeros((level_dim, tn), jnp.float32)
        for off in _CORNERS:                    # 8 corners, unrolled
            w = jnp.ones((1, tn), jnp.float32)
            h = jnp.zeros((1, tn), jnp.int32)
            for d in range(3):
                fd = frac[d:d + 1, :]
                w = w * (fd if off[d] else (1.0 - fd))
                cd = ipos[d:d + 1, :] + off[d]
                h = h ^ (cd * _PRIMES_I32[d])   # int32 mul wraps like uint32
            idx = (h & mask).reshape(tn)        # (TN,) in [0, T)
            g = jnp.take(tab, idx, axis=1, mode="promise_in_bounds")   # (F, TN)
            acc = acc + w * g
        out_ref[l] = acc
        return carry

    lax.fori_loop(0, n_levels, level_body, 0)


def _hashgrid_encode_gather(pts, table_t, scales, *, tile_n):
    N, D = pts.shape
    L, F, T = table_t.shape
    tile_n = _pick_tile(N, tile_n)
    n_pad = _round_up(N, tile_n)
    pts_t = _pad_lanes(jnp.transpose(pts), n_pad)          # (3, n_pad)

    kernel = functools.partial(_hashgrid_gather_kernel,
                               n_levels=L, table_size=T, level_dim=F)
    out = pl.pallas_call(
        kernel,
        out_shape=jax.ShapeDtypeStruct((L, F, n_pad), jnp.float32),
        grid=(n_pad // tile_n,),
        in_specs=[
            pl.BlockSpec(memory_space=pltpu.MemorySpace.SMEM),   # per-level scales
            pl.BlockSpec((D, tile_n), lambda i: (0, i)),         # points, lane-dense
            # TODO(synk): for hash_size >= 19 the table no longer fits v7x VMEM; keep it
            # HBM-resident (memory_space=pl.ANY) and DMA one level at a time instead.
            pl.BlockSpec((L, F, T), lambda i: (0, 0, 0)),        # whole table, resident
        ],
        out_specs=pl.BlockSpec((L, F, tile_n), lambda i: (0, 0, i)),  # lane-dense store
        compiler_params=pltpu.CompilerParams(dimension_semantics=("parallel",)),
    )(scales, pts_t, table_t)
    return jnp.transpose(out[:, :, :N], (2, 0, 1)).reshape(N, L * F)


# ----------------------------------------------------------------------------
# Kernel 2 (fallback): Pallas computes hash indices + trilinear weights (lane-dense);
# the table lookup + weighted sum finish in XLA.  Only used if the in-kernel gather of
# the primary kernel cannot be lowered / is miscompiled on this backend.
# ----------------------------------------------------------------------------
def _hash_idx_w_kernel(pts_ref, idx_ref, w_ref, *, scales, table_size):
    pts = pts_ref[...]                          # (3, TN)
    tn = pts.shape[1]
    mask = table_size - 1
    for l, scale in enumerate(scales):          # static Python scales; levels unrolled
        pos = pts * scale + 0.5
        gridf = jnp.floor(pos)
        frac = pos - gridf
        ipos = gridf.astype(jnp.int32)
        idx_rows, w_rows = [], []
        for off in _CORNERS:
            w = jnp.ones((1, tn), jnp.float32)
            h = jnp.zeros((1, tn), jnp.int32)
            for d in range(3):
                fd = frac[d:d + 1, :]
                w = w * (fd if off[d] else (1.0 - fd))
                cd = ipos[d:d + 1, :] + off[d]
                h = h ^ (cd * _PRIMES_I32[d])
            idx_rows.append(h & mask)
            w_rows.append(w)
        idx_ref[l] = jnp.concatenate(idx_rows, axis=0)     # (8, TN)
        w_ref[l] = jnp.concatenate(w_rows, axis=0)         # (8, TN)


def _hashgrid_encode_fallback(pts, table, scales_np, *, tile_n):
    # TODO(synk): in-kernel jnp.take gather is not supported by this Mosaic build; the
    # gather + weighted sum run in XLA here (hash/weight math stays in Pallas).
    N, D = pts.shape
    L, T, F = table.shape
    tile_n = _pick_tile(N, tile_n)
    n_pad = _round_up(N, tile_n)
    pts_t = _pad_lanes(jnp.transpose(pts), n_pad)

    kernel = functools.partial(_hash_idx_w_kernel,
                               scales=tuple(float(s) for s in scales_np),
                               table_size=T)
    idx, w = pl.pallas_call(
        kernel,
        out_shape=(jax.ShapeDtypeStruct((L, 8, n_pad), jnp.int32),
                   jax.ShapeDtypeStruct((L, 8, n_pad), jnp.float32)),
        grid=(n_pad // tile_n,),
        in_specs=[pl.BlockSpec((D, tile_n), lambda i: (0, i))],
        out_specs=(pl.BlockSpec((L, 8, tile_n), lambda i: (0, 0, i)),
                   pl.BlockSpec((L, 8, tile_n), lambda i: (0, 0, i))),
        compiler_params=pltpu.CompilerParams(dimension_semantics=("parallel",)),
    )(pts_t)
    idx = idx[:, :, :N]
    w = w[:, :, :N]
    offs = (jnp.arange(L, dtype=jnp.int32) * T)[:, None, None]
    g = jnp.take(table.reshape(L * T, F), (idx + offs).reshape(-1), axis=0, mode="clip")
    g = g.reshape(L, 8, N, F)
    feats = jnp.sum(w[..., None] * g, axis=1)              # (L, N, F)
    return jnp.transpose(feats, (1, 0, 2)).reshape(N, L * F)


# ----------------------------------------------------------------------------
# Pure-JAX references (used for one-time validation of the in-kernel gather path and
# for the correctness asserts in __main__).
# ----------------------------------------------------------------------------
def hashgrid_reference(pts, table, scales):
    L, T, F = table.shape
    N = pts.shape[0]
    corners = jnp.asarray(_CORNERS, jnp.int32)                      # (8, 3)
    primes = jnp.asarray(_PRIMES_I32, jnp.int32)                    # (3,)
    pos = pts[None, :, :] * scales[:, None, None] + 0.5             # (L, N, 3)
    gridf = jnp.floor(pos)
    frac = pos - gridf
    ipos = gridf.astype(jnp.int32)
    c = ipos[:, :, None, :] + corners[None, None, :, :]             # (L, N, 8, 3)
    hp = c * primes
    idx = (hp[..., 0] ^ hp[..., 1] ^ hp[..., 2]) & (T - 1)          # (L, N, 8)
    wd = jnp.where(corners[None, None, :, :] > 0,
                   frac[:, :, None, :], 1.0 - frac[:, :, None, :])
    w = wd[..., 0] * wd[..., 1] * wd[..., 2]                        # (L, N, 8)
    offs = (jnp.arange(L, dtype=jnp.int32) * T)[:, None, None]
    g = jnp.take(table.reshape(L * T, F), (idx + offs).reshape(-1), axis=0, mode="clip")
    g = g.reshape(L, N, 8, F)
    feats = jnp.sum(w[..., None] * g, axis=2)                       # (L, N, F)
    return jnp.transpose(feats, (1, 0, 2)).reshape(N, L * F)


def frequency_reference(pts, n_frequencies):
    N, D = pts.shape
    freqs = jnp.asarray([np.pi * (2.0 ** k) for k in range(n_frequencies)], jnp.float32)
    ang = pts[:, :, None] * freqs[None, None, :]                    # (N, D, nf)
    out = jnp.stack([jnp.sin(ang), jnp.cos(ang)], axis=-1)          # (N, D, nf, 2)
    return out.reshape(N, D * n_frequencies * 2)


# ----------------------------------------------------------------------------
# Hash-grid dispatcher: probe the in-kernel gather once, validate it numerically, and
# demote to the fallback if it does not lower (or miscompiles).
# ----------------------------------------------------------------------------
_IN_KERNEL_GATHER_OK = None


def hashgrid_encode(pts, table, table_t, scales, *, tile_n=_DEF_TILE_N):
    global _IN_KERNEL_GATHER_OK
    if _IN_KERNEL_GATHER_OK is None:
        try:
            out = jax.block_until_ready(
                _hashgrid_encode_gather(pts, table_t, scales, tile_n=tile_n))
            ref = hashgrid_reference(pts, table, scales)
            _IN_KERNEL_GATHER_OK = bool(jnp.allclose(out, ref, rtol=1e-4, atol=1e-6))
            if _IN_KERNEL_GATHER_OK:
                return out
        except Exception:
            _IN_KERNEL_GATHER_OK = False
    if _IN_KERNEL_GATHER_OK:
        return _hashgrid_encode_gather(pts, table_t, scales, tile_n=tile_n)
    return _hashgrid_encode_fallback(pts, table, np.asarray(scales), tile_n=tile_n)


# ----------------------------------------------------------------------------
# Kernel 3: SDF decoder (tcnn CutlassMLP: feature_dim -> ReLU hidden -> 1, bias-free).
# Transposed formulation keeps the batch on the lane axis and the output store lane-dense.
# ----------------------------------------------------------------------------
def _sdf_mlp_kernel(ft_ref, w1_ref, w2_ref, out_ref):
    h = jnp.dot(w1_ref[...], ft_ref[...], preferred_element_type=jnp.float32)  # (H, TN)
    h = jnp.maximum(h, 0.0)                                                     # ReLU
    out_ref[...] = jnp.dot(w2_ref[...], h, preferred_element_type=jnp.float32)  # (1, TN)


def sdf_decode(f, w1, w2, tile_n=_DEF_TILE_N):
    N, f_in = f.shape
    hidden = w1.shape[0]
    tile_n = _pick_tile(N, tile_n)
    n_pad = _round_up(N, tile_n)
    ft = _pad_lanes(jnp.transpose(f), n_pad)               # (F_in, n_pad)
    out_t = pl.pallas_call(
        _sdf_mlp_kernel,
        out_shape=jax.ShapeDtypeStruct((1, n_pad), jnp.float32),
        grid=(n_pad // tile_n,),
        in_specs=[
            pl.BlockSpec((f_in, tile_n), lambda i: (0, i)),
            pl.BlockSpec((hidden, f_in), lambda i: (0, 0)),
            pl.BlockSpec((1, hidden), lambda i: (0, 0)),
        ],
        out_specs=pl.BlockSpec((1, tile_n), lambda i: (0, i)),     # lane-dense store
        compiler_params=pltpu.CompilerParams(dimension_semantics=("parallel",)),
    )(ft, w1, w2)
    return jnp.transpose(out_t[:, :N])                     # (N, 1)


# ----------------------------------------------------------------------------
# Modules (JAX/Pallas versions)
# ----------------------------------------------------------------------------
class PosEncoding:
    """Pos_Encoding: frequency PE + multiresolution hash grid (tcnn-style)."""

    def __init__(self, cfg, bound, use_pe=False, key=None, tile_n=_DEF_TILE_N):
        key = jax.random.PRNGKey(0) if key is None else key
        self.use_pe = use_pe
        self.tile_n = tile_n
        if self.use_pe:
            assert 'freq' in cfg['pos']['method'].lower()
            self.n_frequencies = 12
            self.pe_dim = 3 * self.n_frequencies * 2
        else:
            self.pe_dim = 0

        bound = np.asarray(bound, np.float32)
        dim_max = float((bound[:, 1] - bound[:, 0]).max())
        self.resolution = int(dim_max / cfg['grid']['voxel_size'])

        assert ('hash' in cfg['grid']['method'].lower()
                or 'tiled' in cfg['grid']['method'].lower())
        # TODO(synk): tcnn uses coherent (dense/tiled) indexing for coarse levels that fit
        # the hashmap; here every level uses the spatial hash.
        self.n_levels = 16
        self.level_dim = 2
        self.base_resolution = 16
        self.log2_hashmap_size = cfg['grid']['hash_size']
        self.per_level_scale = float(
            np.exp2(np.log2(self.resolution / self.base_resolution) / (self.n_levels - 1)))
        self.grid_dim = self.n_levels * self.level_dim

        table_size = 2 ** self.log2_hashmap_size
        # tcnn default init: uniform in [-1e-4, 1e-4]
        self.table = jax.random.uniform(
            key, (self.n_levels, table_size, self.level_dim),
            dtype=jnp.float32, minval=-1e-4, maxval=1e-4)
        # (L, F, T) layout so the in-kernel gather and the weighting stay lane-dense.
        self.table_t = jnp.transpose(self.table, (0, 2, 1))
        self.scales = jnp.asarray(
            self.base_resolution * self.per_level_scale ** np.arange(self.n_levels) - 1.0,
            jnp.float32)

    def __call__(self, pts):
        # TODO(synk): fuse the frequency encoding into the hash-grid pallas_call (two
        # outputs) so `pts` is read from HBM once and sin() hides under the hash VPU work.
        pe = (frequency_encode(pts, self.n_frequencies, tile_n=self.tile_n)
              if self.use_pe else None)
        grid = hashgrid_encode(pts, self.table, self.table_t, self.scales,
                               tile_n=self.tile_n)
        return pe, grid


class SDF:
    """SDF: forward(x, f) -> decoder(f); decoder = tcnn CutlassMLP(feature_dim -> ReLU
    hidden_dim -> 1), bias-free, implemented as a fused Pallas MLP kernel."""

    def __init__(self, pts_dim, hidden_dim=32, feature_dim=32, key=None):
        del pts_dim  # unused by the reference forward pass
        key = jax.random.PRNGKey(0) if key is None else key
        k1, k2 = jax.random.split(key)
        s1 = 1.0 / np.sqrt(feature_dim)
        s2 = 1.0 / np.sqrt(hidden_dim)
        self.w1 = jax.random.uniform(k1, (hidden_dim, feature_dim), jnp.float32, -s1, s1)
        self.w2 = jax.random.uniform(k2, (1, hidden_dim), jnp.float32, -s2, s2)

    def __call__(self, x, f):
        return sdf_decode(f, self.w1, self.w2)


if __name__ == "__main__":
    cfg = {
        'pos':  {'method': 'frequency', 'n_bins': 16},
        'grid': {'method': 'hash', 'hash_size': 10, 'voxel_size': 0.02},
    }
    bound = np.array([[-1.0, 1.0], [-1.0, 1.0], [-1.0, 1.0]], np.float32)

    key = jax.random.PRNGKey(0)
    k_pts, k_tab, k_sdf = jax.random.split(key, 3)
    N = 1024                       # 2 grid steps of 512 -> both v7x TensorCores get work
    pts = jax.random.uniform(k_pts, (N, 3), dtype=jnp.float32)   # points in [0, 1]

    enc = PosEncoding(cfg, bound, use_pe=True, key=k_tab)
    pe, grid = enc(pts)

    sdf = SDF(pts_dim=3, hidden_dim=32, feature_dim=enc.grid_dim, key=k_sdf)
    d = sdf(pts, grid)

    pe, grid, d = jax.block_until_ready((pe, grid, d))

    assert pe.shape == (N, enc.pe_dim) and pe.dtype == jnp.float32
    assert grid.shape == (N, enc.grid_dim) and grid.dtype == jnp.float32
    assert d.shape == (N, 1) and d.dtype == jnp.float32
    assert bool(jnp.all(jnp.isfinite(pe)))
    assert bool(jnp.all(jnp.isfinite(grid)))
    assert bool(jnp.all(jnp.isfinite(d)))

    # correctness vs pure-JAX references
    np.testing.assert_allclose(
        np.asarray(pe), np.asarray(frequency_reference(pts, enc.n_frequencies)),
        rtol=0.0, atol=3e-2)
    np.testing.assert_allclose(
        np.asarray(grid), np.asarray(hashgrid_reference(pts, enc.table, enc.scales)),
        rtol=1e-4, atol=1e-6)
    d_ref = jnp.dot(jnp.maximum(jnp.dot(grid, sdf.w1.T), 0.0), sdf.w2.T)
    np.testing.assert_allclose(np.asarray(d), np.asarray(d_ref), rtol=5e-2, atol=5e-6)

    print("KERNEL_OK")
</pallas_src>

<mosaic_0001>
module attributes {stable_mosaic.version = 11 : i64} {
  func.func @_freq_kernel(%arg0: i32, %arg1: memref<3x512xf32, #tpu.memory_space<vmem>>, %arg2: memref<72x3xf32, #tpu.memory_space<vmem>>, %arg3: memref<72x1xf32, #tpu.memory_space<vmem>>, %arg4: memref<72x512xf32, #tpu.memory_space<vmem>>) attributes {dimension_semantics = [#tpu.dimension_semantics<parallel>], iteration_bounds = array<i64: 2>, scalar_prefetch = 0 : i64, scratch_operands = 0 : i64, tpu.core_type = #tpu.core_type<tc>, window_params = [{transform_indices = @transform_0, window_bounds = array<i64: 3, 512>}, {pipeline_mode = #tpu.pipeline_mode<synchronous>, transform_indices = @transform_1, window_bounds = array<i64: 72, 3>}, {pipeline_mode = #tpu.pipeline_mode<synchronous>, transform_indices = @transform_2, window_bounds = array<i64: 72, 1>}, {transform_indices = @transform_3, window_bounds = array<i64: 72, 512>}]} {
    %c0 = arith.constant 0 : index
    %c0_0 = arith.constant 0 : index
    %0 = vector.load %arg1[%c0, %c0_0] : memref<3x512xf32, #tpu.memory_space<vmem>>, vector<3x512xf32>
    %c0_1 = arith.constant 0 : index
    %c0_2 = arith.constant 0 : index
    %1 = vector.load %arg2[%c0_1, %c0_2] : memref<72x3xf32, #tpu.memory_space<vmem>>, vector<72x3xf32>
    %2 = vector.extract_strided_slice %1 {offsets = [0, 0], sizes = [72, 1], strides = [1, 1]} : vector<72x3xf32> to vector<72x1xf32>
    %3 = vector.extract_strided_slice %0 {offsets = [0, 0], sizes = [1, 512], strides = [1, 1]} : vector<3x512xf32> to vector<1x512xf32>
    %4 = vector.broadcast %2 : vector<72x1xf32> to vector<72x512xf32>
    %5 = vector.broadcast %3 : vector<1x512xf32> to vector<72x512xf32>
    %6 = arith.mulf %4, %5 : vector<72x512xf32>
    %7 = vector.extract_strided_slice %1 {offsets = [0, 1], sizes = [72, 1], strides = [1, 1]} : vector<72x3xf32> to vector<72x1xf32>
    %8 = vector.extract_strided_slice %0 {offsets = [1, 0], sizes = [1, 512], strides = [1, 1]} : vector<3x512xf32> to vector<1x512xf32>
    %9 = vector.broadcast %7 : vector<72x1xf32> to vector<72x512xf32>
    %10 = vector.broadcast %8 : vector<1x512xf32> to vector<72x512xf32>
    %11 = arith.mulf %9, %10 : vector<72x512xf32>
    %12 = arith.addf %6, %11 : vector<72x512xf32>
    %13 = vector.extract_strided_slice %1 {offsets = [0, 2], sizes = [72, 1], strides = [1, 1]} : vector<72x3xf32> to vector<72x1xf32>
    %14 = vector.extract_strided_slice %0 {offsets = [2, 0], sizes = [1, 512], strides = [1, 1]} : vector<3x512xf32> to vector<1x512xf32>
    %15 = vector.broadcast %13 : vector<72x1xf32> to vector<72x512xf32>
    %16 = vector.broadcast %14 : vector<1x512xf32> to vector<72x512xf32>
    %17 = arith.mulf %15, %16 : vector<72x512xf32>
    %18 = arith.addf %12, %17 : vector<72x512xf32>
    %c0_3 = arith.constant 0 : index
    %c0_4 = arith.constant 0 : index
    %19 = vector.load %arg3[%c0_3, %c0_4] : memref<72x1xf32, #tpu.memory_space<vmem>>, vector<72x1xf32>
    %20 = vector.broadcast %19 : vector<72x1xf32> to vector<72x512xf32>
    %21 = arith.addf %18, %20 : vector<72x512xf32>
    %22 = math.sin %21 : vector<72x512xf32>
    %c0_5 = arith.constant 0 : index
    %c0_6 = arith.constant 0 : index
    %23 = vector.load %arg4[%c0_5, %c0_6] : memref<72x512xf32, #tpu.memory_space<vmem>>, vector<72x512xf32>
    tpu.vector_store %arg4[%c0_5, %c0_6], %22 {strides = array<i32>} : memref<72x512xf32, #tpu.memory_space<vmem>>, vector<72x512xf32>,
    return
  }
  func.func @transform_0(%arg0: i32) -> (i32, i32) {
    %c0_i32 = arith.constant 0 : i32
    %c0_i32_0 = arith.constant 0 : i32
    return %c0_i32, %arg0 : i32, i32
  }
  func.func @transform_1(%arg0: i32) -> (i32, i32) {
    %c0_i32 = arith.constant 0 : i32
    %c0_i32_0 = arith.constant 0 : i32
    %c0_i32_1 = arith.constant 0 : i32
    return %c0_i32, %c0_i32_0 : i32, i32
  }
  func.func @transform_2(%arg0: i32) -> (i32, i32) {
    %c0_i32 = arith.constant 0 : i32
    %c0_i32_0 = arith.constant 0 : i32
    %c0_i32_1 = arith.constant 0 : i32
    return %c0_i32, %c0_i32_0 : i32, i32
  }
  func.func @transform_3(%arg0: i32) -> (i32, i32) {
    %c0_i32 = arith.constant 0 : i32
    %c0_i32_0 = arith.constant 0 : i32
    return %c0_i32, %arg0 : i32, i32
  }
}

</mosaic_0001>

<llo_original>
// kernel: tpu_custom_call.1
$region0: #{tpu_custom_call.1}
  #allocation0 [shape = 'u32[]', space=smem, size = 0x4, offset = 0x4, fixed_abs, tag = 'smem constant byte address 0x4 - core index']
  #allocation1 [shape = 'u32[144,128]{1,0:T(1,128)}', space=vmem, size = 0x12000, scoped, tag = 'internal scratch']
  %s0 = inlined_call_operand.vmem [shape: f32[3,1024], index: 0, kind: input, shape index: {}]
  %s1 = inlined_call_operand.vmem [shape: f32[72,3], index: 1, kind: input, shape index: {}]
  %s2 = inlined_call_operand.vmem [shape: f32[72,1], index: 2, kind: input, shape index: {}]
  %s3 = inlined_call_operand.hbm [shape: f32[72,1024], index: 3, kind: output, shape index: {}]
  %s4 = sld [smem:[#allocation0]]
  $region45: #{tpu_custom_call.1} parent=0
    _
  %s6 = ssub.s32 1, %s4
  %s7 = scalar_select 0, %s6, %s4
  $region1: #{tpu_custom_call.1} parent=0
    #allocation2 [shape = 'u8[294912]{0}', space=vmem, size = 0x48000, scoped, tag = 'output window, operand 0']
    #allocation3 [shape = 's32[2]{0}', space=sflag, size = 0x8, scoped, tag = 'scoped memory for tpu_custom_call.1']
    %8 = vsyncpa [#allocation3], 0
    %s9 = scalar_lea.sflag [#allocation3], 1
    %10 = vsyncpa %s9, 0
    loop: start=0, step=1, limit=4
    $region2: #{tpu_custom_call.1} parent=1 // loop_pre_header
      _
    $region3: #{tpu_custom_call.1} parent=1 // loop_header
      %s12 = sphi 0, %s16
      %p13 = scmp.ge.s32.totalorder %s12, 4
      %s22 = sphi 0, %s24
      %s25 = sphi 0, %s22
      %s26 = sphi 0, %s25
      %s42 = sphi 0, %s26
      %s46 = sphi 0, %s46
      %s48 = sphi 0, %s46
      %s49 = sphi 0, %s48
      %s63 = sphi 0, %s49
      %s67 = sphi 0, %s67
      %s69 = sphi 0, %s67
      %s70 = sphi 0, %s69
      %s84 = sphi 0, %s70
      %s90 = sphi 0, %s92
      %s93 = sphi 0, %s90
      %s94 = sphi 0, %s93
      %s110 = sphi 0, %s94
    $region4: #{tpu_custom_call.1} parent=1 // loop_header_branch
      %15 = sbr.rel (%p13) target = $region8
    $region5: #{tpu_custom_call.1} parent=1 // loop_body
      %s17 = ssub.s32 %s12, 1
      %s18 = ssub.s32 %s12, 2
      %s19 = sadd.s32 %s12, 1
      %s20 = ssub.s32 %s12, %s19
      %p21 = scmp.eq.s32.totalorder %s20, 0
      %s23 = sadd.s32 %s22, 1
      %s24 = scalar_select %p21, %s22, %s23
      %p27 = pneg %p21
      %p28 = scmp.eq.s32.totalorder %s12, 1
      %p29 = por %p27, %p28
      %p30 = scmp.ne.s32.totalorder %s22, %s25
      %p31 = scmp.eq.s32.totalorder %s12, 0
      %p32 = por %p30, %p31
      %p33 = scmp.ne.s32.totalorder %s22, %s25
      %p34 = scmp.eq.s32.totalorder %s17, 1
      %p35 = por %p33, %p34
      %p36 = scmp.ne.s32.totalorder %s25, %s26
      %p37 = scmp.eq.s32.totalorder %s17, 0
      %p38 = por %p36, %p37
      %p39 = scmp.ne.s32.totalorder %s25, %s26
      %p40 = scmp.eq.s32.totalorder %s18, 1
      %p41 = por %p39, %p40
      %p43 = scmp.ne.s32.totalorder %s26, %s42
      %p44 = scmp.eq.s32.totalorder %s18, 0
      %p45 = por %p43, %p44
      %s47 = sadd.s32 %s46, 1
      %p50 = scmp.eq.s32.totalorder %s12, 1
      %p51 = scmp.ne.s32.totalorder %s46, %s48
      %p52 = scmp.eq.s32.totalorder %s12, 0
      %p53 = por %p51, %p52
      %p54 = scmp.ne.s32.totalorder %s46, %s48
      %p55 = scmp.eq.s32.totalorder %s17, 1
      %p56 = por %p54, %p55
      %p57 = scmp.ne.s32.totalorder %s48, %s49
      %p58 = scmp.eq.s32.totalorder %s17, 0
      %p59 = por %p57, %p58
      %p60 = scmp.ne.s32.totalorder %s48, %s49
      %p61 = scmp.eq.s32.totalorder %s18, 1
      %p62 = por %p60, %p61
      %p64 = scmp.ne.s32.totalorder %s49, %s63
      %p65 = scmp.eq.s32.totalorder %s18, 0
      %p66 = por %p64, %p65
      %s68 = sadd.s32 %s67, 1
      %p71 = scmp.eq.s32.totalorder %s12, 1
      %p72 = scmp.ne.s32.totalorder %s67, %s69
      %p73 = scmp.eq.s32.totalorder %s12, 0
      %p74 = por %p72, %p73
      %p75 = scmp.ne.s32.totalorder %s67, %s69
      %p76 = scmp.eq.s32.totalorder %s17, 1
      %p77 = por %p75, %p76
      %p78 = scmp.ne.s32.totalorder %s69, %s70
      %p79 = scmp.eq.s32.totalorder %s17, 0
      %p80 = por %p78, %p79
      %p81 = scmp.ne.s32.totalorder %s69, %s70
      %p82 = scmp.eq.s32.totalorder %s18, 1
      %p83 = por %p81, %p82
      %p85 = scmp.ne.s32.totalorder %s70, %s84
      %p86 = scmp.eq.s32.totalorder %s18, 0
      %p87 = por %p85, %p86
      %s88 = ssub.s32 %s12, %s19
      %p89 = scmp.eq.s32.totalorder %s88, 0
      %s91 = sadd.s32 %s90, 1
      %s92 = scalar_select %p89, %s90, %s91
      %p95 = pneg %p89
      %p96 = scmp.eq.s32.totalorder %s12, 1
      %p97 = por %p95, %p96
      %p98 = scmp.ne.s32.totalorder %s90, %s93
      %p99 = scmp.eq.s32.totalorder %s12, 0
      %p100 = por %p98, %p99
      %p101 = scmp.ne.s32.totalorder %s90, %s93
      %p102 = scmp.eq.s32.totalorder %s17, 1
      %p103 = por %p101, %p102
      %p104 = scmp.ne.s32.totalorder %s93, %s94
      %p105 = scmp.eq.s32.totalorder %s17, 0
      %p106 = por %p104, %p105
      %p107 = scmp.ne.s32.totalorder %s93, %s94
      %p108 = scmp.eq.s32.totalorder %s18, 1
      %p109 = por %p107, %p108
      %p111 = scmp.ne.s32.totalorder %s94, %s110
      %p112 = scmp.eq.s32.totalorder %s18, 0
      %p113 = por %p111, %p112
      %p114 = scmp.le.s32.totalorder 1, %s12
      %p115 = scmp.lt.s32.totalorder %s12, 3
      %p116 = pnand %p114, %p115
      %p117 = pneg %p116
      // Predicated region
      $region9: #{tpu_custom_call.1} parent=5 // pred_check
        _
      $region10: #{tpu_custom_call.1} parent=5 // pred_check_branch
        %119 = sbr.rel (%p116) target = $region12
      $region11: #{tpu_custom_call.1} parent=5 // pred_region
        %s120 = ssub.s32 %s12, 1
        // Predicated region
        $region13: #{tpu_custom_call.1} parent=11 // pred_check
          %p121 = pneg %p59
        $region14: #{tpu_custom_call.1} parent=11 // pred_check_branch
          %123 = sbr.rel (%p121) target = $region16
        $region15: #{tpu_custom_call.1} parent=11 // pred_region
          _
        $region16: #{tpu_custom_call.1} parent=11 // pred_fallthru
          _
        // Predicated region
        $region17: #{tpu_custom_call.1} parent=11 // pred_check
          %p124 = pneg %p80
        $region18: #{tpu_custom_call.1} parent=11 // pred_check_branch
          %126 = sbr.rel (%p124) target = $region20
        $region19: #{tpu_custom_call.1} parent=11 // pred_region
          _
        $region20: #{tpu_custom_call.1} parent=11 // pred_fallthru
          _
      $region12: #{tpu_custom_call.1} parent=5 // pred_fallthru
        _
      %p127 = scmp.lt.s32.totalorder %s12, 2
      // Predicated region
      $region21: #{tpu_custom_call.1} parent=5 // pred_check
        %p128 = pneg %p127
      $region22: #{tpu_custom_call.1} parent=5 // pred_check_branch
        %130 = sbr.rel (%p128) target = $region24
      $region23: #{tpu_custom_call.1} parent=5 // pred_region
        // Predicated region
        $region25: #{tpu_custom_call.1} parent=23 // pred_check
          %p131 = pneg %p32
        $region26: #{tpu_custom_call.1} parent=23 // pred_check_branch
          %133 = sbr.rel (%p131) target = $region28
        $region27: #{tpu_custom_call.1} parent=23 // pred_region
          %s134 = smul.u32 4, %s12
          %p135 = scmp.lt.s32.totalorder %s134, 7
          %s136 = scalar_select %p135, %s134, 7
          %s137 = smul.addr %s136, 4
          %s138 = scalar_lea.vmem %s0, %s137
          %s139 = smul.u32 4, %s12
        $region28: #{tpu_custom_call.1} parent=23 // pred_fallthru
          _
      $region24: #{tpu_custom_call.1} parent=5 // pred_fallthru
        _
      %p140 = scmp.le.s32.totalorder 1, %s12
      %p141 = scmp.lt.s32.totalorder %s12, 3
      %p142 = pnand %p140, %p141
      %p143 = pneg %p142
      // Predicated region
      $region29: #{tpu_custom_call.1} parent=5 // pred_check
        _
      $region30: #{tpu_custom_call.1} parent=5 // pred_check_branch
        %145 = sbr.rel (%p142) target = $region32
      $region31: #{tpu_custom_call.1} parent=5 // pred_region
        %s146 = ssub.s32 %s12, 1
        %s147 = smul.u32 4, %s17
        %p148 = scmp.lt.s32.totalorder %s147, 7
        %s149 = scalar_select %p148, %s147, 7
        %s150 = smul.addr %s149, 4
        %s151 = scalar_lea.vmem %s0, %s150
        %p152 = pneg %p38
        %p153 = pneg %p35
        %p154 = pneg %p59
        %p155 = pneg %p56
        %p156 = pneg %p80
        %p157 = pneg %p77
        %p158 = pneg %p106
        %p159 = pneg %p103
        %s160 = sand.u32 %s93, 1
        %s161 = scalar_lea.sflag [#allocation3], %s160
        %s162 = sand.u32 %s93, 1
        %s163 = smul.addr %s162, 288
        %s164 = scalar_lea.vmem [#allocation2], %s163
        %s165 = smul.u32 4, %s17
        %p166 = scmp.lt.s32.totalorder %s165, 7
        %s167 = scalar_select %p166, %s165, 7
        %s168 = smul.addr %s167, 4
        %s169 = scalar_lea.vmem %s0, %s168
        %s170 = smul.u32 4, %s17
        %s171 = smul.u32 4, %s17
        %v172 = vld [vmem:[%s169] sm:$0x77]
        %v173 = vld [vmem:[%s169 + $0x8] sm:$0x77]
        %v174 = vld [vmem:[%s1] sm:$0xff]
        %v175 = vld [vmem:[%s1 + $0x8] sm:$0xff]
        %v176 = vld [vmem:[%s1 + $0x10] sm:$0xff]
        %v177 = vld [vmem:[%s1 + $0x18] sm:$0xff]
        %v178 = vld [vmem:[%s1 + $0x20] sm:$0xff]
        %v179 = vld [vmem:[%s1 + $0x28] sm:$0xff]
        %v180 = vld [vmem:[%s1 + $0x30] sm:$0xff]
        %v181 = vld [vmem:[%s1 + $0x38] sm:$0xff]
        %v182 = vld [vmem:[%s1 + $0x40] sm:$0xff]
        %184 = vset.pattern.permute.xlu0 0
        %185 = vperm.xlu0 %184, %v174
        %v186 = vpop.permute.xlu0 %185
        %189 = vset.pattern.permute.xlu0 0
        %190 = vperm.xlu0 %189, %v175
        %v191 = vpop.permute.xlu0 %190
        %194 = vset.pattern.permute.xlu0 0
        %195 = vperm.xlu0 %194, %v176
        %v196 = vpop.permute.xlu0 %195
        %199 = vset.pattern.permute.xlu0 0
        %200 = vperm.xlu0 %199, %v177
        %v201 = vpop.permute.xlu0 %200
        %204 = vset.pattern.permute.xlu0 0
        %205 = vperm.xlu0 %204, %v178
        %v206 = vpop.permute.xlu0 %205
        %209 = vset.pattern.permute.xlu0 0
        %210 = vperm.xlu0 %209, %v179
        %v211 = vpop.permute.xlu0 %210
        %214 = vset.pattern.permute.xlu0 0
        %215 = vperm.xlu0 %214, %v180
        %v216 = vpop.permute.xlu0 %215
        %219 = vset.pattern.permute.xlu0 0
        %220 = vperm.xlu0 %219, %v181
        %v221 = vpop.permute.xlu0 %220
        %224 = vset.pattern.permute.xlu0 0
        %225 = vperm.xlu0 %224, %v182
        %v226 = vpop.permute.xlu0 %225
        %v230 = vlaneseq
        %v231 = vshrl.u32 %v230, 7
        %v232 = vsub.s32 0, %v231
        %v233 = vrot.slane %v172, %v232
        %v234 = vlaneseq
        %v235 = vshrl.u32 %v234, 7
        %v236 = vsub.s32 4, %v235
        %v237 = vrot.slane %v172, %v236
        %v238 = vlaneseq
        %v239 = vshrl.u32 %v238, 7
        %v240 = vsub.s32 0, %v239
        %v241 = vrot.slane %v173, %v240
        %v242 = vlaneseq
        %v243 = vshrl.u32 %v242, 7
        %v244 = vsub.s32 4, %v243
        %v245 = vrot.slane %v173, %v244
        %v250 = vlaneseq
        %v251 = vshrl.u32 %v250, 7
        %v252 = vsub.s32 0, %v251
        %v253 = vrot.slane %v233, %v252
        %v254 = vlaneseq
        %v255 = vshrl.u32 %v254, 7
        %v256 = vsub.s32 0, %v255
        %v257 = vrot.slane %v237, %v256
        %v258 = vlaneseq
        %v259 = vshrl.u32 %v258, 7
        %v260 = vsub.s32 0, %v259
        %v261 = vrot.slane %v241, %v260
        %v262 = vlaneseq
        %v263 = vshrl.u32 %v262, 7
        %v264 = vsub.s32 0, %v263
        %v265 = vrot.slane %v245, %v264
        %v266 = vmul.f32 %v186, %v253
        %v267 = vmul.f32 %v186, %v257
        %v268 = vmul.f32 %v186, %v261
        %v269 = vmul.f32 %v186, %v265
        %v270 = vmul.f32 %v191, %v253
        %v271 = vmul.f32 %v191, %v257
        %v272 = vmul.f32 %v191, %v261
        %v273 = vmul.f32 %v191, %v265
        %v274 = vmul.f32 %v196, %v253
        %v275 = vmul.f32 %v196, %v257
        %v276 = vmul.f32 %v196, %v261
        %v277 = vmul.f32 %v196, %v265
        %v278 = vmul.f32 %v201, %v253
        %v279 = vmul.f32 %v201, %v257
        %v280 = vmul.f32 %v201, %v261
        %v281 = vmul.f32 %v201, %v265
        %v282 = vmul.f32 %v206, %v253
        %v283 = vmul.f32 %v206, %v257
        %v284 = vmul.f32 %v206, %v261
        %v285 = vmul.f32 %v206, %v265
        %v286 = vmul.f32 %v211, %v253
        %v287 = vmul.f32 %v211, %v257
        %v288 = vmul.f32 %v211, %v261
        %v289 = vmul.f32 %v211, %v265
        %v290 = vmul.f32 %v216, %v253
        %v291 = vmul.f32 %v216, %v257
        %v292 = vmul.f32 %v216, %v261
        %v293 = vmul.f32 %v216, %v265
        %v294 = vmul.f32 %v221, %v253
        %v295 = vmul.f32 %v221, %v257
        %v296 = vmul.f32 %v221, %v261
        %v297 = vmul.f32 %v221, %v265
        %v298 = vmul.f32 %v226, %v253
        %v299 = vmul.f32 %v226, %v257
        %v300 = vmul.f32 %v226, %v261
        %v301 = vmul.f32 %v226, %v265
        %302 = vset.pattern.permute.xlu0 1
        %303 = vperm.xlu0 %302, %v174
        %v304 = vpop.permute.xlu0 %303
        %306 = vset.pattern.permute.xlu0 1
        %307 = vperm.xlu0 %306, %v175
        %v308 = vpop.permute.xlu0 %307
        %310 = vset.pattern.permute.xlu0 1
        %311 = vperm.xlu0 %310, %v176
        %v312 = vpop.permute.xlu0 %311
        %314 = vset.pattern.permute.xlu0 1
        %315 = vperm.xlu0 %314, %v177
        %v316 = vpop.permute.xlu0 %315
        %318 = vset.pattern.permute.xlu0 1
        %319 = vperm.xlu0 %318, %v178
        %v320 = vpop.permute.xlu0 %319
        %322 = vset.pattern.permute.xlu0 1
        %323 = vperm.xlu0 %322, %v179
        %v324 = vpop.permute.xlu0 %323
        %326 = vset.pattern.permute.xlu0 1
        %327 = vperm.xlu0 %326, %v180
        %v328 = vpop.permute.xlu0 %327
        %330 = vset.pattern.permute.xlu0 1
        %331 = vperm.xlu0 %330, %v181
        %v332 = vpop.permute.xlu0 %331
        %334 = vset.pattern.permute.xlu0 1
        %335 = vperm.xlu0 %334, %v182
        %v336 = vpop.permute.xlu0 %335
        %v338 = vlaneseq
        %v339 = vshrl.u32 %v338, 7
        %v340 = vsub.s32 1, %v339
        %v341 = vrot.slane %v172, %v340
        %v342 = vlaneseq
        %v343 = vshrl.u32 %v342, 7
        %v344 = vsub.s32 5, %v343
        %v345 = vrot.slane %v172, %v344
        %v346 = vlaneseq
        %v347 = vshrl.u32 %v346, 7
        %v348 = vsub.s32 1, %v347
        %v349 = vrot.slane %v173, %v348
        %v350 = vlaneseq
        %v351 = vshrl.u32 %v350, 7
        %v352 = vsub.s32 5, %v351
        %v353 = vrot.slane %v173, %v352
        %v358 = vlaneseq
        %v359 = vshrl.u32 %v358, 7
        %v360 = vsub.s32 1, %v359
        %v361 = vrot.slane %v341, %v360
        %v362 = vlaneseq
        %v363 = vshrl.u32 %v362, 7
        %v364 = vsub.s32 1, %v363
        %v365 = vrot.slane %v345, %v364
        %v366 = vlaneseq
        %v367 = vshrl.u32 %v366, 7
        %v368 = vsub.s32 1, %v367
        %v369 = vrot.slane %v349, %v368
        %v370 = vlaneseq
        %v371 = vshrl.u32 %v370, 7
        %v372 = vsub.s32 1, %v371
        %v373 = vrot.slane %v353, %v372
        %v374 = vmul.f32 %v304, %v361
        %v375 = vmul.f32 %v304, %v365
        %v376 = vmul.f32 %v304, %v369
        %v377 = vmul.f32 %v304, %v373
        %v378 = vmul.f32 %v308, %v361
        %v379 = vmul.f32 %v308, %v365
        %v380 = vmul.f32 %v308, %v369
        %v381 = vmul.f32 %v308, %v373
        %v382 = vmul.f32 %v312, %v361
        %v383 = vmul.f32 %v312, %v365
        %v384 = vmul.f32 %v312, %v369
        %v385 = vmul.f32 %v312, %v373
        %v386 = vmul.f32 %v316, %v361
        %v387 = vmul.f32 %v316, %v365
        %v388 = vmul.f32 %v316, %v369
        %v389 = vmul.f32 %v316, %v373
        %v390 = vmul.f32 %v320, %v361
        %v391 = vmul.f32 %v320, %v365
        %v392 = vmul.f32 %v320, %v369
        %v393 = vmul.f32 %v320, %v373
        %v394 = vmul.f32 %v324, %v361
        %v395 = vmul.f32 %v324, %v365
        %v396 = vmul.f32 %v324, %v369
        %v397 = vmul.f32 %v324, %v373
        %v398 = vmul.f32 %v328, %v361
        %v399 = vmul.f32 %v328, %v365
        %v400 = vmul.f32 %v328, %v369
        %v401 = vmul.f32 %v328, %v373
        %v402 = vmul.f32 %v332, %v361
        %v403 = vmul.f32 %v332, %v365
        %v404 = vmul.f32 %v332, %v369
        %v405 = vmul.f32 %v332, %v373
        %v406 = vmul.f32 %v336, %v361
        %v407 = vmul.f32 %v336, %v365
        %v408 = vmul.f32 %v336, %v369
        %v409 = vmul.f32 %v336, %v373
        %v410 = vadd.f32 %v266, %v374
        %v411 = vadd.f32 %v267, %v375
        %v412 = vadd.f32 %v268, %v376
        %v413 = vadd.f32 %v269, %v377
        %v414 = vadd.f32 %v270, %v378
        %v415 = vadd.f32 %v271, %v379
        %v416 = vadd.f32 %v272, %v380
        %v417 = vadd.f32 %v273, %v381
        %v418 = vadd.f32 %v274, %v382
        %v419 = vadd.f32 %v275, %v383
        %v420 = vadd.f32 %v276, %v384
        %v421 = vadd.f32 %v277, %v385
        %v422 = vadd.f32 %v278, %v386
        %v423 = vadd.f32 %v279, %v387
        %v424 = vadd.f32 %v280, %v388
        %v425 = vadd.f32 %v281, %v389
        %v426 = vadd.f32 %v282, %v390
        %v427 = vadd.f32 %v283, %v391
        %v428 = vadd.f32 %v284, %v392
        %v429 = vadd.f32 %v285, %v393
        %v430 = vadd.f32 %v286, %v394
        %v431 = vadd.f32 %v287, %v395
        %v432 = vadd.f32 %v288, %v396
        %v433 = vadd.f32 %v289, %v397
        %v434 = vadd.f32 %v290, %v398
        %v435 = vadd.f32 %v291, %v399
        %v436 = vadd.f32 %v292, %v400
        %v437 = vadd.f32 %v293, %v401
        %v438 = vadd.f32 %v294, %v402
        %v439 = vadd.f32 %v295, %v403
        %v440 = vadd.f32 %v296, %v404
        %v441 = vadd.f32 %v297, %v405
        %v442 = vadd.f32 %v298, %v406
        %v443 = vadd.f32 %v299, %v407
        %v444 = vadd.f32 %v300, %v408
        %v445 = vadd.f32 %v301, %v409
        %446 = vset.pattern.permute.xlu0 2
        %447 = vperm.xlu0 %446, %v174
        %v448 = vpop.permute.xlu0 %447
        %450 = vset.pattern.permute.xlu0 2
        %451 = vperm.xlu0 %450, %v175
        %v452 = vpop.permute.xlu0 %451
        %454 = vset.pattern.permute.xlu0 2
        %455 = vperm.xlu0 %454, %v176
        %v456 = vpop.permute.xlu0 %455
        %458 = vset.pattern.permute.xlu0 2
        %459 = vperm.xlu0 %458, %v177
        %v460 = vpop.permute.xlu0 %459
        %462 = vset.pattern.permute.xlu0 2
        %463 = vperm.xlu0 %462, %v178
        %v464 = vpop.permute.xlu0 %463
        %466 = vset.pattern.permute.xlu0 2
        %467 = vperm.xlu0 %466, %v179
        %v468 = vpop.permute.xlu0 %467
        %470 = vset.pattern.permute.xlu0 2
        %471 = vperm.xlu0 %470, %v180
        %v472 = vpop.permute.xlu0 %471
        %474 = vset.pattern.permute.xlu0 2
        %475 = vperm.xlu0 %474, %v181
        %v476 = vpop.permute.xlu0 %475
        %478 = vset.pattern.permute.xlu0 2
        %479 = vperm.xlu0 %478, %v182
        %v480 = vpop.permute.xlu0 %479
        %v482 = vlaneseq
        %v483 = vshrl.u32 %v482, 7
        %v484 = vsub.s32 2, %v483
        %v485 = vrot.slane %v172, %v484
        %v486 = vlaneseq
        %v487 = vshrl.u32 %v486, 7
        %v488 = vsub.s32 6, %v487
        %v489 = vrot.slane %v172, %v488
        %v490 = vlaneseq
        %v491 = vshrl.u32 %v490, 7
        %v492 = vsub.s32 2, %v491
        %v493 = vrot.slane %v173, %v492
        %v494 = vlaneseq
        %v495 = vshrl.u32 %v494, 7
        %v496 = vsub.s32 6, %v495
        %v497 = vrot.slane %v173, %v496
        %v502 = vlaneseq
        %v503 = vshrl.u32 %v502, 7
        %v504 = vsub.s32 2, %v503
        %v505 = vrot.slane %v485, %v504
        %v506 = vlaneseq
        %v507 = vshrl.u32 %v506, 7
        %v508 = vsub.s32 2, %v507
        %v509 = vrot.slane %v489, %v508
        %v510 = vlaneseq
        %v511 = vshrl.u32 %v510, 7
        %v512 = vsub.s32 2, %v511
        %v513 = vrot.slane %v493, %v512
        %v514 = vlaneseq
        %v515 = vshrl.u32 %v514, 7
        %v516 = vsub.s32 2, %v515
        %v517 = vrot.slane %v497, %v516
        %v518 = vmul.f32 %v448, %v505
        %v519 = vmul.f32 %v448, %v509
        %v520 = vmul.f32 %v448, %v513
        %v521 = vmul.f32 %v448, %v517
        %v522 = vmul.f32 %v452, %v505
        %v523 = vmul.f32 %v452, %v509
        %v524 = vmul.f32 %v452, %v513
        %v525 = vmul.f32 %v452, %v517
        %v526 = vmul.f32 %v456, %v505
        %v527 = vmul.f32 %v456, %v509
        %v528 = vmul.f32 %v456, %v513
        %v529 = vmul.f32 %v456, %v517
        %v530 = vmul.f32 %v460, %v505
        %v531 = vmul.f32 %v460, %v509
        %v532 = vmul.f32 %v460, %v513
        %v533 = vmul.f32 %v460, %v517
        %v534 = vmul.f32 %v464, %v505
        %v535 = vmul.f32 %v464, %v509
        %v536 = vmul.f32 %v464, %v513
        %v537 = vmul.f32 %v464, %v517
        %v538 = vmul.f32 %v468, %v505
        %v539 = vmul.f32 %v468, %v509
        %v540 = vmul.f32 %v468, %v513
        %v541 = vmul.f32 %v468, %v517
        %v542 = vmul.f32 %v472, %v505
        %v543 = vmul.f32 %v472, %v509
        %v544 = vmul.f32 %v472, %v513
        %v545 = vmul.f32 %v472, %v517
        %v546 = vmul.f32 %v476, %v505
        %v547 = vmul.f32 %v476, %v509
        %v548 = vmul.f32 %v476, %v513
        %v549 = vmul.f32 %v476, %v517
        %v550 = vmul.f32 %v480, %v505
        %v551 = vmul.f32 %v480, %v509
        %v552 = vmul.f32 %v480, %v513
        %v553 = vmul.f32 %v480, %v517
        %v554 = vadd.f32 %v410, %v518
        %v555 = vadd.f32 %v411, %v519
        %v556 = vadd.f32 %v412, %v520
        %v557 = vadd.f32 %v413, %v521
        %v558 = vadd.f32 %v414, %v522
        %v559 = vadd.f32 %v415, %v523
        %v560 = vadd.f32 %v416, %v524
        %v561 = vadd.f32 %v417, %v525
        %v562 = vadd.f32 %v418, %v526
        %v563 = vadd.f32 %v419, %v527
        %v564 = vadd.f32 %v420, %v528
        %v565 = vadd.f32 %v421, %v529
        %v566 = vadd.f32 %v422, %v530
        %v567 = vadd.f32 %v423, %v531
        %v568 = vadd.f32 %v424, %v532
        %v569 = vadd.f32 %v425, %v533
        %v570 = vadd.f32 %v426, %v534
        %v571 = vadd.f32 %v427, %v535
        %v572 = vadd.f32 %v428, %v536
        %v573 = vadd.f32 %v429, %v537
        %v574 = vadd.f32 %v430, %v538
        %v575 = vadd.f32 %v431, %v539
        %v576 = vadd.f32 %v432, %v540
        %v577 = vadd.f32 %v433, %v541
        %v578 = vadd.f32 %v434, %v542
        %v579 = vadd.f32 %v435, %v543
        %v580 = vadd.f32 %v436, %v544
        %v581 = vadd.f32 %v437, %v545
        %v582 = vadd.f32 %v438, %v546
        %v583 = vadd.f32 %v439, %v547
        %v584 = vadd.f32 %v440, %v548
        %v585 = vadd.f32 %v441, %v549
        %v586 = vadd.f32 %v442, %v550
        %v587 = vadd.f32 %v443, %v551
        %v588 = vadd.f32 %v444, %v552
        %v589 = vadd.f32 %v445, %v553
        %v590 = vld [vmem:[%s2] sm:$0xff]
        %v591 = vld [vmem:[%s2 + $0x8] sm:$0xff]
        %v592 = vld [vmem:[%s2 + $0x10] sm:$0xff]
        %v593 = vld [vmem:[%s2 + $0x18] sm:$0xff]
        %v594 = vld [vmem:[%s2 + $0x20] sm:$0xff]
        %v595 = vld [vmem:[%s2 + $0x28] sm:$0xff]
        %v596 = vld [vmem:[%s2 + $0x30] sm:$0xff]
        %v597 = vld [vmem:[%s2 + $0x38] sm:$0xff]
        %v598 = vld [vmem:[%s2 + $0x40] sm:$0xff]
        %600 = vset.pattern.permute.xlu0 0
        %601 = vperm.xlu0 %600, %v590
        %v602 = vpop.permute.xlu0 %601
        %605 = vset.pattern.permute.xlu0 0
        %606 = vperm.xlu0 %605, %v591
        %v607 = vpop.permute.xlu0 %606
        %610 = vset.pattern.permute.xlu0 0
        %611 = vperm.xlu0 %610, %v592
        %v612 = vpop.permute.xlu0 %611
        %615 = vset.pattern.permute.xlu0 0
        %616 = vperm.xlu0 %615, %v593
        %v617 = vpop.permute.xlu0 %616
        %620 = vset.pattern.permute.xlu0 0
        %621 = vperm.xlu0 %620, %v594
        %v622 = vpop.permute.xlu0 %621
        %625 = vset.pattern.permute.xlu0 0
        %626 = vperm.xlu0 %625, %v595
        %v627 = vpop.permute.xlu0 %626
        %630 = vset.pattern.permute.xlu0 0
        %631 = vperm.xlu0 %630, %v596
        %v632 = vpop.permute.xlu0 %631
        %635 = vset.pattern.permute.xlu0 0
        %636 = vperm.xlu0 %635, %v597
        %v637 = vpop.permute.xlu0 %636
        %640 = vset.pattern.permute.xlu0 0
        %641 = vperm.xlu0 %640, %v598
        %v642 = vpop.permute.xlu0 %641
        %v644 = vadd.f32 %v554, %v602
        %v645 = vadd.f32 %v555, %v602
        %v646 = vadd.f32 %v556, %v602
        %v647 = vadd.f32 %v557, %v602
        %v648 = vadd.f32 %v558, %v607
        %v649 = vadd.f32 %v559, %v607
        %v650 = vadd.f32 %v560, %v607
        %v651 = vadd.f32 %v561, %v607
        %v652 = vadd.f32 %v562, %v612
        %v653 = vadd.f32 %v563, %v612
        %v654 = vadd.f32 %v564, %v612
        %v655 = vadd.f32 %v565, %v612
        %v656 = vadd.f32 %v566, %v617
        %v657 = vadd.f32 %v567, %v617
        %v658 = vadd.f32 %v568, %v617
        %v659 = vadd.f32 %v569, %v617
        %v660 = vadd.f32 %v570, %v622
        %v661 = vadd.f32 %v571, %v622
        %v662 = vadd.f32 %v572, %v622
        %v663 = vadd.f32 %v573, %v622
        %v664 = vadd.f32 %v574, %v627
        %v665 = vadd.f32 %v575, %v627
        %v666 = vadd.f32 %v576, %v627
        %v667 = vadd.f32 %v577, %v627
        %v668 = vadd.f32 %v578, %v632
        %v669 = vadd.f32 %v579, %v632
        %v670 = vadd.f32 %v580, %v632
        %v671 = vadd.f32 %v581, %v632
        %v672 = vadd.f32 %v582, %v637
        %v673 = vadd.f32 %v583, %v637
        %v674 = vadd.f32 %v584, %v637
        %v675 = vadd.f32 %v585, %v637
        %v676 = vadd.f32 %v586, %v642
        %v677 = vadd.f32 %v587, %v642
        %v678 = vadd.f32 %v588, %v642
        %v679 = vadd.f32 %v589, %v642
        %v680 = vand.u32 2147483647, %v644
        %vm681 = vcmp.le.f32.partialorder %v680, 0.7853982
        %vm682 = vcmp.lt.s32.totalorder %v644, 0
        %v683 = vand.u32 %v644, 2139095040
        %v684 = vshrl.u32 %v683, 23
        %v685 = vsub.s32 %v684, 127
        %v686 = vand.u32 2147483647, %v644
        %v687 = vand.u32 %v686, 8388607
        %v688 = vor.u32 %v687, 8388608
        %v689 = vsub.s32 0, %v688
        %v690 = vadd.s32 %v685, 1
        %vm691 = vcmp.gt.s32.totalorder %v690, 0
        %v692 = vsel %vm691, %v690, 0
        %v693 = vshrl.u32 %v692, 5
        %v694 = vand.u32 %v692, 31
        %v695 = vsub.s32 32, %v694
        %v696 = vshrl.u32 683565275, %v695
        %v697 = vshll.u32 683565275, %v694
        %v698 = vshrl.u32 2475754826, %v695
        %v699 = vor.u32 %v697, %v698
        %v700 = vshll.u32 2475754826, %v694
        %v701 = vshrl.u32 2131351028, %v695
        %v702 = vor.u32 %v700, %v701
        %v703 = vshll.u32 2131351028, %v694
        %v704 = vshrl.u32 2102212464, %v695
        %v705 = vor.u32 %v703, %v704
        %v706 = vshll.u32 2102212464, %v694
        %v707 = vshrl.u32 920167782, %v695
        %v708 = vor.u32 %v706, %v707
        %v709 = vshll.u32 920167782, %v694
        %v710 = vshrl.u32 1326507024, %v695
        %v711 = vor.u32 %v709, %v710
        %vm712 = vcmp.lt.s32.totalorder %v693, 1
        %vm713 = vcmp.lt.s32.totalorder %v693, 2
        %vm714 = vcmp.lt.s32.totalorder %v693, 3
        %vm715 = vcmp.lt.s32.totalorder %v693, 4
        %v716 = vsel %vm712, %v696, %v699
        %v717 = vsel %vm715, %v705, 2102212464
        %v718 = vsel %vm714, %v702, %v717
        %v719 = vsel %vm713, %v716, %v718
        %v720 = vsel %vm712, %v699, %v702
        %v721 = vsel %vm715, %v708, 920167782
        %v722 = vsel %vm714, %v705, %v721
        %v723 = vsel %vm713, %v720, %v722
        %v724 = vsel %vm712, %v702, %v705
        %v725 = vsel %vm715, %v711, 1326507024
        %v726 = vsel %vm714, %v708, %v725
        %v727 = vsel %vm713, %v724, %v726
        %v728 = vshll.u32 %v688, 8
        %v729 = vmul.u32.u64.compose %v728, %v727
        %v730 = vextract.low.u32 %v729
        %v731 = vextract.high.u32 %v729
        %v732 = vmul.u32.u64.compose %v728, %v723
        %v733 = vextract.low.u32 %v732
        %v734 = vextract.high.u32 %v732
        %v735 = vmul.u32 %v728, %v719
        %v736 = vadd.s32 %v731, %v733
        %vm737 = vc.u32 %v731, %v733
        %v738 = vadd.s32 %v734, 1
        %v739 = vsel %vm737, %v738, %v734
        %v740 = vadd.s32 %v735, %v739
        %v741 = vadd.s32 %v740, 536870912
        %v742 = vshrl.u32 %v741, 30
        %v743 = vshll.u32 %v742, 30
        %v744 = vsub.s32 %v740, %v743
        %vm745 = vcmp.lt.s32.totalorder %v744, 0
        %v746 = vsub.s32 0, %v744
        %v747 = vsel %vm745, %v746, %v744
        %v748 = vclz %v747
        %v749 = vsub.s32 %v748, 2
        %vm750 = vcmp.gt.s32.totalorder 0, %v749
        %v751 = vsel %vm750, 0, %v749
        %v752 = vsub.s32 32, %v751
        %v753 = vshll.u32 %v744, %v751
        %v754 = vshrl.u32 %v736, %v752
        %v755 = vor.u32 %v753, %v754
        %v756 = vsub.s32 4294967266, %v751
        %v757 = vadd.s32 %v756, 127
        %v758 = vshll.u32 %v757, 23
        %v759 = vor.u32 4788187, %v758
        %v760 = vand.u32 2147483647, %v759
        %v762 = vcvt.s32.f32 %v755
        %v763 = vmul.f32 %v762, %v760
        %v764 = vxor.u32 %v763, 2147483648
        %v765 = vsel %vm682, %v764, %v763
        %v766 = vsub.s32 4, %v742
        %v767 = vsel %vm682, %v766, %v742
        %v768 = vsel %vm681, %v644, %v765
        %v769 = vsel %vm681, 0, %v767
        %v770 = vcosq.f32.pop %v768
        %v771 = vsinq.f32.pop %v768
        %vm772 = vweird.f32 %v644
        %v773 = vadd.s32 %v769, 3
        %v774 = vand.u32 %v773, 3
        %vm775 = vcmp.lt.s32.totalorder %v774, 2
        %vm776 = vcmp.eq.s32.totalorder %v774, 0
        %v777 = vxor.u32 %v771, 2147483648
        %v778 = vsel %vm776, %v770, %v777
        %vm779 = vcmp.eq.s32.totalorder %v774, 2
        %v780 = vxor.u32 %v770, 2147483648
        %v781 = vsel %vm779, %v780, %v771
        %v782 = vsel %vm775, %v778, %v781
        %v783 = vsel %vm772, nan, %v782
        %v784 = vand.u32 2147483647, %v645
        %vm785 = vcmp.le.f32.partialorder %v784, 0.7853982
        %vm786 = vcmp.lt.s32.totalorder %v645, 0
        %v787 = vand.u32 %v645, 2139095040
        %v788 = vshrl.u32 %v787, 23
        %v789 = vsub.s32 %v788, 127
        %v790 = vand.u32 2147483647, %v645
        %v791 = vand.u32 %v790, 8388607
        %v792 = vor.u32 %v791, 8388608
        %v793 = vsub.s32 0, %v792
        %v794 = vadd.s32 %v789, 1
        %vm795 = vcmp.gt.s32.totalorder %v794, 0
        %v796 = vsel %vm795, %v794, 0
        %v797 = vshrl.u32 %v796, 5
        %v798 = vand.u32 %v796, 31
        %v799 = vsub.s32 32, %v798
        %v800 = vshrl.u32 683565275, %v799
        %v801 = vshll.u32 683565275, %v798
        %v802 = vshrl.u32 2475754826, %v799
        %v803 = vor.u32 %v801, %v802
        %v804 = vshll.u32 2475754826, %v798
        %v805 = vshrl.u32 2131351028, %v799
        %v806 = vor.u32 %v804, %v805
        %v807 = vshll.u32 2131351028, %v798
        %v808 = vshrl.u32 2102212464, %v799
        %v809 = vor.u32 %v807, %v808
        %v810 = vshll.u32 2102212464, %v798
        %v811 = vshrl.u32 920167782, %v799
        %v812 = vor.u32 %v810, %v811
        %v813 = vshll.u32 920167782, %v798
        %v814 = vshrl.u32 1326507024, %v799
        %v815 = vor.u32 %v813, %v814
        %vm816 = vcmp.lt.s32.totalorder %v797, 1
        %vm817 = vcmp.lt.s32.totalorder %v797, 2
        %vm818 = vcmp.lt.s32.totalorder %v797, 3
        %vm819 = vcmp.lt.s32.totalorder %v797, 4
        %v820 = vsel %vm816, %v800, %v803
        %v821 = vsel %vm819, %v809, 2102212464
        %v822 = vsel %vm818, %v806, %v821
        %v823 = vsel %vm817, %v820, %v822
        %v824 = vsel %vm816, %v803, %v806
        %v825 = vsel %vm819, %v812, 920167782
        %v826 = vsel %vm818, %v809, %v825
        %v827 = vsel %vm817, %v824, %v826
        %v828 = vsel %vm816, %v806, %v809
        %v829 = vsel %vm819, %v815, 1326507024
        %v830 = vsel %vm818, %v812, %v829
        %v831 = vsel %vm817, %v828, %v830
        %v832 = vshll.u32 %v792, 8
        %v833 = vmul.u32.u64.compose %v832, %v831
        %v834 = vextract.low.u32 %v833
        %v835 = vextract.high.u32 %v833
        %v836 = vmul.u32.u64.compose %v832, %v827
        %v837 = vextract.low.u32 %v836
        %v838 = vextract.high.u32 %v836
        %v839 = vmul.u32 %v832, %v823
        %v840 = vadd.s32 %v835, %v837
        %vm841 = vc.u32 %v835, %v837
        %v842 = vadd.s32 %v838, 1
        %v843 = vsel %vm841, %v842, %v838
        %v844 = vadd.s32 %v839, %v843
        %v845 = vadd.s32 %v844, 536870912
        %v846 = vshrl.u32 %v845, 30
        %v847 = vshll.u32 %v846, 30
        %v848 = vsub.s32 %v844, %v847
        %vm849 = vcmp.lt.s32.totalorder %v848, 0
        %v850 = vsub.s32 0, %v848
        %v851 = vsel %vm849, %v850, %v848
        %v852 = vclz %v851
        %v853 = vsub.s32 %v852, 2
        %vm854 = vcmp.gt.s32.totalorder 0, %v853
        %v855 = vsel %vm854, 0, %v853
        %v856 = vsub.s32 32, %v855
        %v857 = vshll.u32 %v848, %v855
        %v858 = vshrl.u32 %v840, %v856
        %v859 = vor.u32 %v857, %v858
        %v860 = vsub.s32 4294967266, %v855
        %v861 = vadd.s32 %v860, 127
        %v862 = vshll.u32 %v861, 23
        %v863 = vor.u32 4788187, %v862
        %v864 = vand.u32 2147483647, %v863
        %v866 = vcvt.s32.f32 %v859
        %v867 = vmul.f32 %v866, %v864
        %v868 = vxor.u32 %v867, 2147483648
        %v869 = vsel %vm786, %v868, %v867
        %v870 = vsub.s32 4, %v846
        %v871 = vsel %vm786, %v870, %v846
        %v872 = vsel %vm785, %v645, %v869
        %v873 = vsel %vm785, 0, %v871
        %v874 = vcosq.f32.pop %v872
        %v875 = vsinq.f32.pop %v872
        %vm876 = vweird.f32 %v645
        %v877 = vadd.s32 %v873, 3
        %v878 = vand.u32 %v877, 3
        %vm879 = vcmp.lt.s32.totalorder %v878, 2
        %vm880 = vcmp.eq.s32.totalorder %v878, 0
        %v881 = vxor.u32 %v875, 2147483648
        %v882 = vsel %vm880, %v874, %v881
        %vm883 = vcmp.eq.s32.totalorder %v878, 2
        %v884 = vxor.u32 %v874, 2147483648
        %v885 = vsel %vm883, %v884, %v875
        %v886 = vsel %vm879, %v882, %v885
        %v887 = vsel %vm876, nan, %v886
        %v888 = vand.u32 2147483647, %v646
        %vm889 = vcmp.le.f32.partialorder %v888, 0.7853982
        %vm890 = vcmp.lt.s32.totalorder %v646, 0
        %v891 = vand.u32 %v646, 2139095040
        %v892 = vshrl.u32 %v891, 23
        %v893 = vsub.s32 %v892, 127
        %v894 = vand.u32 2147483647, %v646
        %v895 = vand.u32 %v894, 8388607
        %v896 = vor.u32 %v895, 8388608
        %v897 = vsub.s32 0, %v896
        %v898 = vadd.s32 %v893, 1
        %vm899 = vcmp.gt.s32.totalorder %v898, 0
        %v900 = vsel %vm899, %v898, 0
        %v901 = vshrl.u32 %v900, 5
        %v902 = vand.u32 %v900, 31
        %v903 = vsub.s32 32, %v902
        %v904 = vshrl.u32 683565275, %v903
        %v905 = vshll.u32 683565275, %v902
        %v906 = vshrl.u32 2475754826, %v903
        %v907 = vor.u32 %v905, %v906
        %v908 = vshll.u32 2475754826, %v902
        %v909 = vshrl.u32 2131351028, %v903
        %v910 = vor.u32 %v908, %v909
        %v911 = vshll.u32 2131351028, %v902
        %v912 = vshrl.u32 2102212464, %v903
        %v913 = vor.u32 %v911, %v912
        %v914 = vshll.u32 2102212464, %v902
        %v915 = vshrl.u32 920167782, %v903
        %v916 = vor.u32 %v914, %v915
        %v917 = vshll.u32 920167782, %v902
        %v918 = vshrl.u32 1326507024, %v903
        %v919 = vor.u32 %v917, %v918
        %vm920 = vcmp.lt.s32.totalorder %v901, 1
        %vm921 = vcmp.lt.s32.totalorder %v901, 2
        %vm922 = vcmp.lt.s32.totalorder %v901, 3
        %vm923 = vcmp.lt.s32.totalorder %v901, 4
        %v924 = vsel %vm920, %v904, %v907
        %v925 = vsel %vm923, %v913, 2102212464
        %v926 = vsel %vm922, %v910, %v925
        %v927 = vsel %vm921, %v924, %v926
        %v928 = vsel %vm920, %v907, %v910
        %v929 = vsel %vm923, %v916, 920167782
        %v930 = vsel %vm922, %v913, %v929
        %v931 = vsel %vm921, %v928, %v930
        %v932 = vsel %vm920, %v910, %v913
        %v933 = vsel %vm923, %v919, 1326507024
        %v934 = vsel %vm922, %v916, %v933
        %v935 = vsel %vm921, %v932, %v934
        %v936 = vshll.u32 %v896, 8
        %v937 = vmul.u32.u64.compose %v936, %v935
        %v938 = vextract.low.u32 %v937
        %v939 = vextract.high.u32 %v937
        %v940 = vmul.u32.u64.compose %v936, %v931
        %v941 = vextract.low.u32 %v940
        %v942 = vextract.high.u32 %v940
        %v943 = vmul.u32 %v936, %v927
        %v944 = vadd.s32 %v939, %v941
        %vm945 = vc.u32 %v939, %v941
        %v946 = vadd.s32 %v942, 1
        %v947 = vsel %vm945, %v946, %v942
        %v948 = vadd.s32 %v943, %v947
        %v949 = vadd.s32 %v948, 536870912
        %v950 = vshrl.u32 %v949, 30
        %v951 = vshll.u32 %v950, 30
        %v952 = vsub.s32 %v948, %v951
        %vm953 = vcmp.lt.s32.totalorder %v952, 0
        %v954 = vsub.s32 0, %v952
        %v955 = vsel %vm953, %v954, %v952
        %v956 = vclz %v955
        %v957 = vsub.s32 %v956, 2
        %vm958 = vcmp.gt.s32.totalorder 0, %v957
        %v959 = vsel %vm958, 0, %v957
        %v960 = vsub.s32 32, %v959
        %v961 = vshll.u32 %v952, %v959
        %v962 = vshrl.u32 %v944, %v960
        %v963 = vor.u32 %v961, %v962
        %v964 = vsub.s32 4294967266, %v959
        %v965 = vadd.s32 %v964, 127
        %v966 = vshll.u32 %v965, 23
        %v967 = vor.u32 4788187, %v966
        %v968 = vand.u32 2147483647, %v967
        %v970 = vcvt.s32.f32 %v963
        %v971 = vmul.f32 %v970, %v968
        %v972 = vxor.u32 %v971, 2147483648
        %v973 = vsel %vm890, %v972, %v971
        %v974 = vsub.s32 4, %v950
        %v975 = vsel %vm890, %v974, %v950
        %v976 = vsel %vm889, %v646, %v973
        %v977 = vsel %vm889, 0, %v975
        %v978 = vcosq.f32.pop %v976
        %v979 = vsinq.f32.pop %v976
        %vm980 = vweird.f32 %v646
        %v981 = vadd.s32 %v977, 3
        %v982 = vand.u32 %v981, 3
        %vm983 = vcmp.lt.s32.totalorder %v982, 2
        %vm984 = vcmp.eq.s32.totalorder %v982, 0
        %v985 = vxor.u32 %v979, 2147483648
        %v986 = vsel %vm984, %v978, %v985
        %vm987 = vcmp.eq.s32.totalorder %v982, 2
        %v988 = vxor.u32 %v978, 2147483648
        %v989 = vsel %vm987, %v988, %v979
        %v990 = vsel %vm983, %v986, %v989
        %v991 = vsel %vm980, nan, %v990
        %v992 = vand.u32 2147483647, %v647
        %vm993 = vcmp.le.f32.partialorder %v992, 0.7853982
        %vm994 = vcmp.lt.s32.totalorder %v647, 0
        %v995 = vand.u32 %v647, 2139095040
        %v996 = vshrl.u32 %v995, 23
        %v997 = vsub.s32 %v996, 127
        %v998 = vand.u32 2147483647, %v647
        %v999 = vand.u32 %v998, 8388607
        %v1000 = vor.u32 %v999, 8388608
        %v1001 = vsub.s32 0, %v1000
        %v1002 = vadd.s32 %v997, 1
        %vm1003 = vcmp.gt.s32.totalorder %v1002, 0
        %v1004 = vsel %vm1003, %v1002, 0
        %v1005 = vshrl.u32 %v1004, 5
        %v1006 = vand.u32 %v1004, 31
        %v1007 = vsub.s32 32, %v1006
        %v1008 = vshrl.u32 683565275, %v1007
        %v1009 = vshll.u32 683565275, %v1006
        %v1010 = vshrl.u32 2475754826, %v1007
        %v1011 = vor.u32 %v1009, %v1010
        %v1012 = vshll.u32 2475754826, %v1006
        %v1013 = vshrl.u32 2131351028, %v1007
        %v1014 = vor.u32 %v1012, %v1013
        %v1015 = vshll.u32 2131351028, %v1006
        %v1016 = vshrl.u32 2102212464, %v1007
        %v1017 = vor.u32 %v1015, %v1016
        %v1018 = vshll.u32 2102212464, %v1006
        %v1019 = vshrl.u32 920167782, %v1007
        %v1020 = vor.u32 %v1018, %v1019
        %v1021 = vshll.u32 920167782, %v1006
        %v1022 = vshrl.u32 1326507024, %v1007
        %v1023 = vor.u32 %v1021, %v1022
        %vm1024 = vcmp.lt.s32.totalorder %v1005, 1
        %vm1025 = vcmp.lt.s32.totalorder %v1005, 2
        %vm1026 = vcmp.lt.s32.totalorder %v1005, 3
        %vm1027 = vcmp.lt.s32.totalorder %v1005, 4
        %v1028 = vsel %vm1024, %v1008, %v1011
        %v1029 = vsel %vm1027, %v1017, 2102212464
        %v1030 = vsel %vm1026, %v1014, %v1029
        %v1031 = vsel %vm1025, %v1028, %v1030
        %v1032 = vsel %vm1024, %v1011, %v1014
        %v1033 = vsel %vm1027, %v1020, 920167782
        %v1034 = vsel %vm1026, %v1017, %v1033
        %v1035 = vsel %vm1025, %v1032, %v1034
        %v1036 = vsel %vm1024, %v1014, %v1017
        %v1037 = vsel %vm1027, %v1023, 1326507024
        %v1038 = vsel %vm1026, %v1020, %v1037
        %v1039 = vsel %vm1025, %v1036, %v1038
        %v1040 = vshll.u32 %v1000, 8
        %v1041 = vmul.u32.u64.compose %v1040, %v1039
        %v1042 = vextract.low.u32 %v1041
        %v1043 = vextract.high.u32 %v1041
        %v1044 = vmul.u32.u64.compose %v1040, %v1035
        %v1045 = vextract.low.u32 %v1044
        %v1046 = vextract.high.u32 %v1044
        %v1047 = vmul.u32 %v1040, %v1031
        %v1048 = vadd.s32 %v1043, %v1045
        %vm1049 = vc.u32 %v1043, %v1045
        %v1050 = vadd.s32 %v1046, 1
        %v1051 = vsel %vm1049, %v1050, %v1046
        %v1052 = vadd.s32 %v1047, %v1051
        %v1053 = vadd.s32 %v1052, 536870912
        %v1054 = vshrl.u32 %v1053, 30
        %v1055 = vshll.u32 %v1054, 30
        %v1056 = vsub.s32 %v1052, %v1055
        %vm1057 = vcmp.lt.s32.totalorder %v1056, 0
        %v1058 = vsub.s32 0, %v1056
        %v1059 = vsel %vm1057, %v1058, %v1056
        %v1060 = vclz %v1059
        %v1061 = vsub.s32 %v1060, 2
        %vm1062 = vcmp.gt.s32.totalorder 0, %v1061
        %v1063 = vsel %vm1062, 0, %v1061
        %v1064 = vsub.s32 32, %v1063
        %v1065 = vshll.u32 %v1056, %v1063
        %v1066 = vshrl.u32 %v1048, %v1064
        %v1067 = vor.u32 %v1065, %v1066
        %v1068 = vsub.s32 4294967266, %v1063
        %v1069 = vadd.s32 %v1068, 127
        %v1070 = vshll.u32 %v1069, 23
        %v1071 = vor.u32 4788187, %v1070
        %v1072 = vand.u32 2147483647, %v1071
        %v1074 = vcvt.s32.f32 %v1067
        %v1075 = vmul.f32 %v1074, %v1072
        %v1076 = vxor.u32 %v1075, 2147483648
        %v1077 = vsel %vm994, %v1076, %v1075
        %v1078 = vsub.s32 4, %v1054
        %v1079 = vsel %vm994, %v1078, %v1054
        %v1080 = vsel %vm993, %v647, %v1077
        %v1081 = vsel %vm993, 0, %v1079
        %v1082 = vcosq.f32.pop %v1080
        %v1083 = vsinq.f32.pop %v1080
        %vm1084 = vweird.f32 %v647
        %v1085 = vadd.s32 %v1081, 3
        %v1086 = vand.u32 %v1085, 3
        %vm1087 = vcmp.lt.s32.totalorder %v1086, 2
        %vm1088 = vcmp.eq.s32.totalorder %v1086, 0
        %v1089 = vxor.u32 %v1083, 2147483648
        %v1090 = vsel %vm1088, %v1082, %v1089
        %vm1091 = vcmp.eq.s32.totalorder %v1086, 2
        %v1092 = vxor.u32 %v1082, 2147483648
        %v1093 = vsel %vm1091, %v1092, %v1083
        %v1094 = vsel %vm1087, %v1090, %v1093
        %v1095 = vsel %vm1084, nan, %v1094
        %v1096 = vand.u32 2147483647, %v648
        %vm1097 = vcmp.le.f32.partialorder %v1096, 0.7853982
        %vm1098 = vcmp.lt.s32.totalorder %v648, 0
        %v1099 = vand.u32 %v648, 2139095040
        %v1100 = vshrl.u32 %v1099, 23
        %v1101 = vsub.s32 %v1100, 127
        %v1102 = vand.u32 2147483647, %v648
        %v1103 = vand.u32 %v1102, 8388607
        %v1104 = vor.u32 %v1103, 8388608
        %v1105 = vsub.s32 0, %v1104
        %v1106 = vadd.s32 %v1101, 1
        %vm1107 = vcmp.gt.s32.totalorder %v1106, 0
        %v1108 = vsel %vm1107, %v1106, 0
        %v1109 = vshrl.u32 %v1108, 5
        %v1110 = vand.u32 %v1108, 31
        %v1111 = vsub.s32 32, %v1110
        %v1112 = vshrl.u32 683565275, %v1111
        %v1113 = vshll.u32 683565275, %v1110
        %v1114 = vshrl.u32 2475754826, %v1111
        %v1115 = vor.u32 %v1113, %v1114
        %v1116 = vshll.u32 2475754826, %v1110
        %v1117 = vshrl.u32 2131351028, %v1111
        %v1118 = vor.u32 %v1116, %v1117
        %v1119 = vshll.u32 2131351028, %v1110
        %v1120 = vshrl.u32 2102212464, %v1111
        %v1121 = vor.u32 %v1119, %v1120
        %v1122 = vshll.u32 2102212464, %v1110
        %v1123 = vshrl.u32 920167782, %v1111
        %v1124 = vor.u32 %v1122, %v1123
        %v1125 = vshll.u32 920167782, %v1110
        %v1126 = vshrl.u32 1326507024, %v1111
        %v1127 = vor.u32 %v1125, %v1126
        %vm1128 = vcmp.lt.s32.totalorder %v1109, 1
        %vm1129 = vcmp.lt.s32.totalorder %v1109, 2
        %vm1130 = vcmp.lt.s32.totalorder %v1109, 3
        %vm1131 = vcmp.lt.s32.totalorder %v1109, 4
        %v1132 = vsel %vm1128, %v1112, %v1115
        %v1133 = vsel %vm1131, %v1121, 2102212464
        %v1134 = vsel %vm1130, %v1118, %v1133
        %v1135 = vsel %vm1129, %v1132, %v1134
        %v1136 = vsel %vm1128, %v1115, %v1118
        %v1137 = vsel %vm1131, %v1124, 920167782
        %v1138 = vsel %vm1130, %v1121, %v1137
        %v1139 = vsel %vm1129, %v1136, %v1138
        %v1140 = vsel %vm1128, %v1118, %v1121
        %v1141 = vsel %vm1131, %v1127, 1326507024
        %v1142 = vsel %vm1130, %v1124, %v1141
        %v1143 = vsel %vm1129, %v1140, %v1142
        %v1144 = vshll.u32 %v1104, 8
        %v1145 = vmul.u32.u64.compose %v1144, %v1143
        %v1146 = vextract.low.u32 %v1145
        %v1147 = vextract.high.u32 %v1145
        %v1148 = vmul.u32.u64.compose %v1144, %v1139
        %v1149 = vextract.low.u32 %v1148
        %v1150 = vextract.high.u32 %v1148
        %v1151 = vmul.u32 %v1144, %v1135
        %v1152 = vadd.s32 %v1147, %v1149
        %vm1153 = vc.u32 %v1147, %v1149
        %v1154 = vadd.s32 %v1150, 1
        %v1155 = vsel %vm1153, %v1154, %v1150
        %v1156 = vadd.s32 %v1151, %v1155
        %v1157 = vadd.s32 %v1156, 536870912
        %v1158 = vshrl.u32 %v1157, 30
        %v1159 = vshll.u32 %v1158, 30
        %v1160 = vsub.s32 %v1156, %v1159
        %vm1161 = vcmp.lt.s32.totalorder %v1160, 0
        %v1162 = vsub.s32 0, %v1160
        %v1163 = vsel %vm1161, %v1162, %v1160
        %v1164 = vclz %v1163
        %v1165 = vsub.s32 %v1164, 2
        %vm1166 = vcmp.gt.s32.totalorder 0, %v1165
        %v1167 = vsel %vm1166, 0, %v1165
        %v1168 = vsub.s32 32, %v1167
        %v1169 = vshll.u32 %v1160, %v1167
        %v1170 = vshrl.u32 %v1152, %v1168
        %v1171 = vor.u32 %v1169, %v1170
        %v1172 = vsub.s32 4294967266, %v1167
        %v1173 = vadd.s32 %v1172, 127
        %v1174 = vshll.u32 %v1173, 23
        %v1175 = vor.u32 4788187, %v1174
        %v1176 = vand.u32 2147483647, %v1175
        %v1178 = vcvt.s32.f32 %v1171
        %v1179 = vmul.f32 %v1178, %v1176
        %v1180 = vxor.u32 %v1179, 2147483648
        %v1181 = vsel %vm1098, %v1180, %v1179
        %v1182 = vsub.s32 4, %v1158
        %v1183 = vsel %vm1098, %v1182, %v1158
        %v1184 = vsel %vm1097, %v648, %v1181
        %v1185 = vsel %vm1097, 0, %v1183
        %v1186 = vcosq.f32.pop %v1184
        %v1187 = vsinq.f32.pop %v1184
        %vm1188 = vweird.f32 %v648
        %v1189 = vadd.s32 %v1185, 3
        %v1190 = vand.u32 %v1189, 3
        %vm1191 = vcmp.lt.s32.totalorder %v1190, 2
        %vm1192 = vcmp.eq.s32.totalorder %v1190, 0
        %v1193 = vxor.u32 %v1187, 2147483648
        %v1194 = vsel %vm1192, %v1186, %v1193
        %vm1195 = vcmp.eq.s32.totalorder %v1190, 2
        %v1196 = vxor.u32 %v1186, 2147483648
        %v1197 = vsel %vm1195, %v1196, %v1187
        %v1198 = vsel %vm1191, %v1194, %v1197
        %v1199 = vsel %vm1188, nan, %v1198
        %v1200 = vand.u32 2147483647, %v649
        %vm1201 = vcmp.le.f32.partialorder %v1200, 0.7853982
        %vm1202 = vcmp.lt.s32.totalorder %v649, 0
        %v1203 = vand.u32 %v649, 2139095040
        %v1204 = vshrl.u32 %v1203, 23
        %v1205 = vsub.s32 %v1204, 127
        %v1206 = vand.u32 2147483647, %v649
        %v1207 = vand.u32 %v1206, 8388607
        %v1208 = vor.u32 %v1207, 8388608
        %v1209 = vsub.s32 0, %v1208
        %v1210 = vadd.s32 %v1205, 1
        %vm1211 = vcmp.gt.s32.totalorder %v1210, 0
        %v1212 = vsel %vm1211, %v1210, 0
        %v1213 = vshrl.u32 %v1212, 5
        %v1214 = vand.u32 %v1212, 31
        %v1215 = vsub.s32 32, %v1214
        %v1216 = vshrl.u32 683565275, %v1215
        %v1217 = vshll.u32 683565275, %v1214
        %v1218 = vshrl.u32 2475754826, %v1215
        %v1219 = vor.u32 %v1217, %v1218
        %v1220 = vshll.u32 2475754826, %v1214
        %v1221 = vshrl.u32 2131351028, %v1215
        %v1222 = vor.u32 %v1220, %v1221
        %v1223 = vshll.u32 2131351028, %v1214
        %v1224 = vshrl.u32 2102212464, %v1215
        %v1225 = vor.u32 %v1223, %v1224
        %v1226 = vshll.u32 2102212464, %v1214
        %v1227 = vshrl.u32 920167782, %v1215
        %v1228 = vor.u32 %v1226, %v1227
        %v1229 = vshll.u32 920167782, %v1214
        %v1230 = vshrl.u32 1326507024, %v1215
        %v1231 = vor.u32 %v1229, %v1230
        %vm1232 = vcmp.lt.s32.totalorder %v1213, 1
        %vm1233 = vcmp.lt.s32.totalorder %v1213, 2
        %vm1234 = vcmp.lt.s32.totalorder %v1213, 3
        %vm1235 = vcmp.lt.s32.totalorder %v1213, 4
        %v1236 = vsel %vm1232, %v1216, %v1219
        %v1237 = vsel %vm1235, %v1225, 2102212464
        %v1238 = vsel %vm1234, %v1222, %v1237
        %v1239 = vsel %vm1233, %v1236, %v1238
        %v1240 = vsel %vm1232, %v1219, %v1222
        %v1241 = vsel %vm1235, %v1228, 920167782
        %v1242 = vsel %vm1234, %v1225, %v1241
        %v1243 = vsel %vm1233, %v1240, %v1242
        %v1244 = vsel %vm1232, %v1222, %v1225
        %v1245 = vsel %vm1235, %v1231, 1326507024
        %v1246 = vsel %vm1234, %v1228, %v1245
        %v1247 = vsel %vm1233, %v1244, %v1246
        %v1248 = vshll.u32 %v1208, 8
        %v1249 = vmul.u32.u64.compose %v1248, %v1247
        %v1250 = vextract.low.u32 %v1249
        %v1251 = vextract.high.u32 %v1249
        %v1252 = vmul.u32.u64.compose %v1248, %v1243
        %v1253 = vextract.low.u32 %v1252
        %v1254 = vextract.high.u32 %v1252
        %v1255 = vmul.u32 %v1248, %v1239
        %v1256 = vadd.s32 %v1251, %v1253
        %vm1257 = vc.u32 %v1251, %v1253
        %v1258 = vadd.s32 %v1254, 1
        %v1259 = vsel %vm1257, %v1258, %v1254
        %v1260 = vadd.s32 %v1255, %v1259
        %v1261 = vadd.s32 %v1260, 536870912
        %v1262 = vshrl.u32 %v1261, 30
        %v1263 = vshll.u32 %v1262, 30
        %v1264 = vsub.s32 %v1260, %v1263
        %vm1265 = vcmp.lt.s32.totalorder %v1264, 0
        %v1266 = vsub.s32 0, %v1264
        %v1267 = vsel %vm1265, %v1266, %v1264
        %v1268 = vclz %v1267
        %v1269 = vsub.s32 %v1268, 2
        %vm1270 = vcmp.gt.s32.totalorder 0, %v1269
        %v1271 = vsel %vm1270, 0, %v1269
        %v1272 = vsub.s32 32, %v1271
        %v1273 = vshll.u32 %v1264, %v1271
        %v1274 = vshrl.u32 %v1256, %v1272
        %v1275 = vor.u32 %v1273, %v1274
        %v1276 = vsub.s32 4294967266, %v1271
        %v1277 = vadd.s32 %v1276, 127
        %v1278 = vshll.u32 %v1277, 23
        %v1279 = vor.u32 4788187, %v1278
        %v1280 = vand.u32 2147483647, %v1279
        %v1282 = vcvt.s32.f32 %v1275
        %v1283 = vmul.f32 %v1282, %v1280
        %v1284 = vxor.u32 %v1283, 2147483648
        %v1285 = vsel %vm1202, %v1284, %v1283
        %v1286 = vsub.s32 4, %v1262
        %v1287 = vsel %vm1202, %v1286, %v1262
        %v1288 = vsel %vm1201, %v649, %v1285
        %v1289 = vsel %vm1201, 0, %v1287
        %v1290 = vcosq.f32.pop %v1288
        %v1291 = vsinq.f32.pop %v1288
        %vm1292 = vweird.f32 %v649
        %v1293 = vadd.s32 %v1289, 3
        %v1294 = vand.u32 %v1293, 3
        %vm1295 = vcmp.lt.s32.totalorder %v1294, 2
        %vm1296 = vcmp.eq.s32.totalorder %v1294, 0
        %v1297 = vxor.u32 %v1291, 2147483648
        %v1298 = vsel %vm1296, %v1290, %v1297
        %vm1299 = vcmp.eq.s32.totalorder %v1294, 2
        %v1300 = vxor.u32 %v1290, 2147483648
        %v1301 = vsel %vm1299, %v1300, %v1291
        %v1302 = vsel %vm1295, %v1298, %v1301
        %v1303 = vsel %vm1292, nan, %v1302
        %v1304 = vand.u32 2147483647, %v650
        %vm1305 = vcmp.le.f32.partialorder %v1304, 0.7853982
        %vm1306 = vcmp.lt.s32.totalorder %v650, 0
        %v1307 = vand.u32 %v650, 2139095040
        %v1308 = vshrl.u32 %v1307, 23
        %v1309 = vsub.s32 %v1308, 127
        %v1310 = vand.u32 2147483647, %v650
        %v1311 = vand.u32 %v1310, 8388607
        %v1312 = vor.u32 %v1311, 8388608
        %v1313 = vsub.s32 0, %v1312
        %v1314 = vadd.s32 %v1309, 1
        %vm1315 = vcmp.gt.s32.totalorder %v1314, 0
        %v1316 = vsel %vm1315, %v1314, 0
        %v1317 = vshrl.u32 %v1316, 5
        %v1318 = vand.u32 %v1316, 31
        %v1319 = vsub.s32 32, %v1318
        %v1320 = vshrl.u32 683565275, %v1319
        %v1321 = vshll.u32 683565275, %v1318
        %v1322 = vshrl.u32 2475754826, %v1319
        %v1323 = vor.u32 %v1321, %v1322
        %v1324 = vshll.u32 2475754826, %v1318
        %v1325 = vshrl.u32 2131351028, %v1319
        %v1326 = vor.u32 %v1324, %v1325
        %v1327 = vshll.u32 2131351028, %v1318
        %v1328 = vshrl.u32 2102212464, %v1319
        %v1329 = vor.u32 %v1327, %v1328
        %v1330 = vshll.u32 2102212464, %v1318
        %v1331 = vshrl.u32 920167782, %v1319
        %v1332 = vor.u32 %v1330, %v1331
        %v1333 = vshll.u32 920167782, %v1318
        %v1334 = vshrl.u32 1326507024, %v1319
        %v1335 = vor.u32 %v1333, %v1334
        %vm1336 = vcmp.lt.s32.totalorder %v1317, 1
        %vm1337 = vcmp.lt.s32.totalorder %v1317, 2
        %vm1338 = vcmp.lt.s32.totalorder %v1317, 3
        %vm1339 = vcmp.lt.s32.totalorder %v1317, 4
        %v1340 = vsel %vm1336, %v1320, %v1323
        %v1341 = vsel %vm1339, %v1329, 2102212464
        %v1342 = vsel %vm1338, %v1326, %v1341
        %v1343 = vsel %vm1337, %v1340, %v1342
        %v1344 = vsel %vm1336, %v1323, %v1326
        %v1345 = vsel %vm1339, %v1332, 920167782
        %v1346 = vsel %vm1338, %v1329, %v1345
        %v1347 = vsel %vm1337, %v1344, %v1346
        %v1348 = vsel %vm1336, %v1326, %v1329
        %v1349 = vsel %vm1339, %v1335, 1326507024
        %v1350 = vsel %vm1338, %v1332, %v1349
        %v1351 = vsel %vm1337, %v1348, %v1350
        %v1352 = vshll.u32 %v1312, 8
        %v1353 = vmul.u32.u64.compose %v1352, %v1351
        %v1354 = vextract.low.u32 %v1353
        %v1355 = vextract.high.u32 %v1353
        %v1356 = vmul.u32.u64.compose %v1352, %v1347
        %v1357 = vextract.low.u32 %v1356
        %v1358 = vextract.high.u32 %v1356
        %v1359 = vmul.u32 %v1352, %v1343
        %v1360 = vadd.s32 %v1355, %v1357
        %vm1361 = vc.u32 %v1355, %v1357
        %v1362 = vadd.s32 %v1358, 1
        %v1363 = vsel %vm1361, %v1362, %v1358
        %v1364 = vadd.s32 %v1359, %v1363
        %v1365 = vadd.s32 %v1364, 536870912
        %v1366 = vshrl.u32 %v1365, 30
        %v1367 = vshll.u32 %v1366, 30
        %v1368 = vsub.s32 %v1364, %v1367
        %vm1369 = vcmp.lt.s32.totalorder %v1368, 0
        %v1370 = vsub.s32 0, %v1368
        %v1371 = vsel %vm1369, %v1370, %v1368
        %v1372 = vclz %v1371
        %v1373 = vsub.s32 %v1372, 2
        %vm1374 = vcmp.gt.s32.totalorder 0, %v1373
        %v1375 = vsel %vm1374, 0, %v1373
        %v1376 = vsub.s32 32, %v1375
        %v1377 = vshll.u32 %v1368, %v1375
        %v1378 = vshrl.u32 %v1360, %v1376
        %v1379 = vor.u32 %v1377, %v1378
        %v1380 = vsub.s32 4294967266, %v1375
        %v1381 = vadd.s32 %v1380, 127
        %v1382 = vshll.u32 %v1381, 23
        %v1383 = vor.u32 4788187, %v1382
        %v1384 = vand.u32 2147483647, %v1383
        %v1386 = vcvt.s32.f32 %v1379
        %v1387 = vmul.f32 %v1386, %v1384
        %v1388 = vxor.u32 %v1387, 2147483648
        %v1389 = vsel %vm1306, %v1388, %v1387
        %v1390 = vsub.s32 4, %v1366
        %v1391 = vsel %vm1306, %v1390, %v1366
        %v1392 = vsel %vm1305, %v650, %v1389
        %v1393 = vsel %vm1305, 0, %v1391
        %v1394 = vcosq.f32.pop %v1392
        %v1395 = vsinq.f32.pop %v1392
        %vm1396 = vweird.f32 %v650
        %v1397 = vadd.s32 %v1393, 3
        %v1398 = vand.u32 %v1397, 3
        %vm1399 = vcmp.lt.s32.totalorder %v1398, 2
        %vm1400 = vcmp.eq.s32.totalorder %v1398, 0
        %v1401 = vxor.u32 %v1395, 2147483648
        %v1402 = vsel %vm1400, %v1394, %v1401
        %vm1403 = vcmp.eq.s32.totalorder %v1398, 2
        %v1404 = vxor.u32 %v1394, 2147483648
        %v1405 = vsel %vm1403, %v1404, %v1395
        %v1406 = vsel %vm1399, %v1402, %v1405
        %v1407 = vsel %vm1396, nan, %v1406
        %v1408 = vand.u32 2147483647, %v651
        %vm1409 = vcmp.le.f32.partialorder %v1408, 0.7853982
        %vm1410 = vcmp.lt.s32.totalorder %v651, 0
        %v1411 = vand.u32 %v651, 2139095040
        %v1412 = vshrl.u32 %v1411, 23
        %v1413 = vsub.s32 %v1412, 127
        %v1414 = vand.u32 2147483647, %v651
        %v1415 = vand.u32 %v1414, 8388607
        %v1416 = vor.u32 %v1415, 8388608
        %v1417 = vsub.s32 0, %v1416
        %v1418 = vadd.s32 %v1413, 1
        %vm1419 = vcmp.gt.s32.totalorder %v1418, 0
        %v1420 = vsel %vm1419, %v1418, 0
        %v1421 = vshrl.u32 %v1420, 5
        %v1422 = vand.u32 %v1420, 31
        %v1423 = vsub.s32 32, %v1422
        %v1424 = vshrl.u32 683565275, %v1423
        %v1425 = vshll.u32 683565275, %v1422
        %v1426 = vshrl.u32 2475754826, %v1423
        %v1427 = vor.u32 %v1425, %v1426
        %v1428 = vshll.u32 2475754826, %v1422
        %v1429 = vshrl.u32 2131351028, %v1423
        %v1430 = vor.u32 %v1428, %v1429
        %v1431 = vshll.u32 2131351028, %v1422
        %v1432 = vshrl.u32 2102212464, %v1423
        %v1433 = vor.u32 %v1431, %v1432
        %v1434 = vshll.u32 2102212464, %v1422
        %v1435 = vshrl.u32 920167782, %v1423
        %v1436 = vor.u32 %v1434, %v1435
        %v1437 = vshll.u32 920167782, %v1422
        %v1438 = vshrl.u32 1326507024, %v1423
        %v1439 = vor.u32 %v1437, %v1438
        %vm1440 = vcmp.lt.s32.totalorder %v1421, 1
        %vm1441 = vcmp.lt.s32.totalorder %v1421, 2
        %vm1442 = vcmp.lt.s32.totalorder %v1421, 3
        %vm1443 = vcmp.lt.s32.totalorder %v1421, 4
        %v1444 = vsel %vm1440, %v1424, %v1427
        %v1445 = vsel %vm1443, %v1433, 2102212464
        %v1446 = vsel %vm1442, %v1430, %v1445
        %v1447 = vsel %vm1441, %v1444, %v1446
        %v1448 = vsel %vm1440, %v1427, %v1430
        %v1449 = vsel %vm1443, %v1436, 920167782
        %v1450 = vsel %vm1442, %v1433, %v1449
        %v1451 = vsel %vm1441, %v1448, %v1450
        %v1452 = vsel %vm1440, %v1430, %v1433
        %v1453 = vsel %vm1443, %v1439, 1326507024
        %v1454 = vsel %vm1442, %v1436, %v1453
        %v1455 = vsel %vm1441, %v1452, %v1454
        %v1456 = vshll.u32 %v1416, 8
        %v1457 = vmul.u32.u64.compose %v1456, %v1455
        %v1458 = vextract.low.u32 %v1457
        %v1459 = vextract.high.u32 %v1457
        %v1460 = vmul.u32.u64.compose %v1456, %v1451
        %v1461 = vextract.low.u32 %v1460
        %v1462 = vextract.high.u32 %v1460
        %v1463 = vmul.u32 %v1456, %v1447
        %v1464 = vadd.s32 %v1459, %v1461
        %vm1465 = vc.u32 %v1459, %v1461
        %v1466 = vadd.s32 %v1462, 1
        %v1467 = vsel %vm1465, %v1466, %v1462
        %v1468 = vadd.s32 %v1463, %v1467
        %v1469 = vadd.s32 %v1468, 536870912
        %v1470 = vshrl.u32 %v1469, 30
        %v1471 = vshll.u32 %v1470, 30
        %v1472 = vsub.s32 %v1468, %v1471
        %vm1473 = vcmp.lt.s32.totalorder %v1472, 0
        %v1474 = vsub.s32 0, %v1472
        %v1475 = vsel %vm1473, %v1474, %v1472
        %v1476 = vclz %v1475
        %v1477 = vsub.s32 %v1476, 2
        %vm1478 = vcmp.gt.s32.totalorder 0, %v1477
        %v1479 = vsel %vm1478, 0, %v1477
        %v1480 = vsub.s32 32, %v1479
        %v1481 = vshll.u32 %v1472, %v1479
        %v1482 = vshrl.u32 %v1464, %v1480
        %v1483 = vor.u32 %v1481, %v1482
        %v1484 = vsub.s32 4294967266, %v1479
        %v1485 = vadd.s32 %v1484, 127
        %v1486 = vshll.u32 %v1485, 23
        %v1487 = vor.u32 4788187, %v1486
        %v1488 = vand.u32 2147483647, %v1487
        %v1490 = vcvt.s32.f32 %v1483
        %v1491 = vmul.f32 %v1490, %v1488
        %v1492 = vxor.u32 %v1491, 2147483648
        %v1493 = vsel %vm1410, %v1492, %v1491
        %v1494 = vsub.s32 4, %v1470
        %v1495 = vsel %vm1410, %v1494, %v1470
        %v1496 = vsel %vm1409, %v651, %v1493
        %v1497 = vsel %vm1409, 0, %v1495
        %v1498 = vcosq.f32.pop %v1496
        %v1499 = vsinq.f32.pop %v1496
        %vm1500 = vweird.f32 %v651
        %v1501 = vadd.s32 %v1497, 3
        %v1502 = vand.u32 %v1501, 3
        %vm1503 = vcmp.lt.s32.totalorder %v1502, 2
        %vm1504 = vcmp.eq.s32.totalorder %v1502, 0
        %v1505 = vxor.u32 %v1499, 2147483648
        %v1506 = vsel %vm1504, %v1498, %v1505
        %vm1507 = vcmp.eq.s32.totalorder %v1502, 2
        %v1508 = vxor.u32 %v1498, 2147483648
        %v1509 = vsel %vm1507, %v1508, %v1499
        %v1510 = vsel %vm1503, %v1506, %v1509
        %v1511 = vsel %vm1500, nan, %v1510
        %v1512 = vand.u32 2147483647, %v652
        %vm1513 = vcmp.le.f32.partialorder %v1512, 0.7853982
        %vm1514 = vcmp.lt.s32.totalorder %v652, 0
        %v1515 = vand.u32 %v652, 2139095040
        %v1516 = vshrl.u32 %v1515, 23
        %v1517 = vsub.s32 %v1516, 127
        %v1518 = vand.u32 2147483647, %v652
        %v1519 = vand.u32 %v1518, 8388607
        %v1520 = vor.u32 %v1519, 8388608
        %v1521 = vsub.s32 0, %v1520
        %v1522 = vadd.s32 %v1517, 1
        %vm1523 = vcmp.gt.s32.totalorder %v1522, 0
        %v1524 = vsel %vm1523, %v1522, 0
        %v1525 = vshrl.u32 %v1524, 5
        %v1526 = vand.u32 %v1524, 31
        %v1527 = vsub.s32 32, %v1526
        %v1528 = vshrl.u32 683565275, %v1527
        %v1529 = vshll.u32 683565275, %v1526
        %v1530 = vshrl.u32 2475754826, %v1527
        %v1531 = vor.u32 %v1529, %v1530
        %v1532 = vshll.u32 2475754826, %v1526
        %v1533 = vshrl.u32 2131351028, %v1527
        %v1534 = vor.u32 %v1532, %v1533
        %v1535 = vshll.u32 2131351028, %v1526
        %v1536 = vshrl.u32 2102212464, %v1527
        %v1537 = vor.u32 %v1535, %v1536
        %v1538 = vshll.u32 2102212464, %v1526
        %v1539 = vshrl.u32 920167782, %v1527
        %v1540 = vor.u32 %v1538, %v1539
        %v1541 = vshll.u32 920167782, %v1526
        %v1542 = vshrl.u32 1326507024, %v1527
        %v1543 = vor.u32 %v1541, %v1542
        %vm1544 = vcmp.lt.s32.totalorder %v1525, 1
        %vm1545 = vcmp.lt.s32.totalorder %v1525, 2
        %vm1546 = vcmp.lt.s32.totalorder %v1525, 3
        %vm1547 = vcmp.lt.s32.totalorder %v1525, 4
        %v1548 = vsel %vm1544, %v1528, %v1531
        %v1549 = vsel %vm1547, %v1537, 2102212464
        %v1550 = vsel %vm1546, %v1534, %v1549
        %v1551 = vsel %vm1545, %v1548, %v1550
        %v1552 = vsel %vm1544, %v1531, %v1534
        %v1553 = vsel %vm1547, %v1540, 920167782
        %v1554 = vsel %vm1546, %v1537, %v1553
        %v1555 = vsel %vm1545, %v1552, %v1554
        %v1556 = vsel %vm1544, %v1534, %v1537
        %v1557 = vsel %vm1547, %v1543, 1326507024
        %v1558 = vsel %vm1546, %v1540, %v1557
        %v1559 = vsel %vm1545, %v1556, %v1558
        %v1560 = vshll.u32 %v1520, 8
        %v1561 = vmul.u32.u64.compose %v1560, %v1559
        %v1562 = vextract.low.u32 %v1561
        %v1563 = vextract.high.u32 %v1561
        %v1564 = vmul.u32.u64.compose %v1560, %v1555
        %v1565 = vextract.low.u32 %v1564
        %v1566 = vextract.high.u32 %v1564
        %v1567 = vmul.u32 %v1560, %v1551
        %v1568 = vadd.s32 %v1563, %v1565
        %vm1569 = vc.u32 %v1563, %v1565
        %v1570 = vadd.s32 %v1566, 1
        %v1571 = vsel %vm1569, %v1570, %v1566
        %v1572 = vadd.s32 %v1567, %v1571
        %v1573 = vadd.s32 %v1572, 536870912
        %v1574 = vshrl.u32 %v1573, 30
        %v1575 = vshll.u32 %v1574, 30
        %v1576 = vsub.s32 %v1572, %v1575
        %vm1577 = vcmp.lt.s32.totalorder %v1576, 0
        %v1578 = vsub.s32 0, %v1576
        %v1579 = vsel %vm1577, %v1578, %v1576
        %v1580 = vclz %v1579
        %v1581 = vsub.s32 %v1580, 2
        %vm1582 = vcmp.gt.s32.totalorder 0, %v1581
        %v1583 = vsel %vm1582, 0, %v1581
        %v1584 = vsub.s32 32, %v1583
        %v1585 = vshll.u32 %v1576, %v1583
        %v1586 = vshrl.u32 %v1568, %v1584
        %v1587 = vor.u32 %v1585, %v1586
        %v1588 = vsub.s32 4294967266, %v1583
        %v1589 = vadd.s32 %v1588, 127
        %v1590 = vshll.u32 %v1589, 23
        %v1591 = vor.u32 4788187, %v1590
        %v1592 = vand.u32 2147483647, %v1591
        %v1594 = vcvt.s32.f32 %v1587
        %v1595 = vmul.f32 %v1594, %v1592
        %v1596 = vxor.u32 %v1595, 2147483648
        %v1597 = vsel %vm1514, %v1596, %v1595
        %v1598 = vsub.s32 4, %v1574
        %v1599 = vsel %vm1514, %v1598, %v1574
        %v1600 = vsel %vm1513, %v652, %v1597
        %v1601 = vsel %vm1513, 0, %v1599
        %v1602 = vcosq.f32.pop %v1600
        %v1603 = vsinq.f32.pop %v1600
        %vm1604 = vweird.f32 %v652
        %v1605 = vadd.s32 %v1601, 3
        %v1606 = vand.u32 %v1605, 3
        %vm1607 = vcmp.lt.s32.totalorder %v1606, 2
        %vm1608 = vcmp.eq.s32.totalorder %v1606, 0
        %v1609 = vxor.u32 %v1603, 2147483648
        %v1610 = vsel %vm1608, %v1602, %v1609
        %vm1611 = vcmp.eq.s32.totalorder %v1606, 2
        %v1612 = vxor.u32 %v1602, 2147483648
        %v1613 = vsel %vm1611, %v1612, %v1603
        %v1614 = vsel %vm1607, %v1610, %v1613
        %v1615 = vsel %vm1604, nan, %v1614
        %v1616 = vand.u32 2147483647, %v653
        %vm1617 = vcmp.le.f32.partialorder %v1616, 0.7853982
        %vm1618 = vcmp.lt.s32.totalorder %v653, 0
        %v1619 = vand.u32 %v653, 2139095040
        %v1620 = vshrl.u32 %v1619, 23
        %v1621 = vsub.s32 %v1620, 127
        %v1622 = vand.u32 2147483647, %v653
        %v1623 = vand.u32 %v1622, 8388607
        %v1624 = vor.u32 %v1623, 8388608
        %v1625 = vsub.s32 0, %v1624
        %v1626 = vadd.s32 %v1621, 1
        %vm1627 = vcmp.gt.s32.totalorder %v1626, 0
        %v1628 = vsel %vm1627, %v1626, 0
        %v1629 = vshrl.u32 %v1628, 5
        %v1630 = vand.u32 %v1628, 31
        %v1631 = vsub.s32 32, %v1630
        %v1632 = vshrl.u32 683565275, %v1631
        %v1633 = vshll.u32 683565275, %v1630
        %v1634 = vshrl.u32 2475754826, %v1631
        %v1635 = vor.u32 %v1633, %v1634
        %v1636 = vshll.u32 2475754826, %v1630
        %v1637 = vshrl.u32 2131351028, %v1631
        %v1638 = vor.u32 %v1636, %v1637
        %v1639 = vshll.u32 2131351028, %v1630
        %v1640 = vshrl.u32 2102212464, %v1631
        %v1641 = vor.u32 %v1639, %v1640
        %v1642 = vshll.u32 2102212464, %v1630
        %v1643 = vshrl.u32 920167782, %v1631
        %v1644 = vor.u32 %v1642, %v1643
        %v1645 = vshll.u32 920167782, %v1630
        %v1646 = vshrl.u32 1326507024, %v1631
        %v1647 = vor.u32 %v1645, %v1646
        %vm1648 = vcmp.lt.s32.totalorder %v1629, 1
        %vm1649 = vcmp.lt.s32.totalorder %v1629, 2
        %vm1650 = vcmp.lt.s32.totalorder %v1629, 3
        %vm1651 = vcmp.lt.s32.totalorder %v1629, 4
        %v1652 = vsel %vm1648, %v1632, %v1635
        %v1653 = vsel %vm1651, %v1641, 2102212464
        %v1654 = vsel %vm1650, %v1638, %v1653
        %v1655 = vsel %vm1649, %v1652, %v1654
        %v1656 = vsel %vm1648, %v1635, %v1638
        %v1657 = vsel %vm1651, %v1644, 920167782
        %v1658 = vsel %vm1650, %v1641, %v1657
        %v1659 = vsel %vm1649, %v1656, %v1658
        %v1660 = vsel %vm1648, %v1638, %v1641
        %v1661 = vsel %vm1651, %v1647, 1326507024
        %v1662 = vsel %vm1650, %v1644, %v1661
        %v1663 = vsel %vm1649, %v1660, %v1662
        %v1664 = vshll.u32 %v1624, 8
        %v1665 = vmul.u32.u64.compose %v1664, %v1663
        %v1666 = vextract.low.u32 %v1665
        %v1667 = vextract.high.u32 %v1665
        %v1668 = vmul.u32.u64.compose %v1664, %v1659
        %v1669 = vextract.low.u32 %v1668
        %v1670 = vextract.high.u32 %v1668
        %v1671 = vmul.u32 %v1664, %v1655
        %v1672 = vadd.s32 %v1667, %v1669
        %vm1673 = vc.u32 %v1667, %v1669
        %v1674 = vadd.s32 %v1670, 1
        %v1675 = vsel %vm1673, %v1674, %v1670
        %v1676 = vadd.s32 %v1671, %v1675
        %v1677 = vadd.s32 %v1676, 536870912
        %v1678 = vshrl.u32 %v1677, 30
        %v1679 = vshll.u32 %v1678, 30
        %v1680 = vsub.s32 %v1676, %v1679
        %vm1681 = vcmp.lt.s32.totalorder %v1680, 0
        %v1682 = vsub.s32 0, %v1680
        %v1683 = vsel %vm1681, %v1682, %v1680
        %v1684 = vclz %v1683
        %v1685 = vsub.s32 %v1684, 2
        %vm1686 = vcmp.gt.s32.totalorder 0, %v1685
        %v1687 = vsel %vm1686, 0, %v1685
        %v1688 = vsub.s32 32, %v1687
        %v1689 = vshll.u32 %v1680, %v1687
        %v1690 = vshrl.u32 %v1672, %v1688
        %v1691 = vor.u32 %v1689, %v1690
        %v1692 = vsub.s32 4294967266, %v1687
        %v1693 = vadd.s32 %v1692, 127
        %v1694 = vshll.u32 %v1693, 23
        %v1695 = vor.u32 4788187, %v1694
        %v1696 = vand.u32 2147483647, %v1695
        %v1698 = vcvt.s32.f32 %v1691
        %v1699 = vmul.f32 %v1698, %v1696
        %v1700 = vxor.u32 %v1699, 2147483648
        %v1701 = vsel %vm1618, %v1700, %v1699
        %v1702 = vsub.s32 4, %v1678
        %v1703 = vsel %vm1618, %v1702, %v1678
        %v1704 = vsel %vm1617, %v653, %v1701
        %v1705 = vsel %vm1617, 0, %v1703
        %v1706 = vcosq.f32.pop %v1704
        %v1707 = vsinq.f32.pop %v1704
        %vm1708 = vweird.f32 %v653
        %v1709 = vadd.s32 %v1705, 3
        %v1710 = vand.u32 %v1709, 3
        %vm1711 = vcmp.lt.s32.totalorder %v1710, 2
        %vm1712 = vcmp.eq.s32.totalorder %v1710, 0
        %v1713 = vxor.u32 %v1707, 2147483648
        %v1714 = vsel %vm1712, %v1706, %v1713
        %vm1715 = vcmp.eq.s32.totalorder %v1710, 2
        %v1716 = vxor.u32 %v1706, 2147483648
        %v1717 = vsel %vm1715, %v1716, %v1707
        %v1718 = vsel %vm1711, %v1714, %v1717
        %v1719 = vsel %vm1708, nan, %v1718
        %v1720 = vand.u32 2147483647, %v654
        %vm1721 = vcmp.le.f32.partialorder %v1720, 0.7853982
        %vm1722 = vcmp.lt.s32.totalorder %v654, 0
        %v1723 = vand.u32 %v654, 2139095040
        %v1724 = vshrl.u32 %v1723, 23
        %v1725 = vsub.s32 %v1724, 127
        %v1726 = vand.u32 2147483647, %v654
        %v1727 = vand.u32 %v1726, 8388607
        %v1728 = vor.u32 %v1727, 8388608
        %v1729 = vsub.s32 0, %v1728
        %v1730 = vadd.s32 %v1725, 1
        %vm1731 = vcmp.gt.s32.totalorder %v1730, 0
        %v1732 = vsel %vm1731, %v1730, 0
        %v1733 = vshrl.u32 %v1732, 5
        %v1734 = vand.u32 %v1732, 31
        %v1735 = vsub.s32 32, %v1734
        %v1736 = vshrl.u32 683565275, %v1735
        %v1737 = vshll.u32 683565275, %v1734
        %v1738 = vshrl.u32 2475754826, %v1735
        %v1739 = vor.u32 %v1737, %v1738
        %v1740 = vshll.u32 2475754826, %v1734
        %v1741 = vshrl.u32 2131351028, %v1735
        %v1742 = vor.u32 %v1740, %v1741
        %v1743 = vshll.u32 2131351028, %v1734
        %v1744 = vshrl.u32 2102212464, %v1735
        %v1745 = vor.u32 %v1743, %v1744
        %v1746 = vshll.u32 2102212464, %v1734
        %v1747 = vshrl.u32 920167782, %v1735
        %v1748 = vor.u32 %v1746, %v1747
        %v1749 = vshll.u32 920167782, %v1734
        %v1750 = vshrl.u32 1326507024, %v1735
        %v1751 = vor.u32 %v1749, %v1750
        %vm1752 = vcmp.lt.s32.totalorder %v1733, 1
        %vm1753 = vcmp.lt.s32.totalorder %v1733, 2
        %vm1754 = vcmp.lt.s32.totalorder %v1733, 3
        %vm1755 = vcmp.lt.s32.totalorder %v1733, 4
        %v1756 = vsel %vm1752, %v1736, %v1739
        %v1757 = vsel %vm1755, %v1745, 2102212464
        %v1758 = vsel %vm1754, %v1742, %v1757
        %v1759 = vsel %vm1753, %v1756, %v1758
        %v1760 = vsel %vm1752, %v1739, %v1742
        %v1761 = vsel %vm1755, %v1748, 920167782
        %v1762 = vsel %vm1754, %v1745, %v1761
        %v1763 = vsel %vm1753, %v1760, %v1762
        %v1764 = vsel %vm1752, %v1742, %v1745
        %v1765 = vsel %vm1755, %v1751, 1326507024
        %v1766 = vsel %vm1754, %v1748, %v1765
        %v1767 = vsel %vm1753, %v1764, %v1766
        %v1768 = vshll.u32 %v1728, 8
        %v1769 = vmul.u32.u64.compose %v1768, %v1767
        %v1770 = vextract.low.u32 %v1769
        %v1771 = vextract.high.u32 %v1769
        %v1772 = vmul.u32.u64.compose %v1768, %v1763
        %v1773 = vextract.low.u32 %v1772
        %v1774 = vextract.high.u32 %v1772
        %v1775 = vmul.u32 %v1768, %v1759
        %v1776 = vadd.s32 %v1771, %v1773
        %vm1777 = vc.u32 %v1771, %v1773
        %v1778 = vadd.s32 %v1774, 1
        %v1779 = vsel %vm1777, %v1778, %v1774
        %v1780 = vadd.s32 %v1775, %v1779
        %v1781 = vadd.s32 %v1780, 536870912
        %v1782 = vshrl.u32 %v1781, 30
        %v1783 = vshll.u32 %v1782, 30
        %v1784 = vsub.s32 %v1780, %v1783
        %vm1785 = vcmp.lt.s32.totalorder %v1784, 0
        %v1786 = vsub.s32 0, %v1784
        %v1787 = vsel %vm1785, %v1786, %v1784
        %v1788 = vclz %v1787
        %v1789 = vsub.s32 %v1788, 2
        %vm1790 = vcmp.gt.s32.totalorder 0, %v1789
        %v1791 = vsel %vm1790, 0, %v1789
        %v1792 = vsub.s32 32, %v1791
        %v1793 = vshll.u32 %v1784, %v1791
        %v1794 = vshrl.u32 %v1776, %v1792
        %v1795 = vor.u32 %v1793, %v1794
        %v1796 = vsub.s32 4294967266, %v1791
        %v1797 = vadd.s32 %v1796, 127
        %v1798 = vshll.u32 %v1797, 23
        %v1799 = vor.u32 4788187, %v1798
        %v1800 = vand.u32 2147483647, %v1799
        %v1802 = vcvt.s32.f32 %v1795
        %v1803 = vmul.f32 %v1802, %v1800
        %v1804 = vxor.u32 %v1803, 2147483648
        %v1805 = vsel %vm1722, %v1804, %v1803
        %v1806 = vsub.s32 4, %v1782
        %v1807 = vsel %vm1722, %v1806, %v1782
        %v1808 = vsel %vm1721, %v654, %v1805
        %v1809 = vsel %vm1721, 0, %v1807
        %v1810 = vcosq.f32.pop %v1808
        %v1811 = vsinq.f32.pop %v1808
        %vm1812 = vweird.f32 %v654
        %v1813 = vadd.s32 %v1809, 3
        %v1814 = vand.u32 %v1813, 3
        %vm1815 = vcmp.lt.s32.totalorder %v1814, 2
        %vm1816 = vcmp.eq.s32.totalorder %v1814, 0
        %v1817 = vxor.u32 %v1811, 2147483648
        %v1818 = vsel %vm1816, %v1810, %v1817
        %vm1819 = vcmp.eq.s32.totalorder %v1814, 2
        %v1820 = vxor.u32 %v1810, 2147483648
        %v1821 = vsel %vm1819, %v1820, %v1811
        %v1822 = vsel %vm1815, %v1818, %v1821
        %v1823 = vsel %vm1812, nan, %v1822
        %v1824 = vand.u32 2147483647, %v655
        %vm1825 = vcmp.le.f32.partialorder %v1824, 0.7853982
        %vm1826 = vcmp.lt.s32.totalorder %v655, 0
        %v1827 = vand.u32 %v655, 2139095040
        %v1828 = vshrl.u32 %v1827, 23
        %v1829 = vsub.s32 %v1828, 127
        %v1830 = vand.u32 2147483647, %v655
        %v1831 = vand.u32 %v1830, 8388607
        %v1832 = vor.u32 %v1831, 8388608
        %v1833 = vsub.s32 0, %v1832
        %v1834 = vadd.s32 %v1829, 1
        %vm1835 = vcmp.gt.s32.totalorder %v1834, 0
        %v1836 = vsel %vm1835, %v1834, 0
        %v1837 = vshrl.u32 %v1836, 5
        %v1838 = vand.u32 %v1836, 31
        %v1839 = vsub.s32 32, %v1838
        %v1840 = vshrl.u32 683565275, %v1839
        %v1841 = vshll.u32 683565275, %v1838
        %v1842 = vshrl.u32 2475754826, %v1839
        %v1843 = vor.u32 %v1841, %v1842
        %v1844 = vshll.u32 2475754826, %v1838
        %v1845 = vshrl.u32 2131351028, %v1839
        %v1846 = vor.u32 %v1844, %v1845
        %v1847 = vshll.u32 2131351028, %v1838
        %v1848 = vshrl.u32 2102212464, %v1839
        %v1849 = vor.u32 %v1847, %v1848
        %v1850 = vshll.u32 2102212464, %v1838
        %v1851 = vshrl.u32 920167782, %v1839
        %v1852 = vor.u32 %v1850, %v1851
        %v1853 = vshll.u32 920167782, %v1838
        %v1854 = vshrl.u32 1326507024, %v1839
        %v1855 = vor.u32 %v1853, %v1854
        %vm1856 = vcmp.lt.s32.totalorder %v1837, 1
        %vm1857 = vcmp.lt.s32.totalorder %v1837, 2
        %vm1858 = vcmp.lt.s32.totalorder %v1837, 3
        %vm1859 = vcmp.lt.s32.totalorder %v1837, 4
        %v1860 = vsel %vm1856, %v1840, %v1843
        %v1861 = vsel %vm1859, %v1849, 2102212464
        %v1862 = vsel %vm1858, %v1846, %v1861
        %v1863 = vsel %vm1857, %v1860, %v1862
        %v1864 = vsel %vm1856, %v1843, %v1846
        %v1865 = vsel %vm1859, %v1852, 920167782
        %v1866 = vsel %vm1858, %v1849, %v1865
        %v1867 = vsel %vm1857, %v1864, %v1866
        %v1868 = vsel %vm1856, %v1846, %v1849
        %v1869 = vsel %vm1859, %v1855, 1326507024
        %v1870 = vsel %vm1858, %v1852, %v1869
        %v1871 = vsel %vm1857, %v1868, %v1870
        %v1872 = vshll.u32 %v1832, 8
        %v1873 = vmul.u32.u64.compose %v1872, %v1871
        %v1874 = vextract.low.u32 %v1873
        %v1875 = vextract.high.u32 %v1873
        %v1876 = vmul.u32.u64.compose %v1872, %v1867
        %v1877 = vextract.low.u32 %v1876
        %v1878 = vextract.high.u32 %v1876
        %v1879 = vmul.u32 %v1872, %v1863
        %v1880 = vadd.s32 %v1875, %v1877
        %vm1881 = vc.u32 %v1875, %v1877
        %v1882 = vadd.s32 %v1878, 1
        %v1883 = vsel %vm1881, %v1882, %v1878
        %v1884 = vadd.s32 %v1879, %v1883
        %v1885 = vadd.s32 %v1884, 536870912
        %v1886 = vshrl.u32 %v1885, 30
        %v1887 = vshll.u32 %v1886, 30
        %v1888 = vsub.s32 %v1884, %v1887
        %vm1889 = vcmp.lt.s32.totalorder %v1888, 0
        %v1890 = vsub.s32 0, %v1888
        %v1891 = vsel %vm1889, %v1890, %v1888
        %v1892 = vclz %v1891
        %v1893 = vsub.s32 %v1892, 2
        %vm1894 = vcmp.gt.s32.totalorder 0, %v1893
        %v1895 = vsel %vm1894, 0, %v1893
        %v1896 = vsub.s32 32, %v1895
        %v1897 = vshll.u32 %v1888, %v1895
        %v1898 = vshrl.u32 %v1880, %v1896
        %v1899 = vor.u32 %v1897, %v1898
        %v1900 = vsub.s32 4294967266, %v1895
        %v1901 = vadd.s32 %v1900, 127
        %v1902 = vshll.u32 %v1901, 23
        %v1903 = vor.u32 4788187, %v1902
        %v1904 = vand.u32 2147483647, %v1903
        %v1906 = vcvt.s32.f32 %v1899
        %v1907 = vmul.f32 %v1906, %v1904
        %v1908 = vxor.u32 %v1907, 2147483648
        %v1909 = vsel %vm1826, %v1908, %v1907
        %v1910 = vsub.s32 4, %v1886
        %v1911 = vsel %vm1826, %v1910, %v1886
        %v1912 = vsel %vm1825, %v655, %v1909
        %v1913 = vsel %vm1825, 0, %v1911
        %v1914 = vcosq.f32.pop %v1912
        %v1915 = vsinq.f32.pop %v1912
        %vm1916 = vweird.f32 %v655
        %v1917 = vadd.s32 %v1913, 3
        %v1918 = vand.u32 %v1917, 3
        %vm1919 = vcmp.lt.s32.totalorder %v1918, 2
        %vm1920 = vcmp.eq.s32.totalorder %v1918, 0
        %v1921 = vxor.u32 %v1915, 2147483648
        %v1922 = vsel %vm1920, %v1914, %v1921
        %vm1923 = vcmp.eq.s32.totalorder %v1918, 2
        %v1924 = vxor.u32 %v1914, 2147483648
        %v1925 = vsel %vm1923, %v1924, %v1915
        %v1926 = vsel %vm1919, %v1922, %v1925
        %v1927 = vsel %vm1916, nan, %v1926
        %v1928 = vand.u32 2147483647, %v656
        %vm1929 = vcmp.le.f32.partialorder %v1928, 0.7853982
        %vm1930 = vcmp.lt.s32.totalorder %v656, 0
        %v1931 = vand.u32 %v656, 2139095040
        %v1932 = vshrl.u32 %v1931, 23
        %v1933 = vsub.s32 %v1932, 127
        %v1934 = vand.u32 2147483647, %v656
        %v1935 = vand.u32 %v1934, 8388607
        %v1936 = vor.u32 %v1935, 8388608
        %v1937 = vsub.s32 0, %v1936
        %v1938 = vadd.s32 %v1933, 1
        %vm1939 = vcmp.gt.s32.totalorder %v1938, 0
        %v1940 = vsel %vm1939, %v1938, 0
        %v1941 = vshrl.u32 %v1940, 5
        %v1942 = vand.u32 %v1940, 31
        %v1943 = vsub.s32 32, %v1942
        %v1944 = vshrl.u32 683565275, %v1943
        %v1945 = vshll.u32 683565275, %v1942
        %v1946 = vshrl.u32 2475754826, %v1943
        %v1947 = vor.u32 %v1945, %v1946
        %v1948 = vshll.u32 2475754826, %v1942
        %v1949 = vshrl.u32 2131351028, %v1943
        %v1950 = vor.u32 %v1948, %v1949
        %v1951 = vshll.u32 2131351028, %v1942
        %v1952 = vshrl.u32 2102212464, %v1943
        %v1953 = vor.u32 %v1951, %v1952
        %v1954 = vshll.u32 2102212464, %v1942
        %v1955 = vshrl.u32 920167782, %v1943
        %v1956 = vor.u32 %v1954, %v1955
        %v1957 = vshll.u32 920167782, %v1942
        %v1958 = vshrl.u32 1326507024, %v1943
        %v1959 = vor.u32 %v1957, %v1958
        %vm1960 = vcmp.lt.s32.totalorder %v1941, 1
        %vm1961 = vcmp.lt.s32.totalorder %v1941, 2
        %vm1962 = vcmp.lt.s32.totalorder %v1941, 3
        %vm1963 = vcmp.lt.s32.totalorder %v1941, 4
        %v1964 = vsel %vm1960, %v1944, %v1947
        %v1965 = vsel %vm1963, %v1953, 2102212464
        %v1966 = vsel %vm1962, %v1950, %v1965
        %v1967 = vsel %vm1961, %v1964, %v1966
        %v1968 = vsel %vm1960, %v1947, %v1950
        %v1969 = vsel %vm1963, %v1956, 920167782
        %v1970 = vsel %vm1962, %v1953, %v1969
        %v1971 = vsel %vm1961, %v1968, %v1970
        %v1972 = vsel %vm1960, %v1950, %v1953
        %v1973 = vsel %vm1963, %v1959, 1326507024
        %v1974 = vsel %vm1962, %v1956, %v1973
        %v1975 = vsel %vm1961, %v1972, %v1974
        %v1976 = vshll.u32 %v1936, 8
        %v1977 = vmul.u32.u64.compose %v1976, %v1975
        %v1978 = vextract.low.u32 %v1977
        %v1979 = vextract.high.u32 %v1977
        %v1980 = vmul.u32.u64.compose %v1976, %v1971
        %v1981 = vextract.low.u32 %v1980
        %v1982 = vextract.high.u32 %v1980
        %v1983 = vmul.u32 %v1976, %v1967
        %v1984 = vadd.s32 %v1979, %v1981
        %vm1985 = vc.u32 %v1979, %v1981
        %v1986 = vadd.s32 %v1982, 1
        %v1987 = vsel %vm1985, %v1986, %v1982
        %v1988 = vadd.s32 %v1983, %v1987
        %v1989 = vadd.s32 %v1988, 536870912
        %v1990 = vshrl.u32 %v1989, 30
        %v1991 = vshll.u32 %v1990, 30
        %v1992 = vsub.s32 %v1988, %v1991
        %vm1993 = vcmp.lt.s32.totalorder %v1992, 0
        %v1994 = vsub.s32 0, %v1992
        %v1995 = vsel %vm1993, %v1994, %v1992
        %v1996 = vclz %v1995
        %v1997 = vsub.s32 %v1996, 2
        %vm1998 = vcmp.gt.s32.totalorder 0, %v1997
        %v1999 = vsel %vm1998, 0, %v1997
        %v2000 = vsub.s32 32, %v1999
        %v2001 = vshll.u32 %v1992, %v1999
        %v2002 = vshrl.u32 %v1984, %v2000
        %v2003 = vor.u32 %v2001, %v2002
        %v2004 = vsub.s32 4294967266, %v1999
        %v2005 = vadd.s32 %v2004, 127
        %v2006 = vshll.u32 %v2005, 23
        %v2007 = vor.u32 4788187, %v2006
        %v2008 = vand.u32 2147483647, %v2007
        %v2010 = vcvt.s32.f32 %v2003
        %v2011 = vmul.f32 %v2010, %v2008
        %v2012 = vxor.u32 %v2011, 2147483648
        %v2013 = vsel %vm1930, %v2012, %v2011
        %v2014 = vsub.s32 4, %v1990
        %v2015 = vsel %vm1930, %v2014, %v1990
        %v2016 = vsel %vm1929, %v656, %v2013
        %v2017 = vsel %vm1929, 0, %v2015
        %v2018 = vcosq.f32.pop %v2016
        %v2019 = vsinq.f32.pop %v2016
        %vm2020 = vweird.f32 %v656
        %v2021 = vadd.s32 %v2017, 3
        %v2022 = vand.u32 %v2021, 3
        %vm2023 = vcmp.lt.s32.totalorder %v2022, 2
        %vm2024 = vcmp.eq.s32.totalorder %v2022, 0
        %v2025 = vxor.u32 %v2019, 2147483648
        %v2026 = vsel %vm2024, %v2018, %v2025
        %vm2027 = vcmp.eq.s32.totalorder %v2022, 2
        %v2028 = vxor.u32 %v2018, 2147483648
        %v2029 = vsel %vm2027, %v2028, %v2019
        %v2030 = vsel %vm2023, %v2026, %v2029
        %v2031 = vsel %vm2020, nan, %v2030
        %v2032 = vand.u32 2147483647, %v657
        %vm2033 = vcmp.le.f32.partialorder %v2032, 0.7853982
        %vm2034 = vcmp.lt.s32.totalorder %v657, 0
        %v2035 = vand.u32 %v657, 2139095040
        %v2036 = vshrl.u32 %v2035, 23
        %v2037 = vsub.s32 %v2036, 127
        %v2038 = vand.u32 2147483647, %v657
        %v2039 = vand.u32 %v2038, 8388607
        %v2040 = vor.u32 %v2039, 8388608
        %v2041 = vsub.s32 0, %v2040
        %v2042 = vadd.s32 %v2037, 1
        %vm2043 = vcmp.gt.s32.totalorder %v2042, 0
        %v2044 = vsel %vm2043, %v2042, 0
        %v2045 = vshrl.u32 %v2044, 5
        %v2046 = vand.u32 %v2044, 31
        %v2047 = vsub.s32 32, %v2046
        %v2048 = vshrl.u32 683565275, %v2047
        %v2049 = vshll.u32 683565275, %v2046
        %v2050 = vshrl.u32 2475754826, %v2047
        %v2051 = vor.u32 %v2049, %v2050
        %v2052 = vshll.u32 2475754826, %v2046
        %v2053 = vshrl.u32 2131351028, %v2047
        %v2054 = vor.u32 %v2052, %v2053
        %v2055 = vshll.u32 2131351028, %v2046
        %v2056 = vshrl.u32 2102212464, %v2047
        %v2057 = vor.u32 %v2055, %v2056
        %v2058 = vshll.u32 2102212464, %v2046
        %v2059 = vshrl.u32 920167782, %v2047
        %v2060 = vor.u32 %v2058, %v2059
        %v2061 = vshll.u32 920167782, %v2046
        %v2062 = vshrl.u32 1326507024, %v2047
        %v2063 = vor.u32 %v2061, %v2062
        %vm2064 = vcmp.lt.s32.totalorder %v2045, 1
        %vm2065 = vcmp.lt.s32.totalorder %v2045, 2
        %vm2066 = vcmp.lt.s32.totalorder %v2045, 3
        %vm2067 = vcmp.lt.s32.totalorder %v2045, 4
        %v2068 = vsel %vm2064, %v2048, %v2051
        %v2069 = vsel %vm2067, %v2057, 2102212464
        %v2070 = vsel %vm2066, %v2054, %v2069
        %v2071 = vsel %vm2065, %v2068, %v2070
        %v2072 = vsel %vm2064, %v2051, %v2054
        %v2073 = vsel %vm2067, %v2060, 920167782
        %v2074 = vsel %vm2066, %v2057, %v2073
        %v2075 = vsel %vm2065, %v2072, %v2074
        %v2076 = vsel %vm2064, %v2054, %v2057
        %v2077 = vsel %vm2067, %v2063, 1326507024
        %v2078 = vsel %vm2066, %v2060, %v2077
        %v2079 = vsel %vm2065, %v2076, %v2078
        %v2080 = vshll.u32 %v2040, 8
        %v2081 = vmul.u32.u64.compose %v2080, %v2079
        %v2082 = vextract.low.u32 %v2081
        %v2083 = vextract.high.u32 %v2081
        %v2084 = vmul.u32.u64.compose %v2080, %v2075
        %v2085 = vextract.low.u32 %v2084
        %v2086 = vextract.high.u32 %v2084
        %v2087 = vmul.u32 %v2080, %v2071
        %v2088 = vadd.s32 %v2083, %v2085
        %vm2089 = vc.u32 %v2083, %v2085
        %v2090 = vadd.s32 %v2086, 1
        %v2091 = vsel %vm2089, %v2090, %v2086
        %v2092 = vadd.s32 %v2087, %v2091
        %v2093 = vadd.s32 %v2092, 536870912
        %v2094 = vshrl.u32 %v2093, 30
        %v2095 = vshll.u32 %v2094, 30
        %v2096 = vsub.s32 %v2092, %v2095
        %vm2097 = vcmp.lt.s32.totalorder %v2096, 0
        %v2098 = vsub.s32 0, %v2096
        %v2099 = vsel %vm2097, %v2098, %v2096
        %v2100 = vclz %v2099
        %v2101 = vsub.s32 %v2100, 2
        %vm2102 = vcmp.gt.s32.totalorder 0, %v2101
        %v2103 = vsel %vm2102, 0, %v2101
        %v2104 = vsub.s32 32, %v2103
        %v2105 = vshll.u32 %v2096, %v2103
        %v2106 = vshrl.u32 %v2088, %v2104
        %v2107 = vor.u32 %v2105, %v2106
        %v2108 = vsub.s32 4294967266, %v2103
        %v2109 = vadd.s32 %v2108, 127
        %v2110 = vshll.u32 %v2109, 23
        %v2111 = vor.u32 4788187, %v2110
        %v2112 = vand.u32 2147483647, %v2111
        %v2114 = vcvt.s32.f32 %v2107
        %v2115 = vmul.f32 %v2114, %v2112
        %v2116 = vxor.u32 %v2115, 2147483648
        %v2117 = vsel %vm2034, %v2116, %v2115
        %v2118 = vsub.s32 4, %v2094
        %v2119 = vsel %vm2034, %v2118, %v2094
        %v2120 = vsel %vm2033, %v657, %v2117
        %v2121 = vsel %vm2033, 0, %v2119
        %v2122 = vcosq.f32.pop %v2120
        %v2123 = vsinq.f32.pop %v2120
        %vm2124 = vweird.f32 %v657
        %v2125 = vadd.s32 %v2121, 3
        %v2126 = vand.u32 %v2125, 3
        %vm2127 = vcmp.lt.s32.totalorder %v2126, 2
        %vm2128 = vcmp.eq.s32.totalorder %v2126, 0
        %v2129 = vxor.u32 %v2123, 2147483648
        %v2130 = vsel %vm2128, %v2122, %v2129
        %vm2131 = vcmp.eq.s32.totalorder %v2126, 2
        %v2132 = vxor.u32 %v2122, 2147483648
        %v2133 = vsel %vm2131, %v2132, %v2123
        %v2134 = vsel %vm2127, %v2130, %v2133
        %v2135 = vsel %vm2124, nan, %v2134
        %v2136 = vand.u32 2147483647, %v658
        %vm2137 = vcmp.le.f32.partialorder %v2136, 0.7853982
        %vm2138 = vcmp.lt.s32.totalorder %v658, 0
        %v2139 = vand.u32 %v658, 2139095040
        %v2140 = vshrl.u32 %v2139, 23
        %v2141 = vsub.s32 %v2140, 127
        %v2142 = vand.u32 2147483647, %v658
        %v2143 = vand.u32 %v2142, 8388607
        %v2144 = vor.u32 %v2143, 8388608
        %v2145 = vsub.s32 0, %v2144
        %v2146 = vadd.s32 %v2141, 1
        %vm2147 = vcmp.gt.s32.totalorder %v2146, 0
        %v2148 = vsel %vm2147, %v2146, 0
        %v2149 = vshrl.u32 %v2148, 5
        %v2150 = vand.u32 %v2148, 31
        %v2151 = vsub.s32 32, %v2150
        %v2152 = vshrl.u32 683565275, %v2151
        %v2153 = vshll.u32 683565275, %v2150
        %v2154 = vshrl.u32 2475754826, %v2151
        %v2155 = vor.u32 %v2153, %v2154
        %v2156 = vshll.u32 2475754826, %v2150
        %v2157 = vshrl.u32 2131351028, %v2151
        %v2158 = vor.u32 %v2156, %v2157
        %v2159 = vshll.u32 2131351028, %v2150
        %v2160 = vshrl.u32 2102212464, %v2151
        %v2161 = vor.u32 %v2159, %v2160
        %v2162 = vshll.u32 2102212464, %v2150
        %v2163 = vshrl.u32 920167782, %v2151
        %v2164 = vor.u32 %v2162, %v2163
        %v2165 = vshll.u32 920167782, %v2150
        %v2166 = vshrl.u32 1326507024, %v2151
        %v2167 = vor.u32 %v2165, %v2166
        %vm2168 = vcmp.lt.s32.totalorder %v2149, 1
        %vm2169 = vcmp.lt.s32.totalorder %v2149, 2
        %vm2170 = vcmp.lt.s32.totalorder %v2149, 3
        %vm2171 = vcmp.lt.s32.totalorder %v2149, 4
        %v2172 = vsel %vm2168, %v2152, %v2155
        %v2173 = vsel %vm2171, %v2161, 2102212464
        %v2174 = vsel %vm2170, %v2158, %v2173
        %v2175 = vsel %vm2169, %v2172, %v2174
        %v2176 = vsel %vm2168, %v2155, %v2158
        %v2177 = vsel %vm2171, %v2164, 920167782
        %v2178 = vsel %vm2170, %v2161, %v2177
        %v2179 = vsel %vm2169, %v2176, %v2178
        %v2180 = vsel %vm2168, %v2158, %v2161
        %v2181 = vsel %vm2171, %v2167, 1326507024
        %v2182 = vsel %vm2170, %v2164, %v2181
        %v2183 = vsel %vm2169, %v2180, %v2182
        %v2184 = vshll.u32 %v2144, 8
        %v2185 = vmul.u32.u64.compose %v2184, %v2183
        %v2186 = vextract.low.u32 %v2185
        %v2187 = vextract.high.u32 %v2185
        %v2188 = vmul.u32.u64.compose %v2184, %v2179
        %v2189 = vextract.low.u32 %v2188
        %v2190 = vextract.high.u32 %v2188
        %v2191 = vmul.u32 %v2184, %v2175
        %v2192 = vadd.s32 %v2187, %v2189
        %vm2193 = vc.u32 %v2187, %v2189
        %v2194 = vadd.s32 %v2190, 1
        %v2195 = vsel %vm2193, %v2194, %v2190
        %v2196 = vadd.s32 %v2191, %v2195
        %v2197 = vadd.s32 %v2196, 536870912
        %v2198 = vshrl.u32 %v2197, 30
        %v2199 = vshll.u32 %v2198, 30
        %v2200 = vsub.s32 %v2196, %v2199
        %vm2201 = vcmp.lt.s32.totalorder %v2200, 0
        %v2202 = vsub.s32 0, %v2200
        %v2203 = vsel %vm2201, %v2202, %v2200
        %v2204 = vclz %v2203
        %v2205 = vsub.s32 %v2204, 2
        %vm2206 = vcmp.gt.s32.totalorder 0, %v2205
        %v2207 = vsel %vm2206, 0, %v2205
        %v2208 = vsub.s32 32, %v2207
        %v2209 = vshll.u32 %v2200, %v2207
        %v2210 = vshrl.u32 %v2192, %v2208
        %v2211 = vor.u32 %v2209, %v2210
        %v2212 = vsub.s32 4294967266, %v2207
        %v2213 = vadd.s32 %v2212, 127
        %v2214 = vshll.u32 %v2213, 23
        %v2215 = vor.u32 4788187, %v2214
        %v2216 = vand.u32 2147483647, %v2215
        %v2218 = vcvt.s32.f32 %v2211
        %v2219 = vmul.f32 %v2218, %v2216
        %v2220 = vxor.u32 %v2219, 2147483648
        %v2221 = vsel %vm2138, %v2220, %v2219
        %v2222 = vsub.s32 4, %v2198
        %v2223 = vsel %vm2138, %v2222, %v2198
        %v2224 = vsel %vm2137, %v658, %v2221
        %v2225 = vsel %vm2137, 0, %v2223
        %v2226 = vcosq.f32.pop %v2224
        %v2227 = vsinq.f32.pop %v2224
        %vm2228 = vweird.f32 %v658
        %v2229 = vadd.s32 %v2225, 3
        %v2230 = vand.u32 %v2229, 3
        %vm2231 = vcmp.lt.s32.totalorder %v2230, 2
        %vm2232 = vcmp.eq.s32.totalorder %v2230, 0
        %v2233 = vxor.u32 %v2227, 2147483648
        %v2234 = vsel %vm2232, %v2226, %v2233
        %vm2235 = vcmp.eq.s32.totalorder %v2230, 2
        %v2236 = vxor.u32 %v2226, 2147483648
        %v2237 = vsel %vm2235, %v2236, %v2227
        %v2238 = vsel %vm2231, %v2234, %v2237
        %v2239 = vsel %vm2228, nan, %v2238
        %v2240 = vand.u32 2147483647, %v659
        %vm2241 = vcmp.le.f32.partialorder %v2240, 0.7853982
        %vm2242 = vcmp.lt.s32.totalorder %v659, 0
        %v2243 = vand.u32 %v659, 2139095040
        %v2244 = vshrl.u32 %v2243, 23
        %v2245 = vsub.s32 %v2244, 127
        %v2246 = vand.u32 2147483647, %v659
        %v2247 = vand.u32 %v2246, 8388607
        %v2248 = vor.u32 %v2247, 8388608
        %v2249 = vsub.s32 0, %v2248
        %v2250 = vadd.s32 %v2245, 1
        %vm2251 = vcmp.gt.s32.totalorder %v2250, 0
        %v2252 = vsel %vm2251, %v2250, 0
        %v2253 = vshrl.u32 %v2252, 5
        %v2254 = vand.u32 %v2252, 31
        %v2255 = vsub.s32 32, %v2254
        %v2256 = vshrl.u32 683565275, %v2255
        %v2257 = vshll.u32 683565275, %v2254
        %v2258 = vshrl.u32 2475754826, %v2255
        %v2259 = vor.u32 %v2257, %v2258
        %v2260 = vshll.u32 2475754826, %v2254
        %v2261 = vshrl.u32 2131351028, %v2255
        %v2262 = vor.u32 %v2260, %v2261
        %v2263 = vshll.u32 2131351028, %v2254
        %v2264 = vshrl.u32 2102212464, %v2255
        %v2265 = vor.u32 %v2263, %v2264
        %v2266 = vshll.u32 2102212464, %v2254
        %v2267 = vshrl.u32 920167782, %v2255
        %v2268 = vor.u32 %v2266, %v2267
        %v2269 = vshll.u32 920167782, %v2254
        %v2270 = vshrl.u32 1326507024, %v2255
        %v2271 = vor.u32 %v2269, %v2270
        %vm2272 = vcmp.lt.s32.totalorder %v2253, 1
        %vm2273 = vcmp.lt.s32.totalorder %v2253, 2
        %vm2274 = vcmp.lt.s32.totalorder %v2253, 3
        %vm2275 = vcmp.lt.s32.totalorder %v2253, 4
        %v2276 = vsel %vm2272, %v2256, %v2259
        %v2277 = vsel %vm2275, %v2265, 2102212464
        %v2278 = vsel %vm2274, %v2262, %v2277
        %v2279 = vsel %vm2273, %v2276, %v2278
        %v2280 = vsel %vm2272, %v2259, %v2262
        %v2281 = vsel %vm2275, %v2268, 920167782
        %v2282 = vsel %vm2274, %v2265, %v2281
        %v2283 = vsel %vm2273, %v2280, %v2282
        %v2284 = vsel %vm2272, %v2262, %v2265
        %v2285 = vsel %vm2275, %v2271, 1326507024
        %v2286 = vsel %vm2274, %v2268, %v2285
        %v2287 = vsel %vm2273, %v2284, %v2286
        %v2288 = vshll.u32 %v2248, 8
        %v2289 = vmul.u32.u64.compose %v2288, %v2287
        %v2290 = vextract.low.u32 %v2289
        %v2291 = vextract.high.u32 %v2289
        %v2292 = vmul.u32.u64.compose %v2288, %v2283
        %v2293 = vextract.low.u32 %v2292
        %v2294 = vextract.high.u32 %v2292
        %v2295 = vmul.u32 %v2288, %v2279
        %v2296 = vadd.s32 %v2291, %v2293
        %vm2297 = vc.u32 %v2291, %v2293
        %v2298 = vadd.s32 %v2294, 1
        %v2299 = vsel %vm2297, %v2298, %v2294
        %v2300 = vadd.s32 %v2295, %v2299
        %v2301 = vadd.s32 %v2300, 536870912
        %v2302 = vshrl.u32 %v2301, 30
        %v2303 = vshll.u32 %v2302, 30
        %v2304 = vsub.s32 %v2300, %v2303
        %vm2305 = vcmp.lt.s32.totalorder %v2304, 0
        %v2306 = vsub.s32 0, %v2304
        %v2307 = vsel %vm2305, %v2306, %v2304
        %v2308 = vclz %v2307
        %v2309 = vsub.s32 %v2308, 2
        %vm2310 = vcmp.gt.s32.totalorder 0, %v2309
        %v2311 = vsel %vm2310, 0, %v2309
        %v2312 = vsub.s32 32, %v2311
        %v2313 = vshll.u32 %v2304, %v2311
        %v2314 = vshrl.u32 %v2296, %v2312
        %v2315 = vor.u32 %v2313, %v2314
        %v2316 = vsub.s32 4294967266, %v2311
        %v2317 = vadd.s32 %v2316, 127
        %v2318 = vshll.u32 %v2317, 23
        %v2319 = vor.u32 4788187, %v2318
        %v2320 = vand.u32 2147483647, %v2319
        %v2322 = vcvt.s32.f32 %v2315
        %v2323 = vmul.f32 %v2322, %v2320
        %v2324 = vxor.u32 %v2323, 2147483648
        %v2325 = vsel %vm2242, %v2324, %v2323
        %v2326 = vsub.s32 4, %v2302
        %v2327 = vsel %vm2242, %v2326, %v2302
        %v2328 = vsel %vm2241, %v659, %v2325
        %v2329 = vsel %vm2241, 0, %v2327
        %v2330 = vcosq.f32.pop %v2328
        %v2331 = vsinq.f32.pop %v2328
        %vm2332 = vweird.f32 %v659
        %v2333 = vadd.s32 %v2329, 3
        %v2334 = vand.u32 %v2333, 3
        %vm2335 = vcmp.lt.s32.totalorder %v2334, 2
        %vm2336 = vcmp.eq.s32.totalorder %v2334, 0
        %v2337 = vxor.u32 %v2331, 2147483648
        %v2338 = vsel %vm2336, %v2330, %v2337
        %vm2339 = vcmp.eq.s32.totalorder %v2334, 2
        %v2340 = vxor.u32 %v2330, 2147483648
        %v2341 = vsel %vm2339, %v2340, %v2331
        %v2342 = vsel %vm2335, %v2338, %v2341
        %v2343 = vsel %vm2332, nan, %v2342
        %v2344 = vand.u32 2147483647, %v660
        %vm2345 = vcmp.le.f32.partialorder %v2344, 0.7853982
        %vm2346 = vcmp.lt.s32.totalorder %v660, 0
        %v2347 = vand.u32 %v660, 2139095040
        %v2348 = vshrl.u32 %v2347, 23
        %v2349 = vsub.s32 %v2348, 127
        %v2350 = vand.u32 2147483647, %v660
        %v2351 = vand.u32 %v2350, 8388607
        %v2352 = vor.u32 %v2351, 8388608
        %v2353 = vsub.s32 0, %v2352
        %v2354 = vadd.s32 %v2349, 1
        %vm2355 = vcmp.gt.s32.totalorder %v2354, 0
        %v2356 = vsel %vm2355, %v2354, 0
        %v2357 = vshrl.u32 %v2356, 5
        %v2358 = vand.u32 %v2356, 31
        %v2359 = vsub.s32 32, %v2358
        %v2360 = vshrl.u32 683565275, %v2359
        %v2361 = vshll.u32 683565275, %v2358
        %v2362 = vshrl.u32 2475754826, %v2359
        %v2363 = vor.u32 %v2361, %v2362
        %v2364 = vshll.u32 2475754826, %v2358
        %v2365 = vshrl.u32 2131351028, %v2359
        %v2366 = vor.u32 %v2364, %v2365
        %v2367 = vshll.u32 2131351028, %v2358
        %v2368 = vshrl.u32 2102212464, %v2359
        %v2369 = vor.u32 %v2367, %v2368
        %v2370 = vshll.u32 2102212464, %v2358
        %v2371 = vshrl.u32 920167782, %v2359
        %v2372 = vor.u32 %v2370, %v2371
        %v2373 = vshll.u32 920167782, %v2358
        %v2374 = vshrl.u32 1326507024, %v2359
        %v2375 = vor.u32 %v2373, %v2374
        %vm2376 = vcmp.lt.s32.totalorder %v2357, 1
        %vm2377 = vcmp.lt.s32.totalorder %v2357, 2
        %vm2378 = vcmp.lt.s32.totalorder %v2357, 3
        %vm2379 = vcmp.lt.s32.totalorder %v2357, 4
        %v2380 = vsel %vm2376, %v2360, %v2363
        %v2381 = vsel %vm2379, %v2369, 2102212464
        %v2382 = vsel %vm2378, %v2366, %v2381
        %v2383 = vsel %vm2377, %v2380, %v2382
        %v2384 = vsel %vm2376, %v2363, %v2366
        %v2385 = vsel %vm2379, %v2372, 920167782
        %v2386 = vsel %vm2378, %v2369, %v2385
        %v2387 = vsel %vm2377, %v2384, %v2386
        %v2388 = vsel %vm2376, %v2366, %v2369
        %v2389 = vsel %vm2379, %v2375, 1326507024
        %v2390 = vsel %vm2378, %v2372, %v2389
        %v2391 = vsel %vm2377, %v2388, %v2390
        %v2392 = vshll.u32 %v2352, 8
        %v2393 = vmul.u32.u64.compose %v2392, %v2391
        %v2394 = vextract.low.u32 %v2393
        %v2395 = vextract.high.u32 %v2393
        %v2396 = vmul.u32.u64.compose %v2392, %v2387
        %v2397 = vextract.low.u32 %v2396
        %v2398 = vextract.high.u32 %v2396
        %v2399 = vmul.u32 %v2392, %v2383
        %v2400 = vadd.s32 %v2395, %v2397
        %vm2401 = vc.u32 %v2395, %v2397
        %v2402 = vadd.s32 %v2398, 1
        %v2403 = vsel %vm2401, %v2402, %v2398
        %v2404 = vadd.s32 %v2399, %v2403
        %v2405 = vadd.s32 %v2404, 536870912
        %v2406 = vshrl.u32 %v2405, 30
        %v2407 = vshll.u32 %v2406, 30
        %v2408 = vsub.s32 %v2404, %v2407
        %vm2409 = vcmp.lt.s32.totalorder %v2408, 0
        %v2410 = vsub.s32 0, %v2408
        %v2411 = vsel %vm2409, %v2410, %v2408
        %v2412 = vclz %v2411
        %v2413 = vsub.s32 %v2412, 2
        %vm2414 = vcmp.gt.s32.totalorder 0, %v2413
        %v2415 = vsel %vm2414, 0, %v2413
        %v2416 = vsub.s32 32, %v2415
        %v2417 = vshll.u32 %v2408, %v2415
        %v2418 = vshrl.u32 %v2400, %v2416
        %v2419 = vor.u32 %v2417, %v2418
        %v2420 = vsub.s32 4294967266, %v2415
        %v2421 = vadd.s32 %v2420, 127
        %v2422 = vshll.u32 %v2421, 23
        %v2423 = vor.u32 4788187, %v2422
        %v2424 = vand.u32 2147483647, %v2423
        %v2426 = vcvt.s32.f32 %v2419
        %v2427 = vmul.f32 %v2426, %v2424
        %v2428 = vxor.u32 %v2427, 2147483648
        %v2429 = vsel %vm2346, %v2428, %v2427
        %v2430 = vsub.s32 4, %v2406
        %v2431 = vsel %vm2346, %v2430, %v2406
        %v2432 = vsel %vm2345, %v660, %v2429
        %v2433 = vsel %vm2345, 0, %v2431
        %v2434 = vcosq.f32.pop %v2432
        %v2435 = vsinq.f32.pop %v2432
        %vm2436 = vweird.f32 %v660
        %v2437 = vadd.s32 %v2433, 3
        %v2438 = vand.u32 %v2437, 3
        %vm2439 = vcmp.lt.s32.totalorder %v2438, 2
        %vm2440 = vcmp.eq.s32.totalorder %v2438, 0
        %v2441 = vxor.u32 %v2435, 2147483648
        %v2442 = vsel %vm2440, %v2434, %v2441
        %vm2443 = vcmp.eq.s32.totalorder %v2438, 2
        %v2444 = vxor.u32 %v2434, 2147483648
        %v2445 = vsel %vm2443, %v2444, %v2435
        %v2446 = vsel %vm2439, %v2442, %v2445
        %v2447 = vsel %vm2436, nan, %v2446
        %v2448 = vand.u32 2147483647, %v661
        %vm2449 = vcmp.le.f32.partialorder %v2448, 0.7853982
        %vm2450 = vcmp.lt.s32.totalorder %v661, 0
        %v2451 = vand.u32 %v661, 2139095040
        %v2452 = vshrl.u32 %v2451, 23
        %v2453 = vsub.s32 %v2452, 127
        %v2454 = vand.u32 2147483647, %v661
        %v2455 = vand.u32 %v2454, 8388607
        %v2456 = vor.u32 %v2455, 8388608
        %v2457 = vsub.s32 0, %v2456
        %v2458 = vadd.s32 %v2453, 1
        %vm2459 = vcmp.gt.s32.totalorder %v2458, 0
        %v2460 = vsel %vm2459, %v2458, 0
        %v2461 = vshrl.u32 %v2460, 5
        %v2462 = vand.u32 %v2460, 31
        %v2463 = vsub.s32 32, %v2462
        %v2464 = vshrl.u32 683565275, %v2463
        %v2465 = vshll.u32 683565275, %v2462
        %v2466 = vshrl.u32 2475754826, %v2463
        %v2467 = vor.u32 %v2465, %v2466
        %v2468 = vshll.u32 2475754826, %v2462
        %v2469 = vshrl.u32 2131351028, %v2463
        %v2470 = vor.u32 %v2468, %v2469
        %v2471 = vshll.u32 2131351028, %v2462
        %v2472 = vshrl.u32 2102212464, %v2463
        %v2473 = vor.u32 %v2471, %v2472
        %v2474 = vshll.u32 2102212464, %v2462
        %v2475 = vshrl.u32 920167782, %v2463
        %v2476 = vor.u32 %v2474, %v2475
        %v2477 = vshll.u32 920167782, %v2462
        %v2478 = vshrl.u32 1326507024, %v2463
        %v2479 = vor.u32 %v2477, %v2478
        %vm2480 = vcmp.lt.s32.totalorder %v2461, 1
        %vm2481 = vcmp.lt.s32.totalorder %v2461, 2
        %vm2482 = vcmp.lt.s32.totalorder %v2461, 3
        %vm2483 = vcmp.lt.s32.totalorder %v2461, 4
        %v2484 = vsel %vm2480, %v2464, %v2467
        %v2485 = vsel %vm2483, %v2473, 2102212464
        %v2486 = vsel %vm2482, %v2470, %v2485
        %v2487 = vsel %vm2481, %v2484, %v2486
        %v2488 = vsel %vm2480, %v2467, %v2470
        %v2489 = vsel %vm2483, %v2476, 920167782
        %v2490 = vsel %vm2482, %v2473, %v2489
        %v2491 = vsel %vm2481, %v2488, %v2490
        %v2492 = vsel %vm2480, %v2470, %v2473
        %v2493 = vsel %vm2483, %v2479, 1326507024
        %v2494 = vsel %vm2482, %v2476, %v2493
        %v2495 = vsel %vm2481, %v2492, %v2494
        %v2496 = vshll.u32 %v2456, 8
        %v2497 = vmul.u32.u64.compose %v2496, %v2495
        %v2498 = vextract.low.u32 %v2497
        %v2499 = vextract.high.u32 %v2497
        %v2500 = vmul.u32.u64.compose %v2496, %v2491
        %v2501 = vextract.low.u32 %v2500
        %v2502 = vextract.high.u32 %v2500
        %v2503 = vmul.u32 %v2496, %v2487
        %v2504 = vadd.s32 %v2499, %v2501
        %vm2505 = vc.u32 %v2499, %v2501
        %v2506 = vadd.s32 %v2502, 1
        %v2507 = vsel %vm2505, %v2506, %v2502
        %v2508 = vadd.s32 %v2503, %v2507
        %v2509 = vadd.s32 %v2508, 536870912
        %v2510 = vshrl.u32 %v2509, 30
        %v2511 = vshll.u32 %v2510, 30
        %v2512 = vsub.s32 %v2508, %v2511
        %vm2513 = vcmp.lt.s32.totalorder %v2512, 0
        %v2514 = vsub.s32 0, %v2512
        %v2515 = vsel %vm2513, %v2514, %v2512
        %v2516 = vclz %v2515
        %v2517 = vsub.s32 %v2516, 2
        %vm2518 = vcmp.gt.s32.totalorder 0, %v2517
        %v2519 = vsel %vm2518, 0, %v2517
        %v2520 = vsub.s32 32, %v2519
        %v2521 = vshll.u32 %v2512, %v2519
        %v2522 = vshrl.u32 %v2504, %v2520
        %v2523 = vor.u32 %v2521, %v2522
        %v2524 = vsub.s32 4294967266, %v2519
        %v2525 = vadd.s32 %v2524, 127
        %v2526 = vshll.u32 %v2525, 23
        %v2527 = vor.u32 4788187, %v2526
        %v2528 = vand.u32 2147483647, %v2527
        %v2530 = vcvt.s32.f32 %v2523
        %v2531 = vmul.f32 %v2530, %v2528
        %v2532 = vxor.u32 %v2531, 2147483648
        %v2533 = vsel %vm2450, %v2532, %v2531
        %v2534 = vsub.s32 4, %v2510
        %v2535 = vsel %vm2450, %v2534, %v2510
        %v2536 = vsel %vm2449, %v661, %v2533
        %v2537 = vsel %vm2449, 0, %v2535
        %v2538 = vcosq.f32.pop %v2536
        %v2539 = vsinq.f32.pop %v2536
        %vm2540 = vweird.f32 %v661
        %v2541 = vadd.s32 %v2537, 3
        %v2542 = vand.u32 %v2541, 3
        %vm2543 = vcmp.lt.s32.totalorder %v2542, 2
        %vm2544 = vcmp.eq.s32.totalorder %v2542, 0
        %v2545 = vxor.u32 %v2539, 2147483648
        %v2546 = vsel %vm2544, %v2538, %v2545
        %vm2547 = vcmp.eq.s32.totalorder %v2542, 2
        %v2548 = vxor.u32 %v2538, 2147483648
        %v2549 = vsel %vm2547, %v2548, %v2539
        %v2550 = vsel %vm2543, %v2546, %v2549
        %v2551 = vsel %vm2540, nan, %v2550
        %v2552 = vand.u32 2147483647, %v662
        %vm2553 = vcmp.le.f32.partialorder %v2552, 0.7853982
        %vm2554 = vcmp.lt.s32.totalorder %v662, 0
        %v2555 = vand.u32 %v662, 2139095040
        %v2556 = vshrl.u32 %v2555, 23
        %v2557 = vsub.s32 %v2556, 127
        %v2558 = vand.u32 2147483647, %v662
        %v2559 = vand.u32 %v2558, 8388607
        %v2560 = vor.u32 %v2559, 8388608
        %v2561 = vsub.s32 0, %v2560
        %v2562 = vadd.s32 %v2557, 1
        %vm2563 = vcmp.gt.s32.totalorder %v2562, 0
        %v2564 = vsel %vm2563, %v2562, 0
        %v2565 = vshrl.u32 %v2564, 5
        %v2566 = vand.u32 %v2564, 31
        %v2567 = vsub.s32 32, %v2566
        %v2568 = vshrl.u32 683565275, %v2567
        %v2569 = vshll.u32 683565275, %v2566
        %v2570 = vshrl.u32 2475754826, %v2567
        %v2571 = vor.u32 %v2569, %v2570
        %v2572 = vshll.u32 2475754826, %v2566
        %v2573 = vshrl.u32 2131351028, %v2567
        %v2574 = vor.u32 %v2572, %v2573
        %v2575 = vshll.u32 2131351028, %v2566
        %v2576 = vshrl.u32 2102212464, %v2567
        %v2577 = vor.u32 %v2575, %v2576
        %v2578 = vshll.u32 2102212464, %v2566
        %v2579 = vshrl.u32 920167782, %v2567
        %v2580 = vor.u32 %v2578, %v2579
        %v2581 = vshll.u32 920167782, %v2566
        %v2582 = vshrl.u32 1326507024, %v2567
        %v2583 = vor.u32 %v2581, %v2582
        %vm2584 = vcmp.lt.s32.totalorder %v2565, 1
        %vm2585 = vcmp.lt.s32.totalorder %v2565, 2
        %vm2586 = vcmp.lt.s32.totalorder %v2565, 3
        %vm2587 = vcmp.lt.s32.totalorder %v2565, 4
        %v2588 = vsel %vm2584, %v2568, %v2571
        %v2589 = vsel %vm2587, %v2577, 2102212464
        %v2590 = vsel %vm2586, %v2574, %v2589
        %v2591 = vsel %vm2585, %v2588, %v2590
        %v2592 = vsel %vm2584, %v2571, %v2574
        %v2593 = vsel %vm2587, %v2580, 920167782
        %v2594 = vsel %vm2586, %v2577, %v2593
        %v2595 = vsel %vm2585, %v2592, %v2594
        %v2596 = vsel %vm2584, %v2574, %v2577
        %v2597 = vsel %vm2587, %v2583, 1326507024
        %v2598 = vsel %vm2586, %v2580, %v2597
        %v2599 = vsel %vm2585, %v2596, %v2598
        %v2600 = vshll.u32 %v2560, 8
        %v2601 = vmul.u32.u64.compose %v2600, %v2599
        %v2602 = vextract.low.u32 %v2601
        %v2603 = vextract.high.u32 %v2601
        %v2604 = vmul.u32.u64.compose %v2600, %v2595
        %v2605 = vextract.low.u32 %v2604
        %v2606 = vextract.high.u32 %v2604
        %v2607 = vmul.u32 %v2600, %v2591
        %v2608 = vadd.s32 %v2603, %v2605
        %vm2609 = vc.u32 %v2603, %v2605
        %v2610 = vadd.s32 %v2606, 1
        %v2611 = vsel %vm2609, %v2610, %v2606
        %v2612 = vadd.s32 %v2607, %v2611
        %v2613 = vadd.s32 %v2612, 536870912
        %v2614 = vshrl.u32 %v2613, 30
        %v2615 = vshll.u32 %v2614, 30
        %v2616 = vsub.s32 %v2612, %v2615
        %vm2617 = vcmp.lt.s32.totalorder %v2616, 0
        %v2618 = vsub.s32 0, %v2616
        %v2619 = vsel %vm2617, %v2618, %v2616
        %v2620 = vclz %v2619
        %v2621 = vsub.s32 %v2620, 2
        %vm2622 = vcmp.gt.s32.totalorder 0, %v2621
        %v2623 = vsel %vm2622, 0, %v2621
        %v2624 = vsub.s32 32, %v2623
        %v2625 = vshll.u32 %v2616, %v2623
        %v2626 = vshrl.u32 %v2608, %v2624
        %v2627 = vor.u32 %v2625, %v2626
        %v2628 = vsub.s32 4294967266, %v2623
        %v2629 = vadd.s32 %v2628, 127
        %v2630 = vshll.u32 %v2629, 23
        %v2631 = vor.u32 4788187, %v2630
        %v2632 = vand.u32 2147483647, %v2631
        %v2634 = vcvt.s32.f32 %v2627
        %v2635 = vmul.f32 %v2634, %v2632
        %v2636 = vxor.u32 %v2635, 2147483648
        %v2637 = vsel %vm2554, %v2636, %v2635
        %v2638 = vsub.s32 4, %v2614
        %v2639 = vsel %vm2554, %v2638, %v2614
        %v2640 = vsel %vm2553, %v662, %v2637
        %v2641 = vsel %vm2553, 0, %v2639
        %v2642 = vcosq.f32.pop %v2640
        %v2643 = vsinq.f32.pop %v2640
        %vm2644 = vweird.f32 %v662
        %v2645 = vadd.s32 %v2641, 3
        %v2646 = vand.u32 %v2645, 3
        %vm2647 = vcmp.lt.s32.totalorder %v2646, 2
        %vm2648 = vcmp.eq.s32.totalorder %v2646, 0
        %v2649 = vxor.u32 %v2643, 2147483648
        %v2650 = vsel %vm2648, %v2642, %v2649
        %vm2651 = vcmp.eq.s32.totalorder %v2646, 2
        %v2652 = vxor.u32 %v2642, 2147483648
        %v2653 = vsel %vm2651, %v2652, %v2643
        %v2654 = vsel %vm2647, %v2650, %v2653
        %v2655 = vsel %vm2644, nan, %v2654
        %v2656 = vand.u32 2147483647, %v663
        %vm2657 = vcmp.le.f32.partialorder %v2656, 0.7853982
        %vm2658 = vcmp.lt.s32.totalorder %v663, 0
        %v2659 = vand.u32 %v663, 2139095040
        %v2660 = vshrl.u32 %v2659, 23
        %v2661 = vsub.s32 %v2660, 127
        %v2662 = vand.u32 2147483647, %v663
        %v2663 = vand.u32 %v2662, 8388607
        %v2664 = vor.u32 %v2663, 8388608
        %v2665 = vsub.s32 0, %v2664
        %v2666 = vadd.s32 %v2661, 1
        %vm2667 = vcmp.gt.s32.totalorder %v2666, 0
        %v2668 = vsel %vm2667, %v2666, 0
        %v2669 = vshrl.u32 %v2668, 5
        %v2670 = vand.u32 %v2668, 31
        %v2671 = vsub.s32 32, %v2670
        %v2672 = vshrl.u32 683565275, %v2671
        %v2673 = vshll.u32 683565275, %v2670
        %v2674 = vshrl.u32 2475754826, %v2671
        %v2675 = vor.u32 %v2673, %v2674
        %v2676 = vshll.u32 2475754826, %v2670
        %v2677 = vshrl.u32 2131351028, %v2671
        %v2678 = vor.u32 %v2676, %v2677
        %v2679 = vshll.u32 2131351028, %v2670
        %v2680 = vshrl.u32 2102212464, %v2671
        %v2681 = vor.u32 %v2679, %v2680
        %v2682 = vshll.u32 2102212464, %v2670
        %v2683 = vshrl.u32 920167782, %v2671
        %v2684 = vor.u32 %v2682, %v2683
        %v2685 = vshll.u32 920167782, %v2670
        %v2686 = vshrl.u32 1326507024, %v2671
        %v2687 = vor.u32 %v2685, %v2686
        %vm2688 = vcmp.lt.s32.totalorder %v2669, 1
        %vm2689 = vcmp.lt.s32.totalorder %v2669, 2
        %vm2690 = vcmp.lt.s32.totalorder %v2669, 3
        %vm2691 = vcmp.lt.s32.totalorder %v2669, 4
        %v2692 = vsel %vm2688, %v2672, %v2675
        %v2693 = vsel %vm2691, %v2681, 2102212464
        %v2694 = vsel %vm2690, %v2678, %v2693
        %v2695 = vsel %vm2689, %v2692, %v2694
        %v2696 = vsel %vm2688, %v2675, %v2678
        %v2697 = vsel %vm2691, %v2684, 920167782
        %v2698 = vsel %vm2690, %v2681, %v2697
        %v2699 = vsel %vm2689, %v2696, %v2698
        %v2700 = vsel %vm2688, %v2678, %v2681
        %v2701 = vsel %vm2691, %v2687, 1326507024
        %v2702 = vsel %vm2690, %v2684, %v2701
        %v2703 = vsel %vm2689, %v2700, %v2702
        %v2704 = vshll.u32 %v2664, 8
        %v2705 = vmul.u32.u64.compose %v2704, %v2703
        %v2706 = vextract.low.u32 %v2705
        %v2707 = vextract.high.u32 %v2705
        %v2708 = vmul.u32.u64.compose %v2704, %v2699
        %v2709 = vextract.low.u32 %v2708
        %v2710 = vextract.high.u32 %v2708
        %v2711 = vmul.u32 %v2704, %v2695
        %v2712 = vadd.s32 %v2707, %v2709
        %vm2713 = vc.u32 %v2707, %v2709
        %v2714 = vadd.s32 %v2710, 1
        %v2715 = vsel %vm2713, %v2714, %v2710
        %v2716 = vadd.s32 %v2711, %v2715
        %v2717 = vadd.s32 %v2716, 536870912
        %v2718 = vshrl.u32 %v2717, 30
        %v2719 = vshll.u32 %v2718, 30
        %v2720 = vsub.s32 %v2716, %v2719
        %vm2721 = vcmp.lt.s32.totalorder %v2720, 0
        %v2722 = vsub.s32 0, %v2720
        %v2723 = vsel %vm2721, %v2722, %v2720
        %v2724 = vclz %v2723
        %v2725 = vsub.s32 %v2724, 2
        %vm2726 = vcmp.gt.s32.totalorder 0, %v2725
        %v2727 = vsel %vm2726, 0, %v2725
        %v2728 = vsub.s32 32, %v2727
        %v2729 = vshll.u32 %v2720, %v2727
        %v2730 = vshrl.u32 %v2712, %v2728
        %v2731 = vor.u32 %v2729, %v2730
        %v2732 = vsub.s32 4294967266, %v2727
        %v2733 = vadd.s32 %v2732, 127
        %v2734 = vshll.u32 %v2733, 23
        %v2735 = vor.u32 4788187, %v2734
        %v2736 = vand.u32 2147483647, %v2735
        %v2738 = vcvt.s32.f32 %v2731
        %v2739 = vmul.f32 %v2738, %v2736
        %v2740 = vxor.u32 %v2739, 2147483648
        %v2741 = vsel %vm2658, %v2740, %v2739
        %v2742 = vsub.s32 4, %v2718
        %v2743 = vsel %vm2658, %v2742, %v2718
        %v2744 = vsel %vm2657, %v663, %v2741
        %v2745 = vsel %vm2657, 0, %v2743
        %v2746 = vcosq.f32.pop %v2744
        %v2747 = vsinq.f32.pop %v2744
        %vm2748 = vweird.f32 %v663
        %v2749 = vadd.s32 %v2745, 3
        %v2750 = vand.u32 %v2749, 3
        %vm2751 = vcmp.lt.s32.totalorder %v2750, 2
        %vm2752 = vcmp.eq.s32.totalorder %v2750, 0
        %v2753 = vxor.u32 %v2747, 2147483648
        %v2754 = vsel %vm2752, %v2746, %v2753
        %vm2755 = vcmp.eq.s32.totalorder %v2750, 2
        %v2756 = vxor.u32 %v2746, 2147483648
        %v2757 = vsel %vm2755, %v2756, %v2747
        %v2758 = vsel %vm2751, %v2754, %v2757
        %v2759 = vsel %vm2748, nan, %v2758
        %v2760 = vand.u32 2147483647, %v664
        %vm2761 = vcmp.le.f32.partialorder %v2760, 0.7853982
        %vm2762 = vcmp.lt.s32.totalorder %v664, 0
        %v2763 = vand.u32 %v664, 2139095040
        %v2764 = vshrl.u32 %v2763, 23
        %v2765 = vsub.s32 %v2764, 127
        %v2766 = vand.u32 2147483647, %v664
        %v2767 = vand.u32 %v2766, 8388607
        %v2768 = vor.u32 %v2767, 8388608
        %v2769 = vsub.s32 0, %v2768
        %v2770 = vadd.s32 %v2765, 1
        %vm2771 = vcmp.gt.s32.totalorder %v2770, 0
        %v2772 = vsel %vm2771, %v2770, 0
        %v2773 = vshrl.u32 %v2772, 5
        %v2774 = vand.u32 %v2772, 31
        %v2775 = vsub.s32 32, %v2774
        %v2776 = vshrl.u32 683565275, %v2775
        %v2777 = vshll.u32 683565275, %v2774
        %v2778 = vshrl.u32 2475754826, %v2775
        %v2779 = vor.u32 %v2777, %v2778
        %v2780 = vshll.u32 2475754826, %v2774
        %v2781 = vshrl.u32 2131351028, %v2775
        %v2782 = vor.u32 %v2780, %v2781
        %v2783 = vshll.u32 2131351028, %v2774
        %v2784 = vshrl.u32 2102212464, %v2775
        %v2785 = vor.u32 %v2783, %v2784
        %v2786 = vshll.u32 2102212464, %v2774
        %v2787 = vshrl.u32 920167782, %v2775
        %v2788 = vor.u32 %v2786, %v2787
        %v2789 = vshll.u32 920167782, %v2774
        %v2790 = vshrl.u32 1326507024, %v2775
        %v2791 = vor.u32 %v2789, %v2790
        %vm2792 = vcmp.lt.s32.totalorder %v2773, 1
        %vm2793 = vcmp.lt.s32.totalorder %v2773, 2
        %vm2794 = vcmp.lt.s32.totalorder %v2773, 3
        %vm2795 = vcmp.lt.s32.totalorder %v2773, 4
        %v2796 = vsel %vm2792, %v2776, %v2779
        %v2797 = vsel %vm2795, %v2785, 2102212464
        %v2798 = vsel %vm2794, %v2782, %v2797
        %v2799 = vsel %vm2793, %v2796, %v2798
        %v2800 = vsel %vm2792, %v2779, %v2782
        %v2801 = vsel %vm2795, %v2788, 920167782
        %v2802 = vsel %vm2794, %v2785, %v2801
        %v2803 = vsel %vm2793, %v2800, %v2802
        %v2804 = vsel %vm2792, %v2782, %v2785
        %v2805 = vsel %vm2795, %v2791, 1326507024
        %v2806 = vsel %vm2794, %v2788, %v2805
        %v2807 = vsel %vm2793, %v2804, %v2806
        %v2808 = vshll.u32 %v2768, 8
        %v2809 = vmul.u32.u64.compose %v2808, %v2807
        %v2810 = vextract.low.u32 %v2809
        %v2811 = vextract.high.u32 %v2809
        %v2812 = vmul.u32.u64.compose %v2808, %v2803
        %v2813 = vextract.low.u32 %v2812
        %v2814 = vextract.high.u32 %v2812
        %v2815 = vmul.u32 %v2808, %v2799
        %v2816 = vadd.s32 %v2811, %v2813
        %vm2817 = vc.u32 %v2811, %v2813
        %v2818 = vadd.s32 %v2814, 1
        %v2819 = vsel %vm2817, %v2818, %v2814
        %v2820 = vadd.s32 %v2815, %v2819
        %v2821 = vadd.s32 %v2820, 536870912
        %v2822 = vshrl.u32 %v2821, 30
        %v2823 = vshll.u32 %v2822, 30
        %v2824 = vsub.s32 %v2820, %v2823
        %vm2825 = vcmp.lt.s32.totalorder %v2824, 0
        %v2826 = vsub.s32 0, %v2824
        %v2827 = vsel %vm2825, %v2826, %v2824
        %v2828 = vclz %v2827
        %v2829 = vsub.s32 %v2828, 2
        %vm2830 = vcmp.gt.s32.totalorder 0, %v2829
        %v2831 = vsel %vm2830, 0, %v2829
        %v2832 = vsub.s32 32, %v2831
        %v2833 = vshll.u32 %v2824, %v2831
        %v2834 = vshrl.u32 %v2816, %v2832
        %v2835 = vor.u32 %v2833, %v2834
        %v2836 = vsub.s32 4294967266, %v2831
        %v2837 = vadd.s32 %v2836, 127
        %v2838 = vshll.u32 %v2837, 23
        %v2839 = vor.u32 4788187, %v2838
        %v2840 = vand.u32 2147483647, %v2839
        %v2842 = vcvt.s32.f32 %v2835
        %v2843 = vmul.f32 %v2842, %v2840
        %v2844 = vxor.u32 %v2843, 2147483648
        %v2845 = vsel %vm2762, %v2844, %v2843
        %v2846 = vsub.s32 4, %v2822
        %v2847 = vsel %vm2762, %v2846, %v2822
        %v2848 = vsel %vm2761, %v664, %v2845
        %v2849 = vsel %vm2761, 0, %v2847
        %v2850 = vcosq.f32.pop %v2848
        %v2851 = vsinq.f32.pop %v2848
        %vm2852 = vweird.f32 %v664
        %v2853 = vadd.s32 %v2849, 3
        %v2854 = vand.u32 %v2853, 3
        %vm2855 = vcmp.lt.s32.totalorder %v2854, 2
        %vm2856 = vcmp.eq.s32.totalorder %v2854, 0
        %v2857 = vxor.u32 %v2851, 2147483648
        %v2858 = vsel %vm2856, %v2850, %v2857
        %vm2859 = vcmp.eq.s32.totalorder %v2854, 2
        %v2860 = vxor.u32 %v2850, 2147483648
        %v2861 = vsel %vm2859, %v2860, %v2851
        %v2862 = vsel %vm2855, %v2858, %v2861
        %v2863 = vsel %vm2852, nan, %v2862
        %v2864 = vand.u32 2147483647, %v665
        %vm2865 = vcmp.le.f32.partialorder %v2864, 0.7853982
        %vm2866 = vcmp.lt.s32.totalorder %v665, 0
        %v2867 = vand.u32 %v665, 2139095040
        %v2868 = vshrl.u32 %v2867, 23
        %v2869 = vsub.s32 %v2868, 127
        %v2870 = vand.u32 2147483647, %v665
        %v2871 = vand.u32 %v2870, 8388607
        %v2872 = vor.u32 %v2871, 8388608
        %v2873 = vsub.s32 0, %v2872
        %v2874 = vadd.s32 %v2869, 1
        %vm2875 = vcmp.gt.s32.totalorder %v2874, 0
        %v2876 = vsel %vm2875, %v2874, 0
        %v2877 = vshrl.u32 %v2876, 5
        %v2878 = vand.u32 %v2876, 31
        %v2879 = vsub.s32 32, %v2878
        %v2880 = vshrl.u32 683565275, %v2879
        %v2881 = vshll.u32 683565275, %v2878
        %v2882 = vshrl.u32 2475754826, %v2879
        %v2883 = vor.u32 %v2881, %v2882
        %v2884 = vshll.u32 2475754826, %v2878
        %v2885 = vshrl.u32 2131351028, %v2879
        %v2886 = vor.u32 %v2884, %v2885
        %v2887 = vshll.u32 2131351028, %v2878
        %v2888 = vshrl.u32 2102212464, %v2879
        %v2889 = vor.u32 %v2887, %v2888
        %v2890 = vshll.u32 2102212464, %v2878
        %v2891 = vshrl.u32 920167782, %v2879
        %v2892 = vor.u32 %v2890, %v2891
        %v2893 = vshll.u32 920167782, %v2878
        %v2894 = vshrl.u32 1326507024, %v2879
        %v2895 = vor.u32 %v2893, %v2894
        %vm2896 = vcmp.lt.s32.totalorder %v2877, 1
        %vm2897 = vcmp.lt.s32.totalorder %v2877, 2
        %vm2898 = vcmp.lt.s32.totalorder %v2877, 3
        %vm2899 = vcmp.lt.s32.totalorder %v2877, 4
        %v2900 = vsel %vm2896, %v2880, %v2883
        %v2901 = vsel %vm2899, %v2889, 2102212464
        %v2902 = vsel %vm2898, %v2886, %v2901
        %v2903 = vsel %vm2897, %v2900, %v2902
        %v2904 = vsel %vm2896, %v2883, %v2886
        %v2905 = vsel %vm2899, %v2892, 920167782
        %v2906 = vsel %vm2898, %v2889, %v2905
        %v2907 = vsel %vm2897, %v2904, %v2906
        %v2908 = vsel %vm2896, %v2886, %v2889
        %v2909 = vsel %vm2899, %v2895, 1326507024
        %v2910 = vsel %vm2898, %v2892, %v2909
        %v2911 = vsel %vm2897, %v2908, %v2910
        %v2912 = vshll.u32 %v2872, 8
        %v2913 = vmul.u32.u64.compose %v2912, %v2911
        %v2914 = vextract.low.u32 %v2913
        %v2915 = vextract.high.u32 %v2913
        %v2916 = vmul.u32.u64.compose %v2912, %v2907
        %v2917 = vextract.low.u32 %v2916
        %v2918 = vextract.high.u32 %v2916
        %v2919 = vmul.u32 %v2912, %v2903
        %v2920 = vadd.s32 %v2915, %v2917
        %vm2921 = vc.u32 %v2915, %v2917
        %v2922 = vadd.s32 %v2918, 1
        %v2923 = vsel %vm2921, %v2922, %v2918
        %v2924 = vadd.s32 %v2919, %v2923
        %v2925 = vadd.s32 %v2924, 536870912
        %v2926 = vshrl.u32 %v2925, 30
        %v2927 = vshll.u32 %v2926, 30
        %v2928 = vsub.s32 %v2924, %v2927
        %vm2929 = vcmp.lt.s32.totalorder %v2928, 0
        %v2930 = vsub.s32 0, %v2928
        %v2931 = vsel %vm2929, %v2930, %v2928
        %v2932 = vclz %v2931
        %v2933 = vsub.s32 %v2932, 2
        %vm2934 = vcmp.gt.s32.totalorder 0, %v2933
        %v2935 = vsel %vm2934, 0, %v2933
        %v2936 = vsub.s32 32, %v2935
        %v2937 = vshll.u32 %v2928, %v2935
        %v2938 = vshrl.u32 %v2920, %v2936
        %v2939 = vor.u32 %v2937, %v2938
        %v2940 = vsub.s32 4294967266, %v2935
        %v2941 = vadd.s32 %v2940, 127
        %v2942 = vshll.u32 %v2941, 23
        %v2943 = vor.u32 4788187, %v2942
        %v2944 = vand.u32 2147483647, %v2943
        %v2946 = vcvt.s32.f32 %v2939
        %v2947 = vmul.f32 %v2946, %v2944
        %v2948 = vxor.u32 %v2947, 2147483648
        %v2949 = vsel %vm2866, %v2948, %v2947
        %v2950 = vsub.s32 4, %v2926
        %v2951 = vsel %vm2866, %v2950, %v2926
        %v2952 = vsel %vm2865, %v665, %v2949
        %v2953 = vsel %vm2865, 0, %v2951
        %v2954 = vcosq.f32.pop %v2952
        %v2955 = vsinq.f32.pop %v2952
        %vm2956 = vweird.f32 %v665
        %v2957 = vadd.s32 %v2953, 3
        %v2958 = vand.u32 %v2957, 3
        %vm2959 = vcmp.lt.s32.totalorder %v2958, 2
        %vm2960 = vcmp.eq.s32.totalorder %v2958, 0
        %v2961 = vxor.u32 %v2955, 2147483648
        %v2962 = vsel %vm2960, %v2954, %v2961
        %vm2963 = vcmp.eq.s32.totalorder %v2958, 2
        %v2964 = vxor.u32 %v2954, 2147483648
        %v2965 = vsel %vm2963, %v2964, %v2955
        %v2966 = vsel %vm2959, %v2962, %v2965
        %v2967 = vsel %vm2956, nan, %v2966
        %v2968 = vand.u32 2147483647, %v666
        %vm2969 = vcmp.le.f32.partialorder %v2968, 0.7853982
        %vm2970 = vcmp.lt.s32.totalorder %v666, 0
        %v2971 = vand.u32 %v666, 2139095040
        %v2972 = vshrl.u32 %v2971, 23
        %v2973 = vsub.s32 %v2972, 127
        %v2974 = vand.u32 2147483647, %v666
        %v2975 = vand.u32 %v2974, 8388607
        %v2976 = vor.u32 %v2975, 8388608
        %v2977 = vsub.s32 0, %v2976
        %v2978 = vadd.s32 %v2973, 1
        %vm2979 = vcmp.gt.s32.totalorder %v2978, 0
        %v2980 = vsel %vm2979, %v2978, 0
        %v2981 = vshrl.u32 %v2980, 5
        %v2982 = vand.u32 %v2980, 31
        %v2983 = vsub.s32 32, %v2982
        %v2984 = vshrl.u32 683565275, %v2983
        %v2985 = vshll.u32 683565275, %v2982
        %v2986 = vshrl.u32 2475754826, %v2983
        %v2987 = vor.u32 %v2985, %v2986
        %v2988 = vshll.u32 2475754826, %v2982
        %v2989 = vshrl.u32 2131351028, %v2983
        %v2990 = vor.u32 %v2988, %v2989
        %v2991 = vshll.u32 2131351028, %v2982
        %v2992 = vshrl.u32 2102212464, %v2983
        %v2993 = vor.u32 %v2991, %v2992
        %v2994 = vshll.u32 2102212464, %v2982
        %v2995 = vshrl.u32 920167782, %v2983
        %v2996 = vor.u32 %v2994, %v2995
        %v2997 = vshll.u32 920167782, %v2982
        %v2998 = vshrl.u32 1326507024, %v2983
        %v2999 = vor.u32 %v2997, %v2998
        %vm3000 = vcmp.lt.s32.totalorder %v2981, 1
        %vm3001 = vcmp.lt.s32.totalorder %v2981, 2
        %vm3002 = vcmp.lt.s32.totalorder %v2981, 3
        %vm3003 = vcmp.lt.s32.totalorder %v2981, 4
        %v3004 = vsel %vm3000, %v2984, %v2987
        %v3005 = vsel %vm3003, %v2993, 2102212464
        %v3006 = vsel %vm3002, %v2990, %v3005
        %v3007 = vsel %vm3001, %v3004, %v3006
        %v3008 = vsel %vm3000, %v2987, %v2990
        %v3009 = vsel %vm3003, %v2996, 920167782
        %v3010 = vsel %vm3002, %v2993, %v3009
        %v3011 = vsel %vm3001, %v3008, %v3010
        %v3012 = vsel %vm3000, %v2990, %v2993
        %v3013 = vsel %vm3003, %v2999, 1326507024
        %v3014 = vsel %vm3002, %v2996, %v3013
        %v3015 = vsel %vm3001, %v3012, %v3014
        %v3016 = vshll.u32 %v2976, 8
        %v3017 = vmul.u32.u64.compose %v3016, %v3015
        %v3018 = vextract.low.u32 %v3017
        %v3019 = vextract.high.u32 %v3017
        %v3020 = vmul.u32.u64.compose %v3016, %v3011
        %v3021 = vextract.low.u32 %v3020
        %v3022 = vextract.high.u32 %v3020
        %v3023 = vmul.u32 %v3016, %v3007
        %v3024 = vadd.s32 %v3019, %v3021
        %vm3025 = vc.u32 %v3019, %v3021
        %v3026 = vadd.s32 %v3022, 1
        %v3027 = vsel %vm3025, %v3026, %v3022
        %v3028 = vadd.s32 %v3023, %v3027
        %v3029 = vadd.s32 %v3028, 536870912
        %v3030 = vshrl.u32 %v3029, 30
        %v3031 = vshll.u32 %v3030, 30
        %v3032 = vsub.s32 %v3028, %v3031
        %vm3033 = vcmp.lt.s32.totalorder %v3032, 0
        %v3034 = vsub.s32 0, %v3032
        %v3035 = vsel %vm3033, %v3034, %v3032
        %v3036 = vclz %v3035
        %v3037 = vsub.s32 %v3036, 2
        %vm3038 = vcmp.gt.s32.totalorder 0, %v3037
        %v3039 = vsel %vm3038, 0, %v3037
        %v3040 = vsub.s32 32, %v3039
        %v3041 = vshll.u32 %v3032, %v3039
        %v3042 = vshrl.u32 %v3024, %v3040
        %v3043 = vor.u32 %v3041, %v3042
        %v3044 = vsub.s32 4294967266, %v3039
        %v3045 = vadd.s32 %v3044, 127
        %v3046 = vshll.u32 %v3045, 23
        %v3047 = vor.u32 4788187, %v3046
        %v3048 = vand.u32 2147483647, %v3047
        %v3050 = vcvt.s32.f32 %v3043
        %v3051 = vmul.f32 %v3050, %v3048
        %v3052 = vxor.u32 %v3051, 2147483648
        %v3053 = vsel %vm2970, %v3052, %v3051
        %v3054 = vsub.s32 4, %v3030
        %v3055 = vsel %vm2970, %v3054, %v3030
        %v3056 = vsel %vm2969, %v666, %v3053
        %v3057 = vsel %vm2969, 0, %v3055
        %v3058 = vcosq.f32.pop %v3056
        %v3059 = vsinq.f32.pop %v3056
        %vm3060 = vweird.f32 %v666
        %v3061 = vadd.s32 %v3057, 3
        %v3062 = vand.u32 %v3061, 3
        %vm3063 = vcmp.lt.s32.totalorder %v3062, 2
        %vm3064 = vcmp.eq.s32.totalorder %v3062, 0
        %v3065 = vxor.u32 %v3059, 2147483648
        %v3066 = vsel %vm3064, %v3058, %v3065
        %vm3067 = vcmp.eq.s32.totalorder %v3062, 2
        %v3068 = vxor.u32 %v3058, 2147483648
        %v3069 = vsel %vm3067, %v3068, %v3059
        %v3070 = vsel %vm3063, %v3066, %v3069
        %v3071 = vsel %vm3060, nan, %v3070
        %v3072 = vand.u32 2147483647, %v667
        %vm3073 = vcmp.le.f32.partialorder %v3072, 0.7853982
        %vm3074 = vcmp.lt.s32.totalorder %v667, 0
        %v3075 = vand.u32 %v667, 2139095040
        %v3076 = vshrl.u32 %v3075, 23
        %v3077 = vsub.s32 %v3076, 127
        %v3078 = vand.u32 2147483647, %v667
        %v3079 = vand.u32 %v3078, 8388607
        %v3080 = vor.u32 %v3079, 8388608
        %v3081 = vsub.s32 0, %v3080
        %v3082 = vadd.s32 %v3077, 1
        %vm3083 = vcmp.gt.s32.totalorder %v3082, 0
        %v3084 = vsel %vm3083, %v3082, 0
        %v3085 = vshrl.u32 %v3084, 5
        %v3086 = vand.u32 %v3084, 31
        %v3087 = vsub.s32 32, %v3086
        %v3088 = vshrl.u32 683565275, %v3087
        %v3089 = vshll.u32 683565275, %v3086
        %v3090 = vshrl.u32 2475754826, %v3087
        %v3091 = vor.u32 %v3089, %v3090
        %v3092 = vshll.u32 2475754826, %v3086
        %v3093 = vshrl.u32 2131351028, %v3087
        %v3094 = vor.u32 %v3092, %v3093
        %v3095 = vshll.u32 2131351028, %v3086
        %v3096 = vshrl.u32 2102212464, %v3087
        %v3097 = vor.u32 %v3095, %v3096
        %v3098 = vshll.u32 2102212464, %v3086
        %v3099 = vshrl.u32 920167782, %v3087
        %v3100 = vor.u32 %v3098, %v3099
        %v3101 = vshll.u32 920167782, %v3086
        %v3102 = vshrl.u32 1326507024, %v3087
        %v3103 = vor.u32 %v3101, %v3102
        %vm3104 = vcmp.lt.s32.totalorder %v3085, 1
        %vm3105 = vcmp.lt.s32.totalorder %v3085, 2
        %vm3106 = vcmp.lt.s32.totalorder %v3085, 3
        %vm3107 = vcmp.lt.s32.totalorder %v3085, 4
        %v3108 = vsel %vm3104, %v3088, %v3091
        %v3109 = vsel %vm3107, %v3097, 2102212464
        %v3110 = vsel %vm3106, %v3094, %v3109
        %v3111 = vsel %vm3105, %v3108, %v3110
        %v3112 = vsel %vm3104, %v3091, %v3094
        %v3113 = vsel %vm3107, %v3100, 920167782
        %v3114 = vsel %vm3106, %v3097, %v3113
        %v3115 = vsel %vm3105, %v3112, %v3114
        %v3116 = vsel %vm3104, %v3094, %v3097
        %v3117 = vsel %vm3107, %v3103, 1326507024
        %v3118 = vsel %vm3106, %v3100, %v3117
        %v3119 = vsel %vm3105, %v3116, %v3118
        %v3120 = vshll.u32 %v3080, 8
        %v3121 = vmul.u32.u64.compose %v3120, %v3119
        %v3122 = vextract.low.u32 %v3121
        %v3123 = vextract.high.u32 %v3121
        %v3124 = vmul.u32.u64.compose %v3120, %v3115
        %v3125 = vextract.low.u32 %v3124
        %v3126 = vextract.high.u32 %v3124
        %v3127 = vmul.u32 %v3120, %v3111
        %v3128 = vadd.s32 %v3123, %v3125
        %vm3129 = vc.u32 %v3123, %v3125
        %v3130 = vadd.s32 %v3126, 1
        %v3131 = vsel %vm3129, %v3130, %v3126
        %v3132 = vadd.s32 %v3127, %v3131
        %v3133 = vadd.s32 %v3132, 536870912
        %v3134 = vshrl.u32 %v3133, 30
        %v3135 = vshll.u32 %v3134, 30
        %v3136 = vsub.s32 %v3132, %v3135
        %vm3137 = vcmp.lt.s32.totalorder %v3136, 0
        %v3138 = vsub.s32 0, %v3136
        %v3139 = vsel %vm3137, %v3138, %v3136
        %v3140 = vclz %v3139
        %v3141 = vsub.s32 %v3140, 2
        %vm3142 = vcmp.gt.s32.totalorder 0, %v3141
        %v3143 = vsel %vm3142, 0, %v3141
        %v3144 = vsub.s32 32, %v3143
        %v3145 = vshll.u32 %v3136, %v3143
        %v3146 = vshrl.u32 %v3128, %v3144
        %v3147 = vor.u32 %v3145, %v3146
        %v3148 = vsub.s32 4294967266, %v3143
        %v3149 = vadd.s32 %v3148, 127
        %v3150 = vshll.u32 %v3149, 23
        %v3151 = vor.u32 4788187, %v3150
        %v3152 = vand.u32 2147483647, %v3151
        %v3154 = vcvt.s32.f32 %v3147
        %v3155 = vmul.f32 %v3154, %v3152
        %v3156 = vxor.u32 %v3155, 2147483648
        %v3157 = vsel %vm3074, %v3156, %v3155
        %v3158 = vsub.s32 4, %v3134
        %v3159 = vsel %vm3074, %v3158, %v3134
        %v3160 = vsel %vm3073, %v667, %v3157
        %v3161 = vsel %vm3073, 0, %v3159
        %v3162 = vcosq.f32.pop %v3160
        %v3163 = vsinq.f32.pop %v3160
        %vm3164 = vweird.f32 %v667
        %v3165 = vadd.s32 %v3161, 3
        %v3166 = vand.u32 %v3165, 3
        %vm3167 = vcmp.lt.s32.totalorder %v3166, 2
        %vm3168 = vcmp.eq.s32.totalorder %v3166, 0
        %v3169 = vxor.u32 %v3163, 2147483648
        %v3170 = vsel %vm3168, %v3162, %v3169
        %vm3171 = vcmp.eq.s32.totalorder %v3166, 2
        %v3172 = vxor.u32 %v3162, 2147483648
        %v3173 = vsel %vm3171, %v3172, %v3163
        %v3174 = vsel %vm3167, %v3170, %v3173
        %v3175 = vsel %vm3164, nan, %v3174
        %v3176 = vand.u32 2147483647, %v668
        %vm3177 = vcmp.le.f32.partialorder %v3176, 0.7853982
        %vm3178 = vcmp.lt.s32.totalorder %v668, 0
        %v3179 = vand.u32 %v668, 2139095040
        %v3180 = vshrl.u32 %v3179, 23
        %v3181 = vsub.s32 %v3180, 127
        %v3182 = vand.u32 2147483647, %v668
        %v3183 = vand.u32 %v3182, 8388607
        %v3184 = vor.u32 %v3183, 8388608
        %v3185 = vsub.s32 0, %v3184
        %v3186 = vadd.s32 %v3181, 1
        %vm3187 = vcmp.gt.s32.totalorder %v3186, 0
        %v3188 = vsel %vm3187, %v3186, 0
        %v3189 = vshrl.u32 %v3188, 5
        %v3190 = vand.u32 %v3188, 31
        %v3191 = vsub.s32 32, %v3190
        %v3192 = vshrl.u32 683565275, %v3191
        %v3193 = vshll.u32 683565275, %v3190
        %v3194 = vshrl.u32 2475754826, %v3191
        %v3195 = vor.u32 %v3193, %v3194
        %v3196 = vshll.u32 2475754826, %v3190
        %v3197 = vshrl.u32 2131351028, %v3191
        %v3198 = vor.u32 %v3196, %v3197
        %v3199 = vshll.u32 2131351028, %v3190
        %v3200 = vshrl.u32 2102212464, %v3191
        %v3201 = vor.u32 %v3199, %v3200
        %v3202 = vshll.u32 2102212464, %v3190
        %v3203 = vshrl.u32 920167782, %v3191
        %v3204 = vor.u32 %v3202, %v3203
        %v3205 = vshll.u32 920167782, %v3190
        %v3206 = vshrl.u32 1326507024, %v3191
        %v3207 = vor.u32 %v3205, %v3206
        %vm3208 = vcmp.lt.s32.totalorder %v3189, 1
        %vm3209 = vcmp.lt.s32.totalorder %v3189, 2
        %vm3210 = vcmp.lt.s32.totalorder %v3189, 3
        %vm3211 = vcmp.lt.s32.totalorder %v3189, 4
        %v3212 = vsel %vm3208, %v3192, %v3195
        %v3213 = vsel %vm3211, %v3201, 2102212464
        %v3214 = vsel %vm3210, %v3198, %v3213
        %v3215 = vsel %vm3209, %v3212, %v3214
        %v3216 = vsel %vm3208, %v3195, %v3198
        %v3217 = vsel %vm3211, %v3204, 920167782
        %v3218 = vsel %vm3210, %v3201, %v3217
        %v3219 = vsel %vm3209, %v3216, %v3218
        %v3220 = vsel %vm3208, %v3198, %v3201
        %v3221 = vsel %vm3211, %v3207, 1326507024
        %v3222 = vsel %vm3210, %v3204, %v3221
        %v3223 = vsel %vm3209, %v3220, %v3222
        %v3224 = vshll.u32 %v3184, 8
        %v3225 = vmul.u32.u64.compose %v3224, %v3223
        %v3226 = vextract.low.u32 %v3225
        %v3227 = vextract.high.u32 %v3225
        %v3228 = vmul.u32.u64.compose %v3224, %v3219
        %v3229 = vextract.low.u32 %v3228
        %v3230 = vextract.high.u32 %v3228
        %v3231 = vmul.u32 %v3224, %v3215
        %v3232 = vadd.s32 %v3227, %v3229
        %vm3233 = vc.u32 %v3227, %v3229
        %v3234 = vadd.s32 %v3230, 1
        %v3235 = vsel %vm3233, %v3234, %v3230
        %v3236 = vadd.s32 %v3231, %v3235
        %v3237 = vadd.s32 %v3236, 536870912
        %v3238 = vshrl.u32 %v3237, 30
        %v3239 = vshll.u32 %v3238, 30
        %v3240 = vsub.s32 %v3236, %v3239
        %vm3241 = vcmp.lt.s32.totalorder %v3240, 0
        %v3242 = vsub.s32 0, %v3240
        %v3243 = vsel %vm3241, %v3242, %v3240
        %v3244 = vclz %v3243
        %v3245 = vsub.s32 %v3244, 2
        %vm3246 = vcmp.gt.s32.totalorder 0, %v3245
        %v3247 = vsel %vm3246, 0, %v3245
        %v3248 = vsub.s32 32, %v3247
        %v3249 = vshll.u32 %v3240, %v3247
        %v3250 = vshrl.u32 %v3232, %v3248
        %v3251 = vor.u32 %v3249, %v3250
        %v3252 = vsub.s32 4294967266, %v3247
        %v3253 = vadd.s32 %v3252, 127
        %v3254 = vshll.u32 %v3253, 23
        %v3255 = vor.u32 4788187, %v3254
        %v3256 = vand.u32 2147483647, %v3255
        %v3258 = vcvt.s32.f32 %v3251
        %v3259 = vmul.f32 %v3258, %v3256
        %v3260 = vxor.u32 %v3259, 2147483648
        %v3261 = vsel %vm3178, %v3260, %v3259
        %v3262 = vsub.s32 4, %v3238
        %v3263 = vsel %vm3178, %v3262, %v3238
        %v3264 = vsel %vm3177, %v668, %v3261
        %v3265 = vsel %vm3177, 0, %v3263
        %v3266 = vcosq.f32.pop %v3264
        %v3267 = vsinq.f32.pop %v3264
        %vm3268 = vweird.f32 %v668
        %v3269 = vadd.s32 %v3265, 3
        %v3270 = vand.u32 %v3269, 3
        %vm3271 = vcmp.lt.s32.totalorder %v3270, 2
        %vm3272 = vcmp.eq.s32.totalorder %v3270, 0
        %v3273 = vxor.u32 %v3267, 2147483648
        %v3274 = vsel %vm3272, %v3266, %v3273
        %vm3275 = vcmp.eq.s32.totalorder %v3270, 2
        %v3276 = vxor.u32 %v3266, 2147483648
        %v3277 = vsel %vm3275, %v3276, %v3267
        %v3278 = vsel %vm3271, %v3274, %v3277
        %v3279 = vsel %vm3268, nan, %v3278
        %v3280 = vand.u32 2147483647, %v669
        %vm3281 = vcmp.le.f32.partialorder %v3280, 0.7853982
        %vm3282 = vcmp.lt.s32.totalorder %v669, 0
        %v3283 = vand.u32 %v669, 2139095040
        %v3284 = vshrl.u32 %v3283, 23
        %v3285 = vsub.s32 %v3284, 127
        %v3286 = vand.u32 2147483647, %v669
        %v3287 = vand.u32 %v3286, 8388607
        %v3288 = vor.u32 %v3287, 8388608
        %v3289 = vsub.s32 0, %v3288
        %v3290 = vadd.s32 %v3285, 1
        %vm3291 = vcmp.gt.s32.totalorder %v3290, 0
        %v3292 = vsel %vm3291, %v3290, 0
        %v3293 = vshrl.u32 %v3292, 5
        %v3294 = vand.u32 %v3292, 31
        %v3295 = vsub.s32 32, %v3294
        %v3296 = vshrl.u32 683565275, %v3295
        %v3297 = vshll.u32 683565275, %v3294
        %v3298 = vshrl.u32 2475754826, %v3295
        %v3299 = vor.u32 %v3297, %v3298
        %v3300 = vshll.u32 2475754826, %v3294
        %v3301 = vshrl.u32 2131351028, %v3295
        %v3302 = vor.u32 %v3300, %v3301
        %v3303 = vshll.u32 2131351028, %v3294
        %v3304 = vshrl.u32 2102212464, %v3295
        %v3305 = vor.u32 %v3303, %v3304
        %v3306 = vshll.u32 2102212464, %v3294
        %v3307 = vshrl.u32 920167782, %v3295
        %v3308 = vor.u32 %v3306, %v3307
        %v3309 = vshll.u32 920167782, %v3294
        %v3310 = vshrl.u32 1326507024, %v3295
        %v3311 = vor.u32 %v3309, %v3310
        %vm3312 = vcmp.lt.s32.totalorder %v3293, 1
        %vm3313 = vcmp.lt.s32.totalorder %v3293, 2
        %vm3314 = vcmp.lt.s32.totalorder %v3293, 3
        %vm3315 = vcmp.lt.s32.totalorder %v3293, 4
        %v3316 = vsel %vm3312, %v3296, %v3299
        %v3317 = vsel %vm3315, %v3305, 2102212464
        %v3318 = vsel %vm3314, %v3302, %v3317
        %v3319 = vsel %vm3313, %v3316, %v3318
        %v3320 = vsel %vm3312, %v3299, %v3302
        %v3321 = vsel %vm3315, %v3308, 920167782
        %v3322 = vsel %vm3314, %v3305, %v3321
        %v3323 = vsel %vm3313, %v3320, %v3322
        %v3324 = vsel %vm3312, %v3302, %v3305
        %v3325 = vsel %vm3315, %v3311, 1326507024
        %v3326 = vsel %vm3314, %v3308, %v3325
        %v3327 = vsel %vm3313, %v3324, %v3326
        %v3328 = vshll.u32 %v3288, 8
        %v3329 = vmul.u32.u64.compose %v3328, %v3327
        %v3330 = vextract.low.u32 %v3329
        %v3331 = vextract.high.u32 %v3329
        %v3332 = vmul.u32.u64.compose %v3328, %v3323
        %v3333 = vextract.low.u32 %v3332
        %v3334 = vextract.high.u32 %v3332
        %v3335 = vmul.u32 %v3328, %v3319
        %v3336 = vadd.s32 %v3331, %v3333
        %vm3337 = vc.u32 %v3331, %v3333
        %v3338 = vadd.s32 %v3334, 1
        %v3339 = vsel %vm3337, %v3338, %v3334
        %v3340 = vadd.s32 %v3335, %v3339
        %v3341 = vadd.s32 %v3340, 536870912
        %v3342 = vshrl.u32 %v3341, 30
        %v3343 = vshll.u32 %v3342, 30
        %v3344 = vsub.s32 %v3340, %v3343
        %vm3345 = vcmp.lt.s32.totalorder %v3344, 0
        %v3346 = vsub.s32 0, %v3344
        %v3347 = vsel %vm3345, %v3346, %v3344
        %v3348 = vclz %v3347
        %v3349 = vsub.s32 %v3348, 2
        %vm3350 = vcmp.gt.s32.totalorder 0, %v3349
        %v3351 = vsel %vm3350, 0, %v3349
        %v3352 = vsub.s32 32, %v3351
        %v3353 = vshll.u32 %v3344, %v3351
        %v3354 = vshrl.u32 %v3336, %v3352
        %v3355 = vor.u32 %v3353, %v3354
        %v3356 = vsub.s32 4294967266, %v3351
        %v3357 = vadd.s32 %v3356, 127
        %v3358 = vshll.u32 %v3357, 23
        %v3359 = vor.u32 4788187, %v3358
        %v3360 = vand.u32 2147483647, %v3359
        %v3362 = vcvt.s32.f32 %v3355
        %v3363 = vmul.f32 %v3362, %v3360
        %v3364 = vxor.u32 %v3363, 2147483648
        %v3365 = vsel %vm3282, %v3364, %v3363
        %v3366 = vsub.s32 4, %v3342
        %v3367 = vsel %vm3282, %v3366, %v3342
        %v3368 = vsel %vm3281, %v669, %v3365
        %v3369 = vsel %vm3281, 0, %v3367
        %v3370 = vcosq.f32.pop %v3368
        %v3371 = vsinq.f32.pop %v3368
        %vm3372 = vweird.f32 %v669
        %v3373 = vadd.s32 %v3369, 3
        %v3374 = vand.u32 %v3373, 3
        %vm3375 = vcmp.lt.s32.totalorder %v3374, 2
        %vm3376 = vcmp.eq.s32.totalorder %v3374, 0
        %v3377 = vxor.u32 %v3371, 2147483648
        %v3378 = vsel %vm3376, %v3370, %v3377
        %vm3379 = vcmp.eq.s32.totalorder %v3374, 2
        %v3380 = vxor.u32 %v3370, 2147483648
        %v3381 = vsel %vm3379, %v3380, %v3371
        %v3382 = vsel %vm3375, %v3378, %v3381
        %v3383 = vsel %vm3372, nan, %v3382
        %v3384 = vand.u32 2147483647, %v670
        %vm3385 = vcmp.le.f32.partialorder %v3384, 0.7853982
        %vm3386 = vcmp.lt.s32.totalorder %v670, 0
        %v3387 = vand.u32 %v670, 2139095040
        %v3388 = vshrl.u32 %v3387, 23
        %v3389 = vsub.s32 %v3388, 127
        %v3390 = vand.u32 2147483647, %v670
        %v3391 = vand.u32 %v3390, 8388607
        %v3392 = vor.u32 %v3391, 8388608
        %v3393 = vsub.s32 0, %v3392
        %v3394 = vadd.s32 %v3389, 1
        %vm3395 = vcmp.gt.s32.totalorder %v3394, 0
        %v3396 = vsel %vm3395, %v3394, 0
        %v3397 = vshrl.u32 %v3396, 5
        %v3398 = vand.u32 %v3396, 31
        %v3399 = vsub.s32 32, %v3398
        %v3400 = vshrl.u32 683565275, %v3399
        %v3401 = vshll.u32 683565275, %v3398
        %v3402 = vshrl.u32 2475754826, %v3399
        %v3403 = vor.u32 %v3401, %v3402
        %v3404 = vshll.u32 2475754826, %v3398
        %v3405 = vshrl.u32 2131351028, %v3399
        %v3406 = vor.u32 %v3404, %v3405
        %v3407 = vshll.u32 2131351028, %v3398
        %v3408 = vshrl.u32 2102212464, %v3399
        %v3409 = vor.u32 %v3407, %v3408
        %v3410 = vshll.u32 2102212464, %v3398
        %v3411 = vshrl.u32 920167782, %v3399
        %v3412 = vor.u32 %v3410, %v3411
        %v3413 = vshll.u32 920167782, %v3398
        %v3414 = vshrl.u32 1326507024, %v3399
        %v3415 = vor.u32 %v3413, %v3414
        %vm3416 = vcmp.lt.s32.totalorder %v3397, 1
        %vm3417 = vcmp.lt.s32.totalorder %v3397, 2
        %vm3418 = vcmp.lt.s32.totalorder %v3397, 3
        %vm3419 = vcmp.lt.s32.totalorder %v3397, 4
        %v3420 = vsel %vm3416, %v3400, %v3403
        %v3421 = vsel %vm3419, %v3409, 2102212464
        %v3422 = vsel %vm3418, %v3406, %v3421
        %v3423 = vsel %vm3417, %v3420, %v3422
        %v3424 = vsel %vm3416, %v3403, %v3406
        %v3425 = vsel %vm3419, %v3412, 920167782
        %v3426 = vsel %vm3418, %v3409, %v3425
        %v3427 = vsel %vm3417, %v3424, %v3426
        %v3428 = vsel %vm3416, %v3406, %v3409
        %v3429 = vsel %vm3419, %v3415, 1326507024
        %v3430 = vsel %vm3418, %v3412, %v3429
        %v3431 = vsel %vm3417, %v3428, %v3430
        %v3432 = vshll.u32 %v3392, 8
        %v3433 = vmul.u32.u64.compose %v3432, %v3431
        %v3434 = vextract.low.u32 %v3433
        %v3435 = vextract.high.u32 %v3433
        %v3436 = vmul.u32.u64.compose %v3432, %v3427
        %v3437 = vextract.low.u32 %v3436
        %v3438 = vextract.high.u32 %v3436
        %v3439 = vmul.u32 %v3432, %v3423
        %v3440 = vadd.s32 %v3435, %v3437
        %vm3441 = vc.u32 %v3435, %v3437
        %v3442 = vadd.s32 %v3438, 1
        %v3443 = vsel %vm3441, %v3442, %v3438
        %v3444 = vadd.s32 %v3439, %v3443
        %v3445 = vadd.s32 %v3444, 536870912
        %v3446 = vshrl.u32 %v3445, 30
        %v3447 = vshll.u32 %v3446, 30
        %v3448 = vsub.s32 %v3444, %v3447
        %vm3449 = vcmp.lt.s32.totalorder %v3448, 0
        %v3450 = vsub.s32 0, %v3448
        %v3451 = vsel %vm3449, %v3450, %v3448
        %v3452 = vclz %v3451
        %v3453 = vsub.s32 %v3452, 2
        %vm3454 = vcmp.gt.s32.totalorder 0, %v3453
        %v3455 = vsel %vm3454, 0, %v3453
        %v3456 = vsub.s32 32, %v3455
        %v3457 = vshll.u32 %v3448, %v3455
        %v3458 = vshrl.u32 %v3440, %v3456
        %v3459 = vor.u32 %v3457, %v3458
        %v3460 = vsub.s32 4294967266, %v3455
        %v3461 = vadd.s32 %v3460, 127
        %v3462 = vshll.u32 %v3461, 23
        %v3463 = vor.u32 4788187, %v3462
        %v3464 = vand.u32 2147483647, %v3463
        %v3466 = vcvt.s32.f32 %v3459
        %v3467 = vmul.f32 %v3466, %v3464
        %v3468 = vxor.u32 %v3467, 2147483648
        %v3469 = vsel %vm3386, %v3468, %v3467
        %v3470 = vsub.s32 4, %v3446
        %v3471 = vsel %vm3386, %v3470, %v3446
        %v3472 = vsel %vm3385, %v670, %v3469
        %v3473 = vsel %vm3385, 0, %v3471
        %v3474 = vcosq.f32.pop %v3472
        %v3475 = vsinq.f32.pop %v3472
        %vm3476 = vweird.f32 %v670
        %v3477 = vadd.s32 %v3473, 3
        %v3478 = vand.u32 %v3477, 3
        %vm3479 = vcmp.lt.s32.totalorder %v3478, 2
        %vm3480 = vcmp.eq.s32.totalorder %v3478, 0
        %v3481 = vxor.u32 %v3475, 2147483648
        %v3482 = vsel %vm3480, %v3474, %v3481
        %vm3483 = vcmp.eq.s32.totalorder %v3478, 2
        %v3484 = vxor.u32 %v3474, 2147483648
        %v3485 = vsel %vm3483, %v3484, %v3475
        %v3486 = vsel %vm3479, %v3482, %v3485
        %v3487 = vsel %vm3476, nan, %v3486
        %v3488 = vand.u32 2147483647, %v671
        %vm3489 = vcmp.le.f32.partialorder %v3488, 0.7853982
        %vm3490 = vcmp.lt.s32.totalorder %v671, 0
        %v3491 = vand.u32 %v671, 2139095040
        %v3492 = vshrl.u32 %v3491, 23
        %v3493 = vsub.s32 %v3492, 127
        %v3494 = vand.u32 2147483647, %v671
        %v3495 = vand.u32 %v3494, 8388607
        %v3496 = vor.u32 %v3495, 8388608
        %v3497 = vsub.s32 0, %v3496
        %v3498 = vadd.s32 %v3493, 1
        %vm3499 = vcmp.gt.s32.totalorder %v3498, 0
        %v3500 = vsel %vm3499, %v3498, 0
        %v3501 = vshrl.u32 %v3500, 5
        %v3502 = vand.u32 %v3500, 31
        %v3503 = vsub.s32 32, %v3502
        %v3504 = vshrl.u32 683565275, %v3503
        %v3505 = vshll.u32 683565275, %v3502
        %v3506 = vshrl.u32 2475754826, %v3503
        %v3507 = vor.u32 %v3505, %v3506
        %v3508 = vshll.u32 2475754826, %v3502
        %v3509 = vshrl.u32 2131351028, %v3503
        %v3510 = vor.u32 %v3508, %v3509
        %v3511 = vshll.u32 2131351028, %v3502
        %v3512 = vshrl.u32 2102212464, %v3503
        %v3513 = vor.u32 %v3511, %v3512
        %v3514 = vshll.u32 2102212464, %v3502
        %v3515 = vshrl.u32 920167782, %v3503
        %v3516 = vor.u32 %v3514, %v3515
        %v3517 = vshll.u32 920167782, %v3502
        %v3518 = vshrl.u32 1326507024, %v3503
        %v3519 = vor.u32 %v3517, %v3518
        %vm3520 = vcmp.lt.s32.totalorder %v3501, 1
        %vm3521 = vcmp.lt.s32.totalorder %v3501, 2
        %vm3522 = vcmp.lt.s32.totalorder %v3501, 3
        %vm3523 = vcmp.lt.s32.totalorder %v3501, 4
        %v3524 = vsel %vm3520, %v3504, %v3507
        %v3525 = vsel %vm3523, %v3513, 2102212464
        %v3526 = vsel %vm3522, %v3510, %v3525
        %v3527 = vsel %vm3521, %v3524, %v3526
        %v3528 = vsel %vm3520, %v3507, %v3510
        %v3529 = vsel %vm3523, %v3516, 920167782
        %v3530 = vsel %vm3522, %v3513, %v3529
        %v3531 = vsel %vm3521, %v3528, %v3530
        %v3532 = vsel %vm3520, %v3510, %v3513
        %v3533 = vsel %vm3523, %v3519, 1326507024
        %v3534 = vsel %vm3522, %v3516, %v3533
        %v3535 = vsel %vm3521, %v3532, %v3534
        %v3536 = vshll.u32 %v3496, 8
        %v3537 = vmul.u32.u64.compose %v3536, %v3535
        %v3538 = vextract.low.u32 %v3537
        %v3539 = vextract.high.u32 %v3537
        %v3540 = vmul.u32.u64.compose %v3536, %v3531
        %v3541 = vextract.low.u32 %v3540
        %v3542 = vextract.high.u32 %v3540
        %v3543 = vmul.u32 %v3536, %v3527
        %v3544 = vadd.s32 %v3539, %v3541
        %vm3545 = vc.u32 %v3539, %v3541
        %v3546 = vadd.s32 %v3542, 1
        %v3547 = vsel %vm3545, %v3546, %v3542
        %v3548 = vadd.s32 %v3543, %v3547
        %v3549 = vadd.s32 %v3548, 536870912
        %v3550 = vshrl.u32 %v3549, 30
        %v3551 = vshll.u32 %v3550, 30
        %v3552 = vsub.s32 %v3548, %v3551
        %vm3553 = vcmp.lt.s32.totalorder %v3552, 0
        %v3554 = vsub.s32 0, %v3552
        %v3555 = vsel %vm3553, %v3554, %v3552
        %v3556 = vclz %v3555
        %v3557 = vsub.s32 %v3556, 2
        %vm3558 = vcmp.gt.s32.totalorder 0, %v3557
        %v3559 = vsel %vm3558, 0, %v3557
        %v3560 = vsub.s32 32, %v3559
        %v3561 = vshll.u32 %v3552, %v3559
        %v3562 = vshrl.u32 %v3544, %v3560
        %v3563 = vor.u32 %v3561, %v3562
        %v3564 = vsub.s32 4294967266, %v3559
        %v3565 = vadd.s32 %v3564, 127
        %v3566 = vshll.u32 %v3565, 23
        %v3567 = vor.u32 4788187, %v3566
        %v3568 = vand.u32 2147483647, %v3567
        %v3570 = vcvt.s32.f32 %v3563
        %v3571 = vmul.f32 %v3570, %v3568
        %v3572 = vxor.u32 %v3571, 2147483648
        %v3573 = vsel %vm3490, %v3572, %v3571
        %v3574 = vsub.s32 4, %v3550
        %v3575 = vsel %vm3490, %v3574, %v3550
        %v3576 = vsel %vm3489, %v671, %v3573
        %v3577 = vsel %vm3489, 0, %v3575
        %v3578 = vcosq.f32.pop %v3576
        %v3579 = vsinq.f32.pop %v3576
        %vm3580 = vweird.f32 %v671
        %v3581 = vadd.s32 %v3577, 3
        %v3582 = vand.u32 %v3581, 3
        %vm3583 = vcmp.lt.s32.totalorder %v3582, 2
        %vm3584 = vcmp.eq.s32.totalorder %v3582, 0
        %v3585 = vxor.u32 %v3579, 2147483648
        %v3586 = vsel %vm3584, %v3578, %v3585
        %vm3587 = vcmp.eq.s32.totalorder %v3582, 2
        %v3588 = vxor.u32 %v3578, 2147483648
        %v3589 = vsel %vm3587, %v3588, %v3579
        %v3590 = vsel %vm3583, %v3586, %v3589
        %v3591 = vsel %vm3580, nan, %v3590
        %v3592 = vand.u32 2147483647, %v672
        %vm3593 = vcmp.le.f32.partialorder %v3592, 0.7853982
        %vm3594 = vcmp.lt.s32.totalorder %v672, 0
        %v3595 = vand.u32 %v672, 2139095040
        %v3596 = vshrl.u32 %v3595, 23
        %v3597 = vsub.s32 %v3596, 127
        %v3598 = vand.u32 2147483647, %v672
        %v3599 = vand.u32 %v3598, 8388607
        %v3600 = vor.u32 %v3599, 8388608
        %v3601 = vsub.s32 0, %v3600
        %v3602 = vadd.s32 %v3597, 1
        %vm3603 = vcmp.gt.s32.totalorder %v3602, 0
        %v3604 = vsel %vm3603, %v3602, 0
        %v3605 = vshrl.u32 %v3604, 5
        %v3606 = vand.u32 %v3604, 31
        %v3607 = vsub.s32 32, %v3606
        %v3608 = vshrl.u32 683565275, %v3607
        %v3609 = vshll.u32 683565275, %v3606
        %v3610 = vshrl.u32 2475754826, %v3607
        %v3611 = vor.u32 %v3609, %v3610
        %v3612 = vshll.u32 2475754826, %v3606
        %v3613 = vshrl.u32 2131351028, %v3607
        %v3614 = vor.u32 %v3612, %v3613
        %v3615 = vshll.u32 2131351028, %v3606
        %v3616 = vshrl.u32 2102212464, %v3607
        %v3617 = vor.u32 %v3615, %v3616
        %v3618 = vshll.u32 2102212464, %v3606
        %v3619 = vshrl.u32 920167782, %v3607
        %v3620 = vor.u32 %v3618, %v3619
        %v3621 = vshll.u32 920167782, %v3606
        %v3622 = vshrl.u32 1326507024, %v3607
        %v3623 = vor.u32 %v3621, %v3622
        %vm3624 = vcmp.lt.s32.totalorder %v3605, 1
        %vm3625 = vcmp.lt.s32.totalorder %v3605, 2
        %vm3626 = vcmp.lt.s32.totalorder %v3605, 3
        %vm3627 = vcmp.lt.s32.totalorder %v3605, 4
        %v3628 = vsel %vm3624, %v3608, %v3611
        %v3629 = vsel %vm3627, %v3617, 2102212464
        %v3630 = vsel %vm3626, %v3614, %v3629
        %v3631 = vsel %vm3625, %v3628, %v3630
        %v3632 = vsel %vm3624, %v3611, %v3614
        %v3633 = vsel %vm3627, %v3620, 920167782
        %v3634 = vsel %vm3626, %v3617, %v3633
        %v3635 = vsel %vm3625, %v3632, %v3634
        %v3636 = vsel %vm3624, %v3614, %v3617
        %v3637 = vsel %vm3627, %v3623, 1326507024
        %v3638 = vsel %vm3626, %v3620, %v3637
        %v3639 = vsel %vm3625, %v3636, %v3638
        %v3640 = vshll.u32 %v3600, 8
        %v3641 = vmul.u32.u64.compose %v3640, %v3639
        %v3642 = vextract.low.u32 %v3641
        %v3643 = vextract.high.u32 %v3641
        %v3644 = vmul.u32.u64.compose %v3640, %v3635
        %v3645 = vextract.low.u32 %v3644
        %v3646 = vextract.high.u32 %v3644
        %v3647 = vmul.u32 %v3640, %v3631
        %v3648 = vadd.s32 %v3643, %v3645
        %vm3649 = vc.u32 %v3643, %v3645
        %v3650 = vadd.s32 %v3646, 1
        %v3651 = vsel %vm3649, %v3650, %v3646
        %v3652 = vadd.s32 %v3647, %v3651
        %v3653 = vadd.s32 %v3652, 536870912
        %v3654 = vshrl.u32 %v3653, 30
        %v3655 = vshll.u32 %v3654, 30
        %v3656 = vsub.s32 %v3652, %v3655
        %vm3657 = vcmp.lt.s32.totalorder %v3656, 0
        %v3658 = vsub.s32 0, %v3656
        %v3659 = vsel %vm3657, %v3658, %v3656
        %v3660 = vclz %v3659
        %v3661 = vsub.s32 %v3660, 2
        %vm3662 = vcmp.gt.s32.totalorder 0, %v3661
        %v3663 = vsel %vm3662, 0, %v3661
        %v3664 = vsub.s32 32, %v3663
        %v3665 = vshll.u32 %v3656, %v3663
        %v3666 = vshrl.u32 %v3648, %v3664
        %v3667 = vor.u32 %v3665, %v3666
        %v3668 = vsub.s32 4294967266, %v3663
        %v3669 = vadd.s32 %v3668, 127
        %v3670 = vshll.u32 %v3669, 23
        %v3671 = vor.u32 4788187, %v3670
        %v3672 = vand.u32 2147483647, %v3671
        %v3674 = vcvt.s32.f32 %v3667
        %v3675 = vmul.f32 %v3674, %v3672
        %v3676 = vxor.u32 %v3675, 2147483648
        %v3677 = vsel %vm3594, %v3676, %v3675
        %v3678 = vsub.s32 4, %v3654
        %v3679 = vsel %vm3594, %v3678, %v3654
        %v3680 = vsel %vm3593, %v672, %v3677
        %v3681 = vsel %vm3593, 0, %v3679
        %v3682 = vcosq.f32.pop %v3680
        %v3683 = vsinq.f32.pop %v3680
        %vm3684 = vweird.f32 %v672
        %v3685 = vadd.s32 %v3681, 3
        %v3686 = vand.u32 %v3685, 3
        %vm3687 = vcmp.lt.s32.totalorder %v3686, 2
        %vm3688 = vcmp.eq.s32.totalorder %v3686, 0
        %v3689 = vxor.u32 %v3683, 2147483648
        %v3690 = vsel %vm3688, %v3682, %v3689
        %vm3691 = vcmp.eq.s32.totalorder %v3686, 2
        %v3692 = vxor.u32 %v3682, 2147483648
        %v3693 = vsel %vm3691, %v3692, %v3683
        %v3694 = vsel %vm3687, %v3690, %v3693
        %v3695 = vsel %vm3684, nan, %v3694
        %v3696 = vand.u32 2147483647, %v673
        %vm3697 = vcmp.le.f32.partialorder %v3696, 0.7853982
        %vm3698 = vcmp.lt.s32.totalorder %v673, 0
        %v3699 = vand.u32 %v673, 2139095040
        %v3700 = vshrl.u32 %v3699, 23
        %v3701 = vsub.s32 %v3700, 127
        %v3702 = vand.u32 2147483647, %v673
        %v3703 = vand.u32 %v3702, 8388607
        %v3704 = vor.u32 %v3703, 8388608
        %v3705 = vsub.s32 0, %v3704
        %v3706 = vadd.s32 %v3701, 1
        %vm3707 = vcmp.gt.s32.totalorder %v3706, 0
        %v3708 = vsel %vm3707, %v3706, 0
        %v3709 = vshrl.u32 %v3708, 5
        %v3710 = vand.u32 %v3708, 31
        %v3711 = vsub.s32 32, %v3710
        %v3712 = vshrl.u32 683565275, %v3711
        %v3713 = vshll.u32 683565275, %v3710
        %v3714 = vshrl.u32 2475754826, %v3711
        %v3715 = vor.u32 %v3713, %v3714
        %v3716 = vshll.u32 2475754826, %v3710
        %v3717 = vshrl.u32 2131351028, %v3711
        %v3718 = vor.u32 %v3716, %v3717
        %v3719 = vshll.u32 2131351028, %v3710
        %v3720 = vshrl.u32 2102212464, %v3711
        %v3721 = vor.u32 %v3719, %v3720
        %v3722 = vshll.u32 2102212464, %v3710
        %v3723 = vshrl.u32 920167782, %v3711
        %v3724 = vor.u32 %v3722, %v3723
        %v3725 = vshll.u32 920167782, %v3710
        %v3726 = vshrl.u32 1326507024, %v3711
        %v3727 = vor.u32 %v3725, %v3726
        %vm3728 = vcmp.lt.s32.totalorder %v3709, 1
        %vm3729 = vcmp.lt.s32.totalorder %v3709, 2
        %vm3730 = vcmp.lt.s32.totalorder %v3709, 3
        %vm3731 = vcmp.lt.s32.totalorder %v3709, 4
        %v3732 = vsel %vm3728, %v3712, %v3715
        %v3733 = vsel %vm3731, %v3721, 2102212464
        %v3734 = vsel %vm3730, %v3718, %v3733
        %v3735 = vsel %vm3729, %v3732, %v3734
        %v3736 = vsel %vm3728, %v3715, %v3718
        %v3737 = vsel %vm3731, %v3724, 920167782
        %v3738 = vsel %vm3730, %v3721, %v3737
        %v3739 = vsel %vm3729, %v3736, %v3738
        %v3740 = vsel %vm3728, %v3718, %v3721
        %v3741 = vsel %vm3731, %v3727, 1326507024
        %v3742 = vsel %vm3730, %v3724, %v3741
        %v3743 = vsel %vm3729, %v3740, %v3742
        %v3744 = vshll.u32 %v3704, 8
        %v3745 = vmul.u32.u64.compose %v3744, %v3743
        %v3746 = vextract.low.u32 %v3745
        %v3747 = vextract.high.u32 %v3745
        %v3748 = vmul.u32.u64.compose %v3744, %v3739
        %v3749 = vextract.low.u32 %v3748
        %v3750 = vextract.high.u32 %v3748
        %v3751 = vmul.u32 %v3744, %v3735
        %v3752 = vadd.s32 %v3747, %v3749
        %vm3753 = vc.u32 %v3747, %v3749
        %v3754 = vadd.s32 %v3750, 1
        %v3755 = vsel %vm3753, %v3754, %v3750
        %v3756 = vadd.s32 %v3751, %v3755
        %v3757 = vadd.s32 %v3756, 536870912
        %v3758 = vshrl.u32 %v3757, 30
        %v3759 = vshll.u32 %v3758, 30
        %v3760 = vsub.s32 %v3756, %v3759
        %vm3761 = vcmp.lt.s32.totalorder %v3760, 0
        %v3762 = vsub.s32 0, %v3760
        %v3763 = vsel %vm3761, %v3762, %v3760
        %v3764 = vclz %v3763
        %v3765 = vsub.s32 %v3764, 2
        %vm3766 = vcmp.gt.s32.totalorder 0, %v3765
        %v3767 = vsel %vm3766, 0, %v3765
        %v3768 = vsub.s32 32, %v3767
        %v3769 = vshll.u32 %v3760, %v3767
        %v3770 = vshrl.u32 %v3752, %v3768
        %v3771 = vor.u32 %v3769, %v3770
        %v3772 = vsub.s32 4294967266, %v3767
        %v3773 = vadd.s32 %v3772, 127
        %v3774 = vshll.u32 %v3773, 23
        %v3775 = vor.u32 4788187, %v3774
        %v3776 = vand.u32 2147483647, %v3775
        %v3778 = vcvt.s32.f32 %v3771
        %v3779 = vmul.f32 %v3778, %v3776
        %v3780 = vxor.u32 %v3779, 2147483648
        %v3781 = vsel %vm3698, %v3780, %v3779
        %v3782 = vsub.s32 4, %v3758
        %v3783 = vsel %vm3698, %v3782, %v3758
        %v3784 = vsel %vm3697, %v673, %v3781
        %v3785 = vsel %vm3697, 0, %v3783
        %v3786 = vcosq.f32.pop %v3784
        %v3787 = vsinq.f32.pop %v3784
        %vm3788 = vweird.f32 %v673
        %v3789 = vadd.s32 %v3785, 3
        %v3790 = vand.u32 %v3789, 3
        %vm3791 = vcmp.lt.s32.totalorder %v3790, 2
        %vm3792 = vcmp.eq.s32.totalorder %v3790, 0
        %v3793 = vxor.u32 %v3787, 2147483648
        %v3794 = vsel %vm3792, %v3786, %v3793
        %vm3795 = vcmp.eq.s32.totalorder %v3790, 2
        %v3796 = vxor.u32 %v3786, 2147483648
        %v3797 = vsel %vm3795, %v3796, %v3787
        %v3798 = vsel %vm3791, %v3794, %v3797
        %v3799 = vsel %vm3788, nan, %v3798
        %v3800 = vand.u32 2147483647, %v674
        %vm3801 = vcmp.le.f32.partialorder %v3800, 0.7853982
        %vm3802 = vcmp.lt.s32.totalorder %v674, 0
        %v3803 = vand.u32 %v674, 2139095040
        %v3804 = vshrl.u32 %v3803, 23
        %v3805 = vsub.s32 %v3804, 127
        %v3806 = vand.u32 2147483647, %v674
        %v3807 = vand.u32 %v3806, 8388607
        %v3808 = vor.u32 %v3807, 8388608
        %v3809 = vsub.s32 0, %v3808
        %v3810 = vadd.s32 %v3805, 1
        %vm3811 = vcmp.gt.s32.totalorder %v3810, 0
        %v3812 = vsel %vm3811, %v3810, 0
        %v3813 = vshrl.u32 %v3812, 5
        %v3814 = vand.u32 %v3812, 31
        %v3815 = vsub.s32 32, %v3814
        %v3816 = vshrl.u32 683565275, %v3815
        %v3817 = vshll.u32 683565275, %v3814
        %v3818 = vshrl.u32 2475754826, %v3815
        %v3819 = vor.u32 %v3817, %v3818
        %v3820 = vshll.u32 2475754826, %v3814
        %v3821 = vshrl.u32 2131351028, %v3815
        %v3822 = vor.u32 %v3820, %v3821
        %v3823 = vshll.u32 2131351028, %v3814
        %v3824 = vshrl.u32 2102212464, %v3815
        %v3825 = vor.u32 %v3823, %v3824
        %v3826 = vshll.u32 2102212464, %v3814
        %v3827 = vshrl.u32 920167782, %v3815
        %v3828 = vor.u32 %v3826, %v3827
        %v3829 = vshll.u32 920167782, %v3814
        %v3830 = vshrl.u32 1326507024, %v3815
        %v3831 = vor.u32 %v3829, %v3830
        %vm3832 = vcmp.lt.s32.totalorder %v3813, 1
        %vm3833 = vcmp.lt.s32.totalorder %v3813, 2
        %vm3834 = vcmp.lt.s32.totalorder %v3813, 3
        %vm3835 = vcmp.lt.s32.totalorder %v3813, 4
        %v3836 = vsel %vm3832, %v3816, %v3819
        %v3837 = vsel %vm3835, %v3825, 2102212464
        %v3838 = vsel %vm3834, %v3822, %v3837
        %v3839 = vsel %vm3833, %v3836, %v3838
        %v3840 = vsel %vm3832, %v3819, %v3822
        %v3841 = vsel %vm3835, %v3828, 920167782
        %v3842 = vsel %vm3834, %v3825, %v3841
        %v3843 = vsel %vm3833, %v3840, %v3842
        %v3844 = vsel %vm3832, %v3822, %v3825
        %v3845 = vsel %vm3835, %v3831, 1326507024
        %v3846 = vsel %vm3834, %v3828, %v3845
        %v3847 = vsel %vm3833, %v3844, %v3846
        %v3848 = vshll.u32 %v3808, 8
        %v3849 = vmul.u32.u64.compose %v3848, %v3847
        %v3850 = vextract.low.u32 %v3849
        %v3851 = vextract.high.u32 %v3849
        %v3852 = vmul.u32.u64.compose %v3848, %v3843
        %v3853 = vextract.low.u32 %v3852
        %v3854 = vextract.high.u32 %v3852
        %v3855 = vmul.u32 %v3848, %v3839
        %v3856 = vadd.s32 %v3851, %v3853
        %vm3857 = vc.u32 %v3851, %v3853
        %v3858 = vadd.s32 %v3854, 1
        %v3859 = vsel %vm3857, %v3858, %v3854
        %v3860 = vadd.s32 %v3855, %v3859
        %v3861 = vadd.s32 %v3860, 536870912
        %v3862 = vshrl.u32 %v3861, 30
        %v3863 = vshll.u32 %v3862, 30
        %v3864 = vsub.s32 %v3860, %v3863
        %vm3865 = vcmp.lt.s32.totalorder %v3864, 0
        %v3866 = vsub.s32 0, %v3864
        %v3867 = vsel %vm3865, %v3866, %v3864
        %v3868 = vclz %v3867
        %v3869 = vsub.s32 %v3868, 2
        %vm3870 = vcmp.gt.s32.totalorder 0, %v3869
        %v3871 = vsel %vm3870, 0, %v3869
        %v3872 = vsub.s32 32, %v3871
        %v3873 = vshll.u32 %v3864, %v3871
        %v3874 = vshrl.u32 %v3856, %v3872
        %v3875 = vor.u32 %v3873, %v3874
        %v3876 = vsub.s32 4294967266, %v3871
        %v3877 = vadd.s32 %v3876, 127
        %v3878 = vshll.u32 %v3877, 23
        %v3879 = vor.u32 4788187, %v3878
        %v3880 = vand.u32 2147483647, %v3879
        %v3882 = vcvt.s32.f32 %v3875
        %v3883 = vmul.f32 %v3882, %v3880
        %v3884 = vxor.u32 %v3883, 2147483648
        %v3885 = vsel %vm3802, %v3884, %v3883
        %v3886 = vsub.s32 4, %v3862
        %v3887 = vsel %vm3802, %v3886, %v3862
        %v3888 = vsel %vm3801, %v674, %v3885
        %v3889 = vsel %vm3801, 0, %v3887
        %v3890 = vcosq.f32.pop %v3888
        %v3891 = vsinq.f32.pop %v3888
        %vm3892 = vweird.f32 %v674
        %v3893 = vadd.s32 %v3889, 3
        %v3894 = vand.u32 %v3893, 3
        %vm3895 = vcmp.lt.s32.totalorder %v3894, 2
        %vm3896 = vcmp.eq.s32.totalorder %v3894, 0
        %v3897 = vxor.u32 %v3891, 2147483648
        %v3898 = vsel %vm3896, %v3890, %v3897
        %vm3899 = vcmp.eq.s32.totalorder %v3894, 2
        %v3900 = vxor.u32 %v3890, 2147483648
        %v3901 = vsel %vm3899, %v3900, %v3891
        %v3902 = vsel %vm3895, %v3898, %v3901
        %v3903 = vsel %vm3892, nan, %v3902
        %v3904 = vand.u32 2147483647, %v675
        %vm3905 = vcmp.le.f32.partialorder %v3904, 0.7853982
        %vm3906 = vcmp.lt.s32.totalorder %v675, 0
        %v3907 = vand.u32 %v675, 2139095040
        %v3908 = vshrl.u32 %v3907, 23
        %v3909 = vsub.s32 %v3908, 127
        %v3910 = vand.u32 2147483647, %v675
        %v3911 = vand.u32 %v3910, 8388607
        %v3912 = vor.u32 %v3911, 8388608
        %v3913 = vsub.s32 0, %v3912
        %v3914 = vadd.s32 %v3909, 1
        %vm3915 = vcmp.gt.s32.totalorder %v3914, 0
        %v3916 = vsel %vm3915, %v3914, 0
        %v3917 = vshrl.u32 %v3916, 5
        %v3918 = vand.u32 %v3916, 31
        %v3919 = vsub.s32 32, %v3918
        %v3920 = vshrl.u32 683565275, %v3919
        %v3921 = vshll.u32 683565275, %v3918
        %v3922 = vshrl.u32 2475754826, %v3919
        %v3923 = vor.u32 %v3921, %v3922
        %v3924 = vshll.u32 2475754826, %v3918
        %v3925 = vshrl.u32 2131351028, %v3919
        %v3926 = vor.u32 %v3924, %v3925
        %v3927 = vshll.u32 2131351028, %v3918
        %v3928 = vshrl.u32 2102212464, %v3919
        %v3929 = vor.u32 %v3927, %v3928
        %v3930 = vshll.u32 2102212464, %v3918
        %v3931 = vshrl.u32 920167782, %v3919
        %v3932 = vor.u32 %v3930, %v3931
        %v3933 = vshll.u32 920167782, %v3918
        %v3934 = vshrl.u32 1326507024, %v3919
        %v3935 = vor.u32 %v3933, %v3934
        %vm3936 = vcmp.lt.s32.totalorder %v3917, 1
        %vm3937 = vcmp.lt.s32.totalorder %v3917, 2
        %vm3938 = vcmp.lt.s32.totalorder %v3917, 3
        %vm3939 = vcmp.lt.s32.totalorder %v3917, 4
        %v3940 = vsel %vm3936, %v3920, %v3923
        %v3941 = vsel %vm3939, %v3929, 2102212464
        %v3942 = vsel %vm3938, %v3926, %v3941
        %v3943 = vsel %vm3937, %v3940, %v3942
        %v3944 = vsel %vm3936, %v3923, %v3926
        %v3945 = vsel %vm3939, %v3932, 920167782
        %v3946 = vsel %vm3938, %v3929, %v3945
        %v3947 = vsel %vm3937, %v3944, %v3946
        %v3948 = vsel %vm3936, %v3926, %v3929
        %v3949 = vsel %vm3939, %v3935, 1326507024
        %v3950 = vsel %vm3938, %v3932, %v3949
        %v3951 = vsel %vm3937, %v3948, %v3950
        %v3952 = vshll.u32 %v3912, 8
        %v3953 = vmul.u32.u64.compose %v3952, %v3951
        %v3954 = vextract.low.u32 %v3953
        %v3955 = vextract.high.u32 %v3953
        %v3956 = vmul.u32.u64.compose %v3952, %v3947
        %v3957 = vextract.low.u32 %v3956
        %v3958 = vextract.high.u32 %v3956
        %v3959 = vmul.u32 %v3952, %v3943
        %v3960 = vadd.s32 %v3955, %v3957
        %vm3961 = vc.u32 %v3955, %v3957
        %v3962 = vadd.s32 %v3958, 1
        %v3963 = vsel %vm3961, %v3962, %v3958
        %v3964 = vadd.s32 %v3959, %v3963
        %v3965 = vadd.s32 %v3964, 536870912
        %v3966 = vshrl.u32 %v3965, 30
        %v3967 = vshll.u32 %v3966, 30
        %v3968 = vsub.s32 %v3964, %v3967
        %vm3969 = vcmp.lt.s32.totalorder %v3968, 0
        %v3970 = vsub.s32 0, %v3968
        %v3971 = vsel %vm3969, %v3970, %v3968
        %v3972 = vclz %v3971
        %v3973 = vsub.s32 %v3972, 2
        %vm3974 = vcmp.gt.s32.totalorder 0, %v3973
        %v3975 = vsel %vm3974, 0, %v3973
        %v3976 = vsub.s32 32, %v3975
        %v3977 = vshll.u32 %v3968, %v3975
        %v3978 = vshrl.u32 %v3960, %v3976
        %v3979 = vor.u32 %v3977, %v3978
        %v3980 = vsub.s32 4294967266, %v3975
        %v3981 = vadd.s32 %v3980, 127
        %v3982 = vshll.u32 %v3981, 23
        %v3983 = vor.u32 4788187, %v3982
        %v3984 = vand.u32 2147483647, %v3983
        %v3986 = vcvt.s32.f32 %v3979
        %v3987 = vmul.f32 %v3986, %v3984
        %v3988 = vxor.u32 %v3987, 2147483648
        %v3989 = vsel %vm3906, %v3988, %v3987
        %v3990 = vsub.s32 4, %v3966
        %v3991 = vsel %vm3906, %v3990, %v3966
        %v3992 = vsel %vm3905, %v675, %v3989
        %v3993 = vsel %vm3905, 0, %v3991
        %v3994 = vcosq.f32.pop %v3992
        %v3995 = vsinq.f32.pop %v3992
        %vm3996 = vweird.f32 %v675
        %v3997 = vadd.s32 %v3993, 3
        %v3998 = vand.u32 %v3997, 3
        %vm3999 = vcmp.lt.s32.totalorder %v3998, 2
        %vm4000 = vcmp.eq.s32.totalorder %v3998, 0
        %v4001 = vxor.u32 %v3995, 2147483648
        %v4002 = vsel %vm4000, %v3994, %v4001
        %vm4003 = vcmp.eq.s32.totalorder %v3998, 2
        %v4004 = vxor.u32 %v3994, 2147483648
        %v4005 = vsel %vm4003, %v4004, %v3995
        %v4006 = vsel %vm3999, %v4002, %v4005
        %v4007 = vsel %vm3996, nan, %v4006
        %v4008 = vand.u32 2147483647, %v676
        %vm4009 = vcmp.le.f32.partialorder %v4008, 0.7853982
        %vm4010 = vcmp.lt.s32.totalorder %v676, 0
        %v4011 = vand.u32 %v676, 2139095040
        %v4012 = vshrl.u32 %v4011, 23
        %v4013 = vsub.s32 %v4012, 127
        %v4014 = vand.u32 2147483647, %v676
        %v4015 = vand.u32 %v4014, 8388607
        %v4016 = vor.u32 %v4015, 8388608
        %v4017 = vsub.s32 0, %v4016
        %v4018 = vadd.s32 %v4013, 1
        %vm4019 = vcmp.gt.s32.totalorder %v4018, 0
        %v4020 = vsel %vm4019, %v4018, 0
        %v4021 = vshrl.u32 %v4020, 5
        %v4022 = vand.u32 %v4020, 31
        %v4023 = vsub.s32 32, %v4022
        %v4024 = vshrl.u32 683565275, %v4023
        %v4025 = vshll.u32 683565275, %v4022
        %v4026 = vshrl.u32 2475754826, %v4023
        %v4027 = vor.u32 %v4025, %v4026
        %v4028 = vshll.u32 2475754826, %v4022
        %v4029 = vshrl.u32 2131351028, %v4023
        %v4030 = vor.u32 %v4028, %v4029
        %v4031 = vshll.u32 2131351028, %v4022
        %v4032 = vshrl.u32 2102212464, %v4023
        %v4033 = vor.u32 %v4031, %v4032
        %v4034 = vshll.u32 2102212464, %v4022
        %v4035 = vshrl.u32 920167782, %v4023
        %v4036 = vor.u32 %v4034, %v4035
        %v4037 = vshll.u32 920167782, %v4022
        %v4038 = vshrl.u32 1326507024, %v4023
        %v4039 = vor.u32 %v4037, %v4038
        %vm4040 = vcmp.lt.s32.totalorder %v4021, 1
        %vm4041 = vcmp.lt.s32.totalorder %v4021, 2
        %vm4042 = vcmp.lt.s32.totalorder %v4021, 3
        %vm4043 = vcmp.lt.s32.totalorder %v4021, 4
        %v4044 = vsel %vm4040, %v4024, %v4027
        %v4045 = vsel %vm4043, %v4033, 2102212464
        %v4046 = vsel %vm4042, %v4030, %v4045
        %v4047 = vsel %vm4041, %v4044, %v4046
        %v4048 = vsel %vm4040, %v4027, %v4030
        %v4049 = vsel %vm4043, %v4036, 920167782
        %v4050 = vsel %vm4042, %v4033, %v4049
        %v4051 = vsel %vm4041, %v4048, %v4050
        %v4052 = vsel %vm4040, %v4030, %v4033
        %v4053 = vsel %vm4043, %v4039, 1326507024
        %v4054 = vsel %vm4042, %v4036, %v4053
        %v4055 = vsel %vm4041, %v4052, %v4054
        %v4056 = vshll.u32 %v4016, 8
        %v4057 = vmul.u32.u64.compose %v4056, %v4055
        %v4058 = vextract.low.u32 %v4057
        %v4059 = vextract.high.u32 %v4057
        %v4060 = vmul.u32.u64.compose %v4056, %v4051
        %v4061 = vextract.low.u32 %v4060
        %v4062 = vextract.high.u32 %v4060
        %v4063 = vmul.u32 %v4056, %v4047
        %v4064 = vadd.s32 %v4059, %v4061
        %vm4065 = vc.u32 %v4059, %v4061
        %v4066 = vadd.s32 %v4062, 1
        %v4067 = vsel %vm4065, %v4066, %v4062
        %v4068 = vadd.s32 %v4063, %v4067
        %v4069 = vadd.s32 %v4068, 536870912
        %v4070 = vshrl.u32 %v4069, 30
        %v4071 = vshll.u32 %v4070, 30
        %v4072 = vsub.s32 %v4068, %v4071
        %vm4073 = vcmp.lt.s32.totalorder %v4072, 0
        %v4074 = vsub.s32 0, %v4072
        %v4075 = vsel %vm4073, %v4074, %v4072
        %v4076 = vclz %v4075
        %v4077 = vsub.s32 %v4076, 2
        %vm4078 = vcmp.gt.s32.totalorder 0, %v4077
        %v4079 = vsel %vm4078, 0, %v4077
        %v4080 = vsub.s32 32, %v4079
        %v4081 = vshll.u32 %v4072, %v4079
        %v4082 = vshrl.u32 %v4064, %v4080
        %v4083 = vor.u32 %v4081, %v4082
        %v4084 = vsub.s32 4294967266, %v4079
        %v4085 = vadd.s32 %v4084, 127
        %v4086 = vshll.u32 %v4085, 23
        %v4087 = vor.u32 4788187, %v4086
        %v4088 = vand.u32 2147483647, %v4087
        %v4090 = vcvt.s32.f32 %v4083
        %v4091 = vmul.f32 %v4090, %v4088
        %v4092 = vxor.u32 %v4091, 2147483648
        %v4093 = vsel %vm4010, %v4092, %v4091
        %v4094 = vsub.s32 4, %v4070
        %v4095 = vsel %vm4010, %v4094, %v4070
        %v4096 = vsel %vm4009, %v676, %v4093
        %v4097 = vsel %vm4009, 0, %v4095
        %v4098 = vcosq.f32.pop %v4096
        %v4099 = vsinq.f32.pop %v4096
        %vm4100 = vweird.f32 %v676
        %v4101 = vadd.s32 %v4097, 3
        %v4102 = vand.u32 %v4101, 3
        %vm4103 = vcmp.lt.s32.totalorder %v4102, 2
        %vm4104 = vcmp.eq.s32.totalorder %v4102, 0
        %v4105 = vxor.u32 %v4099, 2147483648
        %v4106 = vsel %vm4104, %v4098, %v4105
        %vm4107 = vcmp.eq.s32.totalorder %v4102, 2
        %v4108 = vxor.u32 %v4098, 2147483648
        %v4109 = vsel %vm4107, %v4108, %v4099
        %v4110 = vsel %vm4103, %v4106, %v4109
        %v4111 = vsel %vm4100, nan, %v4110
        %v4112 = vand.u32 2147483647, %v677
        %vm4113 = vcmp.le.f32.partialorder %v4112, 0.7853982
        %vm4114 = vcmp.lt.s32.totalorder %v677, 0
        %v4115 = vand.u32 %v677, 2139095040
        %v4116 = vshrl.u32 %v4115, 23
        %v4117 = vsub.s32 %v4116, 127
        %v4118 = vand.u32 2147483647, %v677
        %v4119 = vand.u32 %v4118, 8388607
        %v4120 = vor.u32 %v4119, 8388608
        %v4121 = vsub.s32 0, %v4120
        %v4122 = vadd.s32 %v4117, 1
        %vm4123 = vcmp.gt.s32.totalorder %v4122, 0
        %v4124 = vsel %vm4123, %v4122, 0
        %v4125 = vshrl.u32 %v4124, 5
        %v4126 = vand.u32 %v4124, 31
        %v4127 = vsub.s32 32, %v4126
        %v4128 = vshrl.u32 683565275, %v4127
        %v4129 = vshll.u32 683565275, %v4126
        %v4130 = vshrl.u32 2475754826, %v4127
        %v4131 = vor.u32 %v4129, %v4130
        %v4132 = vshll.u32 2475754826, %v4126
        %v4133 = vshrl.u32 2131351028, %v4127
        %v4134 = vor.u32 %v4132, %v4133
        %v4135 = vshll.u32 2131351028, %v4126
        %v4136 = vshrl.u32 2102212464, %v4127
        %v4137 = vor.u32 %v4135, %v4136
        %v4138 = vshll.u32 2102212464, %v4126
        %v4139 = vshrl.u32 920167782, %v4127
        %v4140 = vor.u32 %v4138, %v4139
        %v4141 = vshll.u32 920167782, %v4126
        %v4142 = vshrl.u32 1326507024, %v4127
        %v4143 = vor.u32 %v4141, %v4142
        %vm4144 = vcmp.lt.s32.totalorder %v4125, 1
        %vm4145 = vcmp.lt.s32.totalorder %v4125, 2
        %vm4146 = vcmp.lt.s32.totalorder %v4125, 3
        %vm4147 = vcmp.lt.s32.totalorder %v4125, 4
        %v4148 = vsel %vm4144, %v4128, %v4131
        %v4149 = vsel %vm4147, %v4137, 2102212464
        %v4150 = vsel %vm4146, %v4134, %v4149
        %v4151 = vsel %vm4145, %v4148, %v4150
        %v4152 = vsel %vm4144, %v4131, %v4134
        %v4153 = vsel %vm4147, %v4140, 920167782
        %v4154 = vsel %vm4146, %v4137, %v4153
        %v4155 = vsel %vm4145, %v4152, %v4154
        %v4156 = vsel %vm4144, %v4134, %v4137
        %v4157 = vsel %vm4147, %v4143, 1326507024
        %v4158 = vsel %vm4146, %v4140, %v4157
        %v4159 = vsel %vm4145, %v4156, %v4158
        %v4160 = vshll.u32 %v4120, 8
        %v4161 = vmul.u32.u64.compose %v4160, %v4159
        %v4162 = vextract.low.u32 %v4161
        %v4163 = vextract.high.u32 %v4161
        %v4164 = vmul.u32.u64.compose %v4160, %v4155
        %v4165 = vextract.low.u32 %v4164
        %v4166 = vextract.high.u32 %v4164
        %v4167 = vmul.u32 %v4160, %v4151
        %v4168 = vadd.s32 %v4163, %v4165
        %vm4169 = vc.u32 %v4163, %v4165
        %v4170 = vadd.s32 %v4166, 1
        %v4171 = vsel %vm4169, %v4170, %v4166
        %v4172 = vadd.s32 %v4167, %v4171
        %v4173 = vadd.s32 %v4172, 536870912
        %v4174 = vshrl.u32 %v4173, 30
        %v4175 = vshll.u32 %v4174, 30
        %v4176 = vsub.s32 %v4172, %v4175
        %vm4177 = vcmp.lt.s32.totalorder %v4176, 0
        %v4178 = vsub.s32 0, %v4176
        %v4179 = vsel %vm4177, %v4178, %v4176
        %v4180 = vclz %v4179
        %v4181 = vsub.s32 %v4180, 2
        %vm4182 = vcmp.gt.s32.totalorder 0, %v4181
        %v4183 = vsel %vm4182, 0, %v4181
        %v4184 = vsub.s32 32, %v4183
        %v4185 = vshll.u32 %v4176, %v4183
        %v4186 = vshrl.u32 %v4168, %v4184
        %v4187 = vor.u32 %v4185, %v4186
        %v4188 = vsub.s32 4294967266, %v4183
        %v4189 = vadd.s32 %v4188, 127
        %v4190 = vshll.u32 %v4189, 23
        %v4191 = vor.u32 4788187, %v4190
        %v4192 = vand.u32 2147483647, %v4191
        %v4194 = vcvt.s32.f32 %v4187
        %v4195 = vmul.f32 %v4194, %v4192
        %v4196 = vxor.u32 %v4195, 2147483648
        %v4197 = vsel %vm4114, %v4196, %v4195
        %v4198 = vsub.s32 4, %v4174
        %v4199 = vsel %vm4114, %v4198, %v4174
        %v4200 = vsel %vm4113, %v677, %v4197
        %v4201 = vsel %vm4113, 0, %v4199
        %v4202 = vcosq.f32.pop %v4200
        %v4203 = vsinq.f32.pop %v4200
        %vm4204 = vweird.f32 %v677
        %v4205 = vadd.s32 %v4201, 3
        %v4206 = vand.u32 %v4205, 3
        %vm4207 = vcmp.lt.s32.totalorder %v4206, 2
        %vm4208 = vcmp.eq.s32.totalorder %v4206, 0
        %v4209 = vxor.u32 %v4203, 2147483648
        %v4210 = vsel %vm4208, %v4202, %v4209
        %vm4211 = vcmp.eq.s32.totalorder %v4206, 2
        %v4212 = vxor.u32 %v4202, 2147483648
        %v4213 = vsel %vm4211, %v4212, %v4203
        %v4214 = vsel %vm4207, %v4210, %v4213
        %v4215 = vsel %vm4204, nan, %v4214
        %v4216 = vand.u32 2147483647, %v678
        %vm4217 = vcmp.le.f32.partialorder %v4216, 0.7853982
        %vm4218 = vcmp.lt.s32.totalorder %v678, 0
        %v4219 = vand.u32 %v678, 2139095040
        %v4220 = vshrl.u32 %v4219, 23
        %v4221 = vsub.s32 %v4220, 127
        %v4222 = vand.u32 2147483647, %v678
        %v4223 = vand.u32 %v4222, 8388607
        %v4224 = vor.u32 %v4223, 8388608
        %v4225 = vsub.s32 0, %v4224
        %v4226 = vadd.s32 %v4221, 1
        %vm4227 = vcmp.gt.s32.totalorder %v4226, 0
        %v4228 = vsel %vm4227, %v4226, 0
        %v4229 = vshrl.u32 %v4228, 5
        %v4230 = vand.u32 %v4228, 31
        %v4231 = vsub.s32 32, %v4230
        %v4232 = vshrl.u32 683565275, %v4231
        %v4233 = vshll.u32 683565275, %v4230
        %v4234 = vshrl.u32 2475754826, %v4231
        %v4235 = vor.u32 %v4233, %v4234
        %v4236 = vshll.u32 2475754826, %v4230
        %v4237 = vshrl.u32 2131351028, %v4231
        %v4238 = vor.u32 %v4236, %v4237
        %v4239 = vshll.u32 2131351028, %v4230
        %v4240 = vshrl.u32 2102212464, %v4231
        %v4241 = vor.u32 %v4239, %v4240
        %v4242 = vshll.u32 2102212464, %v4230
        %v4243 = vshrl.u32 920167782, %v4231
        %v4244 = vor.u32 %v4242, %v4243
        %v4245 = vshll.u32 920167782, %v4230
        %v4246 = vshrl.u32 1326507024, %v4231
        %v4247 = vor.u32 %v4245, %v4246
        %vm4248 = vcmp.lt.s32.totalorder %v4229, 1
        %vm4249 = vcmp.lt.s32.totalorder %v4229, 2
        %vm4250 = vcmp.lt.s32.totalorder %v4229, 3
        %vm4251 = vcmp.lt.s32.totalorder %v4229, 4
        %v4252 = vsel %vm4248, %v4232, %v4235
        %v4253 = vsel %vm4251, %v4241, 2102212464
        %v4254 = vsel %vm4250, %v4238, %v4253
        %v4255 = vsel %vm4249, %v4252, %v4254
        %v4256 = vsel %vm4248, %v4235, %v4238
        %v4257 = vsel %vm4251, %v4244, 920167782
        %v4258 = vsel %vm4250, %v4241, %v4257
        %v4259 = vsel %vm4249, %v4256, %v4258
        %v4260 = vsel %vm4248, %v4238, %v4241
        %v4261 = vsel %vm4251, %v4247, 1326507024
        %v4262 = vsel %vm4250, %v4244, %v4261
        %v4263 = vsel %vm4249, %v4260, %v4262
        %v4264 = vshll.u32 %v4224, 8
        %v4265 = vmul.u32.u64.compose %v4264, %v4263
        %v4266 = vextract.low.u32 %v4265
        %v4267 = vextract.high.u32 %v4265
        %v4268 = vmul.u32.u64.compose %v4264, %v4259
        %v4269 = vextract.low.u32 %v4268
        %v4270 = vextract.high.u32 %v4268
        %v4271 = vmul.u32 %v4264, %v4255
        %v4272 = vadd.s32 %v4267, %v4269
        %vm4273 = vc.u32 %v4267, %v4269
        %v4274 = vadd.s32 %v4270, 1
        %v4275 = vsel %vm4273, %v4274, %v4270
        %v4276 = vadd.s32 %v4271, %v4275
        %v4277 = vadd.s32 %v4276, 536870912
        %v4278 = vshrl.u32 %v4277, 30
        %v4279 = vshll.u32 %v4278, 30
        %v4280 = vsub.s32 %v4276, %v4279
        %vm4281 = vcmp.lt.s32.totalorder %v4280, 0
        %v4282 = vsub.s32 0, %v4280
        %v4283 = vsel %vm4281, %v4282, %v4280
        %v4284 = vclz %v4283
        %v4285 = vsub.s32 %v4284, 2
        %vm4286 = vcmp.gt.s32.totalorder 0, %v4285
        %v4287 = vsel %vm4286, 0, %v4285
        %v4288 = vsub.s32 32, %v4287
        %v4289 = vshll.u32 %v4280, %v4287
        %v4290 = vshrl.u32 %v4272, %v4288
        %v4291 = vor.u32 %v4289, %v4290
        %v4292 = vsub.s32 4294967266, %v4287
        %v4293 = vadd.s32 %v4292, 127
        %v4294 = vshll.u32 %v4293, 23
        %v4295 = vor.u32 4788187, %v4294
        %v4296 = vand.u32 2147483647, %v4295
        %v4298 = vcvt.s32.f32 %v4291
        %v4299 = vmul.f32 %v4298, %v4296
        %v4300 = vxor.u32 %v4299, 2147483648
        %v4301 = vsel %vm4218, %v4300, %v4299
        %v4302 = vsub.s32 4, %v4278
        %v4303 = vsel %vm4218, %v4302, %v4278
        %v4304 = vsel %vm4217, %v678, %v4301
        %v4305 = vsel %vm4217, 0, %v4303
        %v4306 = vcosq.f32.pop %v4304
        %v4307 = vsinq.f32.pop %v4304
        %vm4308 = vweird.f32 %v678
        %v4309 = vadd.s32 %v4305, 3
        %v4310 = vand.u32 %v4309, 3
        %vm4311 = vcmp.lt.s32.totalorder %v4310, 2
        %vm4312 = vcmp.eq.s32.totalorder %v4310, 0
        %v4313 = vxor.u32 %v4307, 2147483648
        %v4314 = vsel %vm4312, %v4306, %v4313
        %vm4315 = vcmp.eq.s32.totalorder %v4310, 2
        %v4316 = vxor.u32 %v4306, 2147483648
        %v4317 = vsel %vm4315, %v4316, %v4307
        %v4318 = vsel %vm4311, %v4314, %v4317
        %v4319 = vsel %vm4308, nan, %v4318
        %v4320 = vand.u32 2147483647, %v679
        %vm4321 = vcmp.le.f32.partialorder %v4320, 0.7853982
        %vm4322 = vcmp.lt.s32.totalorder %v679, 0
        %v4323 = vand.u32 %v679, 2139095040
        %v4324 = vshrl.u32 %v4323, 23
        %v4325 = vsub.s32 %v4324, 127
        %v4326 = vand.u32 2147483647, %v679
        %v4327 = vand.u32 %v4326, 8388607
        %v4328 = vor.u32 %v4327, 8388608
        %v4329 = vsub.s32 0, %v4328
        %v4330 = vadd.s32 %v4325, 1
        %vm4331 = vcmp.gt.s32.totalorder %v4330, 0
        %v4332 = vsel %vm4331, %v4330, 0
        %v4333 = vshrl.u32 %v4332, 5
        %v4334 = vand.u32 %v4332, 31
        %v4335 = vsub.s32 32, %v4334
        %v4336 = vshrl.u32 683565275, %v4335
        %v4337 = vshll.u32 683565275, %v4334
        %v4338 = vshrl.u32 2475754826, %v4335
        %v4339 = vor.u32 %v4337, %v4338
        %v4340 = vshll.u32 2475754826, %v4334
        %v4341 = vshrl.u32 2131351028, %v4335
        %v4342 = vor.u32 %v4340, %v4341
        %v4343 = vshll.u32 2131351028, %v4334
        %v4344 = vshrl.u32 2102212464, %v4335
        %v4345 = vor.u32 %v4343, %v4344
        %v4346 = vshll.u32 2102212464, %v4334
        %v4347 = vshrl.u32 920167782, %v4335
        %v4348 = vor.u32 %v4346, %v4347
        %v4349 = vshll.u32 920167782, %v4334
        %v4350 = vshrl.u32 1326507024, %v4335
        %v4351 = vor.u32 %v4349, %v4350
        %vm4352 = vcmp.lt.s32.totalorder %v4333, 1
        %vm4353 = vcmp.lt.s32.totalorder %v4333, 2
        %vm4354 = vcmp.lt.s32.totalorder %v4333, 3
        %vm4355 = vcmp.lt.s32.totalorder %v4333, 4
        %v4356 = vsel %vm4352, %v4336, %v4339
        %v4357 = vsel %vm4355, %v4345, 2102212464
        %v4358 = vsel %vm4354, %v4342, %v4357
        %v4359 = vsel %vm4353, %v4356, %v4358
        %v4360 = vsel %vm4352, %v4339, %v4342
        %v4361 = vsel %vm4355, %v4348, 920167782
        %v4362 = vsel %vm4354, %v4345, %v4361
        %v4363 = vsel %vm4353, %v4360, %v4362
        %v4364 = vsel %vm4352, %v4342, %v4345
        %v4365 = vsel %vm4355, %v4351, 1326507024
        %v4366 = vsel %vm4354, %v4348, %v4365
        %v4367 = vsel %vm4353, %v4364, %v4366
        %v4368 = vshll.u32 %v4328, 8
        %v4369 = vmul.u32.u64.compose %v4368, %v4367
        %v4370 = vextract.low.u32 %v4369
        %v4371 = vextract.high.u32 %v4369
        %v4372 = vmul.u32.u64.compose %v4368, %v4363
        %v4373 = vextract.low.u32 %v4372
        %v4374 = vextract.high.u32 %v4372
        %v4375 = vmul.u32 %v4368, %v4359
        %v4376 = vadd.s32 %v4371, %v4373
        %vm4377 = vc.u32 %v4371, %v4373
        %v4378 = vadd.s32 %v4374, 1
        %v4379 = vsel %vm4377, %v4378, %v4374
        %v4380 = vadd.s32 %v4375, %v4379
        %v4381 = vadd.s32 %v4380, 536870912
        %v4382 = vshrl.u32 %v4381, 30
        %v4383 = vshll.u32 %v4382, 30
        %v4384 = vsub.s32 %v4380, %v4383
        %vm4385 = vcmp.lt.s32.totalorder %v4384, 0
        %v4386 = vsub.s32 0, %v4384
        %v4387 = vsel %vm4385, %v4386, %v4384
        %v4388 = vclz %v4387
        %v4389 = vsub.s32 %v4388, 2
        %vm4390 = vcmp.gt.s32.totalorder 0, %v4389
        %v4391 = vsel %vm4390, 0, %v4389
        %v4392 = vsub.s32 32, %v4391
        %v4393 = vshll.u32 %v4384, %v4391
        %v4394 = vshrl.u32 %v4376, %v4392
        %v4395 = vor.u32 %v4393, %v4394
        %v4396 = vsub.s32 4294967266, %v4391
        %v4397 = vadd.s32 %v4396, 127
        %v4398 = vshll.u32 %v4397, 23
        %v4399 = vor.u32 4788187, %v4398
        %v4400 = vand.u32 2147483647, %v4399
        %v4402 = vcvt.s32.f32 %v4395
        %v4403 = vmul.f32 %v4402, %v4400
        %v4404 = vxor.u32 %v4403, 2147483648
        %v4405 = vsel %vm4322, %v4404, %v4403
        %v4406 = vsub.s32 4, %v4382
        %v4407 = vsel %vm4322, %v4406, %v4382
        %v4408 = vsel %vm4321, %v679, %v4405
        %v4409 = vsel %vm4321, 0, %v4407
        %v4410 = vcosq.f32.pop %v4408
        %v4411 = vsinq.f32.pop %v4408
        %vm4412 = vweird.f32 %v679
        %v4413 = vadd.s32 %v4409, 3
        %v4414 = vand.u32 %v4413, 3
        %vm4415 = vcmp.lt.s32.totalorder %v4414, 2
        %vm4416 = vcmp.eq.s32.totalorder %v4414, 0
        %v4417 = vxor.u32 %v4411, 2147483648
        %v4418 = vsel %vm4416, %v4410, %v4417
        %vm4419 = vcmp.eq.s32.totalorder %v4414, 2
        %v4420 = vxor.u32 %v4410, 2147483648
        %v4421 = vsel %vm4419, %v4420, %v4411
        %v4422 = vsel %vm4415, %v4418, %v4421
        %v4423 = vsel %vm4412, nan, %v4422
        %4424 = vst [vmem:[%s164] sm:$0xff] %v783
        %4425 = vst [vmem:[%s164 + $0x8] sm:$0xff] %v887
        %4426 = vst [vmem:[%s164 + $0x10] sm:$0xff] %v991
        %4427 = vst [vmem:[%s164 + $0x18] sm:$0xff] %v1095
        %4428 = vst [vmem:[%s164 + $0x20] sm:$0xff] %v1199
        %4429 = vst [vmem:[%s164 + $0x28] sm:$0xff] %v1303
        %4430 = vst [vmem:[%s164 + $0x30] sm:$0xff] %v1407
        %4431 = vst [vmem:[%s164 + $0x38] sm:$0xff] %v1511
        %4432 = vst [vmem:[%s164 + $0x40] sm:$0xff] %v1615
        %4433 = vst [vmem:[%s164 + $0x48] sm:$0xff] %v1719
        %4434 = vst [vmem:[%s164 + $0x50] sm:$0xff] %v1823
        %4435 = vst [vmem:[%s164 + $0x58] sm:$0xff] %v1927
        %4436 = vst [vmem:[%s164 + $0x60] sm:$0xff] %v2031
        %4437 = vst [vmem:[%s164 + $0x68] sm:$0xff] %v2135
        %4438 = vst [vmem:[%s164 + $0x70] sm:$0xff] %v2239
        %4439 = vst [vmem:[%s164 + $0x78] sm:$0xff] %v2343
        %4440 = vst [vmem:[%s164 + $0x80] sm:$0xff] %v2447
        %4441 = vst [vmem:[%s164 + $0x88] sm:$0xff] %v2551
        %4442 = vst [vmem:[%s164 + $0x90] sm:$0xff] %v2655
        %4443 = vst [vmem:[%s164 + $0x98] sm:$0xff] %v2759
        %4444 = vst [vmem:[%s164 + $0xa0] sm:$0xff] %v2863
        %4445 = vst [vmem:[%s164 + $0xa8] sm:$0xff] %v2967
        %4446 = vst [vmem:[%s164 + $0xb0] sm:$0xff] %v3071
        %4447 = vst [vmem:[%s164 + $0xb8] sm:$0xff] %v3175
        %4448 = vst [vmem:[%s164 + $0xc0] sm:$0xff] %v3279
        %4449 = vst [vmem:[%s164 + $0xc8] sm:$0xff] %v3383
        %4450 = vst [vmem:[%s164 + $0xd0] sm:$0xff] %v3487
        %4451 = vst [vmem:[%s164 + $0xd8] sm:$0xff] %v3591
        %4452 = vst [vmem:[%s164 + $0xe0] sm:$0xff] %v3695
        %4453 = vst [vmem:[%s164 + $0xe8] sm:$0xff] %v3799
        %4454 = vst [vmem:[%s164 + $0xf0] sm:$0xff] %v3903
        %4455 = vst [vmem:[%s164 + $0xf8] sm:$0xff] %v4007
        %4456 = vst [vmem:[%s164 + $0x100] sm:$0xff] %v4111
        %4457 = vst [vmem:[%s164 + $0x108] sm:$0xff] %v4215
        %4458 = vst [vmem:[%s164 + $0x110] sm:$0xff] %v4319
        %4459 = vst [vmem:[%s164 + $0x118] sm:$0xff] %v4423
        %s4460 = sand.u32 %s93, 1
        %s4461 = scalar_lea.sflag [#allocation3], %s4460
        %s4462 = sand.u32 %s93, 1
        %s4463 = smul.addr %s4462, 288
        %s4464 = scalar_lea.vmem [#allocation2], %s4463
        // Predicated region
        $region33: #{tpu_custom_call.1} parent=31 // pred_check
          %p4465 = pneg %p103
        $region34: #{tpu_custom_call.1} parent=31 // pred_check_branch
          %4467 = sbr.rel (%p4465) target = $region36
        $region35: #{tpu_custom_call.1} parent=31 // pred_region
          %s4468 = smul.u32 4, %s17
          %s4470 = ssub.s32 4608, 4608
          %4471 = vsyncadd %s4461, %s4470
          %s4472 = smul.addr %s4468, 128
          %s4473 = scalar_lea.hbm %s3, %s4472
          %s4474 = sshll.u32 %s4464, 4
          %s4475 = int_to_ptr.vmem [resolvable:$true] %s4474
          %4480 = dma.vmem_to_hbm [thread:$0]  %s4475, 4608, %s4473, %s4461, 512, 1024, 32
        $region36: #{tpu_custom_call.1} parent=31 // pred_fallthru
          _
      $region32: #{tpu_custom_call.1} parent=5 // pred_fallthru
        _
      %p4481 = scmp.le.s32.totalorder 2, %s12
      // Predicated region
      $region37: #{tpu_custom_call.1} parent=5 // pred_check
        %p4482 = pneg %p4481
      $region38: #{tpu_custom_call.1} parent=5 // pred_check_branch
        %4484 = sbr.rel (%p4482) target = $region40
      $region39: #{tpu_custom_call.1} parent=5 // pred_region
        %s4485 = ssub.s32 %s12, 2
        // Predicated region
        $region41: #{tpu_custom_call.1} parent=39 // pred_check
          %p4486 = pneg %p109
        $region42: #{tpu_custom_call.1} parent=39 // pred_check_branch
          %4488 = sbr.rel (%p4486) target = $region44
        $region43: #{tpu_custom_call.1} parent=39 // pred_region
          %s4489 = sand.u32 %s94, 1
          %s4490 = scalar_lea.sflag [#allocation3], %s4489
          %s4491 = sand.u32 %s94, 1
          %s4492 = smul.addr %s4491, 288
          %s4493 = scalar_lea.vmem [#allocation2], %s4492
          %4494 = dma.done %s4490, 4608
        $region44: #{tpu_custom_call.1} parent=39 // pred_fallthru
          _
      $region40: #{tpu_custom_call.1} parent=5 // pred_fallthru
        _
    $region6: #{tpu_custom_call.1} parent=1 // loop_footer
      %s16 = sadd.s32 1, %s12
    $region7: #{tpu_custom_call.1} parent=1 // loop_footer_branch
      %11 = sbr.rel target = $region3
    $region8: #{tpu_custom_call.1} parent=1 // loop_exit
      _
    %4495 = vsyncpa [#allocation3], 1
    %s4496 = scalar_lea.sflag [#allocation3], 1
    %4497 = vsyncpa %s4496, 1

</llo_original>
